<compile_context>
chip_gen: v7x
topology: tpu7x:2x2x1
jax: 0.10.0
libtpu: 0.0.40
codegen_flags: <defaults>
</compile_context>

<pallas_src>
import functools

import jax
import jax.numpy as jnp
from jax.experimental import pallas as pl
from jax.experimental.pallas import tpu as pltpu

LN_EPS = 1e-5  # nn.LayerNorm default


def _round_up(n, m):
    return ((n + m - 1) // m) * m


def _activation(h, activation_func):
    if activation_func == "relu":
        return jnp.maximum(h, 0.0)
    elif activation_func == "tanh":
        return jnp.tanh(h)
    elif activation_func == "sigmoid":
        return jax.nn.sigmoid(h)
    elif activation_func == "leaky_relu":
        return jnp.where(h >= 0.0, h, 0.01 * h)
    elif activation_func == "selu":
        return jax.nn.selu(h)
    elif activation_func == "hardswish":
        return h * jnp.clip(h + 3.0, 0.0, 6.0) / 6.0
    elif activation_func == "identity":
        return h
    else:
        raise ValueError("activation function not supported!")


# --------------------------------------------------------------------------
# Kernel body
# --------------------------------------------------------------------------
def _fused_mlp_kernel(*refs, activation_func):
    """All layers fused on one (tile_b, D) batch block.

    refs = (x_ref, [w0, p0, w1, p1, ...], o_ref) where
      x_ref : (tile_b, D_in_padded) bf16 batch tile
      w_l   : (K_l, D_l) bf16 weight, VMEM-resident (constant index_map)
      p_l   : (3, D_l) f32 -- row 0 = bias, row 1 = LN gamma, row 2 = LN beta
      o_ref : (tile_b, D_last) f32 output tile
    """
    x_ref = refs[0]
    o_ref = refs[-1]
    layer_refs = refs[1:-1]
    num_layers = len(layer_refs) // 2

    h = x_ref[...]  # already bf16: goes straight to the layer-0 MXU matmul
    for l in range(num_layers):  # static unroll over layers
        w_ref = layer_refs[2 * l]
        p_ref = layer_refs[2 * l + 1]

        # Linear on the MXU: bf16 x bf16 -> f32 accumulate.
        acc = jnp.dot(h, w_ref[...], preferred_element_type=jnp.float32)
        acc = acc + p_ref[0:1, :]                              # bias

        # Activation (VPU / EUP), f32.
        acc = _activation(acc, activation_func)

        # LayerNorm over the feature axis (biased variance, as nn.LayerNorm).
        mean = jnp.mean(acc, axis=-1, keepdims=True)
        centered = acc - mean
        var = jnp.mean(centered * centered, axis=-1, keepdims=True)
        inv = jax.lax.rsqrt(var + LN_EPS)
        normed = centered * inv * p_ref[1:2, :] + p_ref[2:3, :]

        # TODO(synk): at tile_b >= 512 or D >= 256, split this post-matmul
        # epilogue into 128-row slabs (lax.fori_loop) to bound vreg pressure.

        if l + 1 < num_layers:
            # Fuse the bf16 downcast into the LN epilogue: the next layer only
            # ever consumes h as a bf16 LHS, so never carry it in f32.
            h = normed.astype(jnp.bfloat16)
        else:
            o_ref[...] = normed.astype(o_ref.dtype)


# --------------------------------------------------------------------------
# Hardware-aware sizing
# --------------------------------------------------------------------------
def _hw_defaults():
    """(vmem_limit_bytes, tensorcores_per_chip, max_tile_b) with headroom."""
    kind = ""
    try:
        kind = jax.devices()[0].device_kind.lower()
    except Exception:
        pass

    phys_vmem = 128 * 1024 * 1024
    try:
        phys_vmem = int(pltpu.get_tpu_info().vmem_capacity_bytes)
    except Exception:
        pass

    tc_per_chip = 1
    if "v7" in kind:
        tc_per_chip = 2
        phys_vmem = min(phys_vmem, 64 * 1024 * 1024)   # per-TC VMEM on v7x

    # Leave ~25% headroom for Mosaic internal scratch / semaphores / spills.
    vmem_limit = min(phys_vmem * 3 // 4, 100 * 1024 * 1024)

    if "v5e" in kind or "v5 lite" in kind:
        max_tile_b = 256      # single vst slot: keep the f32 epilogue spill-free
    elif "v7" in kind:
        max_tile_b = 256      # 64 MiB VMEM; >= 2 steps per core preferred anyway
    else:
        max_tile_b = 512      # v6e (single TC, 128 MiB): biggest tile wins

    return vmem_limit, tc_per_chip, max_tile_b


def _choose_tile_b(B, *, tc_per_chip=1, max_tile=512):
    """Pick the batch tile (LayerNorm needs the full feature row, so we only
    tile over batch).

    Single-TC chips: largest multiple-of-8 divisor of B under max_tile
    (per-step overhead ~0.35us and small tiles starve the MXU) -> grid=(1,)
    is fine.  Multi-TC chips (v7x): prefer >= 2 steps per core so each
    TensorCore can double-buffer its x/out tiles.
    """
    divs = [t for t in range(1, B + 1) if B % t == 0 and (t % 8 == 0 or t == B)]
    cands = [t for t in divs if t <= max_tile] or [min(divs)]
    if tc_per_chip >= 2:
        for min_steps in (2 * tc_per_chip, tc_per_chip):
            ok = [t for t in cands if B // t >= min_steps]
            if ok:
                return max(ok)
    return max(cands)


# --------------------------------------------------------------------------
# Wrapper
# --------------------------------------------------------------------------
def mlp_layer_forward(x, params, activation_func, *, tile_b=None,
                      max_tile_b=None, vmem_limit_bytes=None):
    """Full MLPLayer forward as ONE fused pallas_call.

    x:      (B, D_in) float32
    params: list of (w_t, packed) with
            w_t    (K_l, D_l) bfloat16  (PyTorch weight pre-transposed,
                                         layer-0 K zero-padded to mult. of 128)
            packed (3, D_l) float32     rows = [bias, LN gamma, LN beta]
    """
    B, d_in = x.shape
    d_in_pad = params[0][0].shape[0]
    d_out = params[-1][0].shape[1]
    out_dtype = x.dtype

    hw_vmem, tc_per_chip, hw_max_tile = _hw_defaults()
    if vmem_limit_bytes is None:
        vmem_limit_bytes = hw_vmem
    if max_tile_b is None:
        max_tile_b = hw_max_tile
    if tile_b is None:
        tile_b = _choose_tile_b(B, tc_per_chip=tc_per_chip, max_tile=max_tile_b)
    assert B % tile_b == 0, "batch must be divisible by tile_b"

    # Prepare the input once: pad K to the (128-aligned) weight rows and cast
    # to bf16 -- x is only ever consumed as the bf16 LHS of layer 0.
    xk = x
    if d_in < d_in_pad:
        xk = jnp.pad(xk, ((0, 0), (0, d_in_pad - d_in)))
    xk = xk.astype(jnp.bfloat16)

    flat_args = [xk]
    for (w_t, packed) in params:
        flat_args += [w_t, packed]

    kernel = functools.partial(_fused_mlp_kernel, activation_func=activation_func)

    def build_call(single_buffer_weights):
        def const_spec(shape):
            # Constant-index blocks never change across the grid -> one buffer.
            if single_buffer_weights:
                return pl.BlockSpec(shape, lambda i: (0, 0),
                                    pipeline_mode=pl.Buffered(1))
            return pl.BlockSpec(shape, lambda i: (0, 0))

        in_specs = [pl.BlockSpec((tile_b, d_in_pad), lambda i: (i, 0))]
        for (w_t, packed) in params:
            in_specs.append(const_spec(w_t.shape))      # weight, VMEM-resident
            in_specs.append(const_spec(packed.shape))   # packed bias/gamma/beta

        return pl.pallas_call(
            kernel,
            out_shape=jax.ShapeDtypeStruct((B, d_out), out_dtype),
            grid_spec=pltpu.PrefetchScalarGridSpec(
                num_scalar_prefetch=0,
                grid=(B // tile_b,),
                in_specs=in_specs,
                out_specs=pl.BlockSpec((tile_b, d_out), lambda i: (i, 0)),
            ),
            compiler_params=pltpu.CompilerParams(
                dimension_semantics=("parallel",),
                vmem_limit_bytes=vmem_limit_bytes,
            ),
        )

    # TODO(synk): for models whose resident weights exceed the VMEM budget
    # (first on v7x's 64 MiB/TC), add a weight-streaming path (second
    # "arbitrary" grid axis over layers or pltpu.emit_pipeline) while keeping
    # the activation VMEM-resident.
    try:
        return build_call(True)(*flat_args)
    except Exception:
        # Fallback if this JAX build rejects Buffered(1) on pallas_call specs.
        return build_call(False)(*flat_args)


# --------------------------------------------------------------------------
# Parameter init (kernel-ready layout) + pure-JAX reference
# --------------------------------------------------------------------------
def init_mlp_params(key, input_dim, hidden_sizes, activation_func, *,
                    pad_k_to=128):
    """Deterministic synthetic parameters, stored KERNEL-READY once:
    W as (K, D_out) bf16 with layer-0 K zero-padded to a multiple of 128,
    bias/gamma/beta packed as one (3, D_out) f32 array per layer.
    LayerNorm: gamma=1, beta=0; bias=0 (constant_ init), PyTorch defaults.
    """
    # TODO(synk): PyTorch's nn.init.orthogonal_ is replaced by a gain-scaled
    # normal init; this only affects parameter values, not forward-pass math.
    gains = {"relu": jnp.sqrt(2.0), "tanh": 5.0 / 3.0,
             "leaky_relu": jnp.sqrt(2.0), "sigmoid": 1.0, "selu": 0.75,
             "identity": 1.0, "hardswish": 1.0}
    gain = gains.get(activation_func, 1.0)

    params = []
    dims = [input_dim] + list(hidden_sizes)
    for i in range(len(hidden_sizes)):
        key, sub = jax.random.split(key)
        d_in, d_out = dims[i], dims[i + 1]
        w = (gain * jax.random.normal(sub, (d_in, d_out), jnp.float32)
             / jnp.sqrt(d_in))
        if i == 0 and d_in % pad_k_to != 0:
            # Zero-pad K rows: padded x columns are zero too -> identical math,
            # but the MXU sees an aligned K dimension.
            w = jnp.pad(w, ((0, _round_up(d_in, pad_k_to) - d_in), (0, 0)))
        w_t = w.astype(jnp.bfloat16)
        packed = jnp.concatenate([
            jnp.zeros((1, d_out), jnp.float32),   # bias
            jnp.ones((1, d_out), jnp.float32),    # LN gamma
            jnp.zeros((1, d_out), jnp.float32),   # LN beta
        ], axis=0)
        params.append((w_t, packed))
    return params


def mlp_layer_ref(x, params, activation_func):
    """Pure-JAX reference with the same bf16-matmul / f32-epilogue math."""
    d_in_pad = params[0][0].shape[0]
    xf = x.astype(jnp.float32)
    if xf.shape[1] < d_in_pad:
        xf = jnp.pad(xf, ((0, 0), (0, d_in_pad - xf.shape[1])))
    h = xf.astype(jnp.bfloat16)
    out = None
    for li, (w_t, packed) in enumerate(params):
        acc = jnp.dot(h, w_t, preferred_element_type=jnp.float32) + packed[0:1]
        acc = _activation(acc, activation_func)
        mean = jnp.mean(acc, axis=-1, keepdims=True)
        centered = acc - mean
        var = jnp.mean(centered * centered, axis=-1, keepdims=True)
        normed = centered * jax.lax.rsqrt(var + LN_EPS) * packed[1:2] + packed[2:3]
        if li + 1 < len(params):
            h = normed.astype(jnp.bfloat16)
        else:
            out = normed.astype(x.dtype)
    return out


if __name__ == "__main__":
    key = jax.random.PRNGKey(0)
    batch = 256                 # v6e: tile_b=256 grid=(1,); v7x: tile_b=64 grid=(4,)
    input_dim = 64              # K padded to 128 at init for MXU efficiency
    hidden_sizes = [128, 128]   # multiples of 128 -> lane-dense stores
    activation_func = "relu"
    initialization_method = "orthogonal_"  # only affects synthetic init scale

    k_x, k_p = jax.random.split(key)
    x = jax.random.normal(k_x, (batch, input_dim), jnp.float32)
    params = init_mlp_params(k_p, input_dim, hidden_sizes, activation_func)

    out = mlp_layer_forward(x, params, activation_func)
    out = jax.block_until_ready(out)

    ref = mlp_layer_ref(x, params, activation_func)
    assert out.shape == (batch, hidden_sizes[-1])
    assert jnp.allclose(out, ref, atol=2e-3, rtol=2e-3), "mismatch vs reference"

    print("KERNEL_OK")
</pallas_src>

<mosaic_0001>
module attributes {stable_mosaic.version = 11 : i64} {
  func.func @_fused_mlp_kernel(%arg0: i32, %arg1: memref<256x128xbf16, #tpu.memory_space<vmem>>, %arg2: memref<128x128xbf16, #tpu.memory_space<vmem>>, %arg3: memref<3x128xf32, #tpu.memory_space<vmem>>, %arg4: memref<128x128xbf16, #tpu.memory_space<vmem>>, %arg5: memref<3x128xf32, #tpu.memory_space<vmem>>, %arg6: memref<256x128xf32, #tpu.memory_space<vmem>>) attributes {dimension_semantics = [#tpu.dimension_semantics<parallel>], iteration_bounds = array<i64: 1>, scalar_prefetch = 0 : i64, scratch_operands = 0 : i64, tpu.core_type = #tpu.core_type<tc>, window_params = [{transform_indices = @transform_0, window_bounds = array<i64: 256, 128>}, {pipeline_mode = #tpu.pipeline_mode<synchronous>, transform_indices = @transform_1, window_bounds = array<i64: 128, 128>}, {pipeline_mode = #tpu.pipeline_mode<synchronous>, transform_indices = @transform_2, window_bounds = array<i64: 3, 128>}, {pipeline_mode = #tpu.pipeline_mode<synchronous>, transform_indices = @transform_3, window_bounds = array<i64: 128, 128>}, {pipeline_mode = #tpu.pipeline_mode<synchronous>, transform_indices = @transform_4, window_bounds = array<i64: 3, 128>}, {transform_indices = @transform_5, window_bounds = array<i64: 256, 128>}]} {
    %c0 = arith.constant 0 : index
    %c0_0 = arith.constant 0 : index
    %0 = vector.load %arg1[%c0, %c0_0] : memref<256x128xbf16, #tpu.memory_space<vmem>>, vector<256x128xbf16>
    %c0_1 = arith.constant 0 : index
    %c0_2 = arith.constant 0 : index
    %1 = vector.load %arg2[%c0_1, %c0_2] : memref<128x128xbf16, #tpu.memory_space<vmem>>, vector<128x128xbf16>
    %cst = arith.constant dense<0.000000e+00> : vector<256x128xf32>
    %2 = tpu.matmul %0, %1, %cst {dimension_numbers = #tpu.dot_dimension_numbers<[1], [0], [0], [1], [0, 0, 1, 1], [], []>} : vector<256x128xbf16>, vector<128x128xbf16>, vector<256x128xf32> -> vector<256x128xf32>
    %c0_3 = arith.constant 0 : index
    %c0_4 = arith.constant 0 : index
    %3 = vector.load %arg3[%c0_3, %c0_4] : memref<3x128xf32, #tpu.memory_space<vmem>>, vector<1x128xf32>
    %4 = vector.broadcast %3 : vector<1x128xf32> to vector<256x128xf32>
    %5 = arith.addf %2, %4 : vector<256x128xf32>
    %cst_5 = arith.constant 0.000000e+00 : f32
    %6 = vector.broadcast %cst_5 : f32 to vector<256x128xf32>
    %7 = arith.maximumf %5, %6 : vector<256x128xf32>
    %cst_6 = arith.constant dense<0.000000e+00> : vector<256xf32>
    %8 = vector.multi_reduction <add>, %7, %cst_6 [1] : vector<256x128xf32> to vector<256xf32>
    %9 = vector.shape_cast %8 : vector<256xf32> to vector<256x1xf32>
    %cst_7 = arith.constant 1.280000e+02 : f32
    %10 = vector.broadcast %cst_7 : f32 to vector<256x1xf32>
    %11 = arith.divf %9, %10 : vector<256x1xf32>
    %12 = vector.broadcast %11 : vector<256x1xf32> to vector<256x128xf32>
    %13 = arith.subf %7, %12 : vector<256x128xf32>
    %14 = arith.mulf %13, %13 : vector<256x128xf32>
    %cst_8 = arith.constant dense<0.000000e+00> : vector<256xf32>
    %15 = vector.multi_reduction <add>, %14, %cst_8 [1] : vector<256x128xf32> to vector<256xf32>
    %16 = vector.shape_cast %15 : vector<256xf32> to vector<256x1xf32>
    %cst_9 = arith.constant 1.280000e+02 : f32
    %17 = vector.broadcast %cst_9 : f32 to vector<256x1xf32>
    %18 = arith.divf %16, %17 : vector<256x1xf32>
    %cst_10 = arith.constant 9.99999974E-6 : f32
    %19 = vector.broadcast %cst_10 : f32 to vector<256x1xf32>
    %20 = arith.addf %18, %19 : vector<256x1xf32>
    %21 = math.rsqrt %20 : vector<256x1xf32>
    %22 = vector.broadcast %21 : vector<256x1xf32> to vector<256x128xf32>
    %23 = arith.mulf %13, %22 : vector<256x128xf32>
    %c1 = arith.constant 1 : index
    %c0_11 = arith.constant 0 : index
    %24 = vector.load %arg3[%c1, %c0_11] : memref<3x128xf32, #tpu.memory_space<vmem>>, vector<1x128xf32>
    %25 = vector.broadcast %24 : vector<1x128xf32> to vector<256x128xf32>
    %26 = arith.mulf %23, %25 : vector<256x128xf32>
    %c2 = arith.constant 2 : index
    %c0_12 = arith.constant 0 : index
    %27 = vector.load %arg3[%c2, %c0_12] : memref<3x128xf32, #tpu.memory_space<vmem>>, vector<1x128xf32>
    %28 = vector.broadcast %27 : vector<1x128xf32> to vector<256x128xf32>
    %29 = arith.addf %26, %28 : vector<256x128xf32>
    %30 = arith.truncf %29 : vector<256x128xf32> to vector<256x128xbf16>
    %c0_13 = arith.constant 0 : index
    %c0_14 = arith.constant 0 : index
    %31 = vector.load %arg4[%c0_13, %c0_14] : memref<128x128xbf16, #tpu.memory_space<vmem>>, vector<128x128xbf16>
    %cst_15 = arith.constant dense<0.000000e+00> : vector<256x128xf32>
    %32 = tpu.matmul %30, %31, %cst_15 {dimension_numbers = #tpu.dot_dimension_numbers<[1], [0], [0], [1], [0, 0, 1, 1], [], []>} : vector<256x128xbf16>, vector<128x128xbf16>, vector<256x128xf32> -> vector<256x128xf32>
    %c0_16 = arith.constant 0 : index
    %c0_17 = arith.constant 0 : index
    %33 = vector.load %arg5[%c0_16, %c0_17] : memref<3x128xf32, #tpu.memory_space<vmem>>, vector<1x128xf32>
    %34 = vector.broadcast %33 : vector<1x128xf32> to vector<256x128xf32>
    %35 = arith.addf %32, %34 : vector<256x128xf32>
    %cst_18 = arith.constant 0.000000e+00 : f32
    %36 = vector.broadcast %cst_18 : f32 to vector<256x128xf32>
    %37 = arith.maximumf %35, %36 : vector<256x128xf32>
    %cst_19 = arith.constant dense<0.000000e+00> : vector<256xf32>
    %38 = vector.multi_reduction <add>, %37, %cst_19 [1] : vector<256x128xf32> to vector<256xf32>
    %39 = vector.shape_cast %38 : vector<256xf32> to vector<256x1xf32>
    %cst_20 = arith.constant 1.280000e+02 : f32
    %40 = vector.broadcast %cst_20 : f32 to vector<256x1xf32>
    %41 = arith.divf %39, %40 : vector<256x1xf32>
    %42 = vector.broadcast %41 : vector<256x1xf32> to vector<256x128xf32>
    %43 = arith.subf %37, %42 : vector<256x128xf32>
    %44 = arith.mulf %43, %43 : vector<256x128xf32>
    %cst_21 = arith.constant dense<0.000000e+00> : vector<256xf32>
    %45 = vector.multi_reduction <add>, %44, %cst_21 [1] : vector<256x128xf32> to vector<256xf32>
    %46 = vector.shape_cast %45 : vector<256xf32> to vector<256x1xf32>
    %cst_22 = arith.constant 1.280000e+02 : f32
    %47 = vector.broadcast %cst_22 : f32 to vector<256x1xf32>
    %48 = arith.divf %46, %47 : vector<256x1xf32>
    %cst_23 = arith.constant 9.99999974E-6 : f32
    %49 = vector.broadcast %cst_23 : f32 to vector<256x1xf32>
    %50 = arith.addf %48, %49 : vector<256x1xf32>
    %51 = math.rsqrt %50 : vector<256x1xf32>
    %52 = vector.broadcast %51 : vector<256x1xf32> to vector<256x128xf32>
    %53 = arith.mulf %43, %52 : vector<256x128xf32>
    %c1_24 = arith.constant 1 : index
    %c0_25 = arith.constant 0 : index
    %54 = vector.load %arg5[%c1_24, %c0_25] : memref<3x128xf32, #tpu.memory_space<vmem>>, vector<1x128xf32>
    %55 = vector.broadcast %54 : vector<1x128xf32> to vector<256x128xf32>
    %56 = arith.mulf %53, %55 : vector<256x128xf32>
    %c2_26 = arith.constant 2 : index
    %c0_27 = arith.constant 0 : index
    %57 = vector.load %arg5[%c2_26, %c0_27] : memref<3x128xf32, #tpu.memory_space<vmem>>, vector<1x128xf32>
    %58 = vector.broadcast %57 : vector<1x128xf32> to vector<256x128xf32>
    %59 = arith.addf %56, %58 : vector<256x128xf32>
    %c0_28 = arith.constant 0 : index
    %c0_29 = arith.constant 0 : index
    %60 = vector.load %arg6[%c0_28, %c0_29] : memref<256x128xf32, #tpu.memory_space<vmem>>, vector<256x128xf32>
    tpu.vector_store %arg6[%c0_28, %c0_29], %59 {strides = array<i32>} : memref<256x128xf32, #tpu.memory_space<vmem>>, vector<256x128xf32>,
    return
  }
  func.func @transform_0(%arg0: i32) -> (i32, i32) {
    %c0_i32 = arith.constant 0 : i32
    %c0_i32_0 = arith.constant 0 : i32
    return %arg0, %c0_i32 : i32, i32
  }
  func.func @transform_1(%arg0: i32) -> (i32, i32) {
    %c0_i32 = arith.constant 0 : i32
    %c0_i32_0 = arith.constant 0 : i32
    %c0_i32_1 = arith.constant 0 : i32
    return %c0_i32, %c0_i32_0 : i32, i32
  }
  func.func @transform_2(%arg0: i32) -> (i32, i32) {
    %c0_i32 = arith.constant 0 : i32
    %c0_i32_0 = arith.constant 0 : i32
    %c0_i32_1 = arith.constant 0 : i32
    return %c0_i32, %c0_i32_0 : i32, i32
  }
  func.func @transform_3(%arg0: i32) -> (i32, i32) {
    %c0_i32 = arith.constant 0 : i32
    %c0_i32_0 = arith.constant 0 : i32
    %c0_i32_1 = arith.constant 0 : i32
    return %c0_i32, %c0_i32_0 : i32, i32
  }
  func.func @transform_4(%arg0: i32) -> (i32, i32) {
    %c0_i32 = arith.constant 0 : i32
    %c0_i32_0 = arith.constant 0 : i32
    %c0_i32_1 = arith.constant 0 : i32
    return %c0_i32, %c0_i32_0 : i32, i32
  }
  func.func @transform_5(%arg0: i32) -> (i32, i32) {
    %c0_i32 = arith.constant 0 : i32
    %c0_i32_0 = arith.constant 0 : i32
    return %arg0, %c0_i32 : i32, i32
  }
}

module attributes {stable_mosaic.version = 11 : i64} {
  func.func @_fused_mlp_kernel(%arg0: i32, %arg1: memref<256x128xbf16, #tpu.memory_space<vmem>>, %arg2: memref<128x128xbf16, #tpu.memory_space<vmem>>, %arg3: memref<3x128xf32, #tpu.memory_space<vmem>>, %arg4: memref<128x128xbf16, #tpu.memory_space<vmem>>, %arg5: memref<3x128xf32, #tpu.memory_space<vmem>>, %arg6: memref<256x128xf32, #tpu.memory_space<vmem>>) attributes {dimension_semantics = [#tpu.dimension_semantics<parallel>], iteration_bounds = array<i64: 1>, scalar_prefetch = 0 : i64, scratch_operands = 0 : i64, tpu.core_type = #tpu.core_type<tc>, window_params = [{transform_indices = @transform_0, window_bounds = array<i64: 256, 128>}, {pipeline_mode = #tpu.pipeline_mode<synchronous>, transform_indices = @transform_1, window_bounds = array<i64: 128, 128>}, {pipeline_mode = #tpu.pipeline_mode<synchronous>, transform_indices = @transform_2, window_bounds = array<i64: 3, 128>}, {pipeline_mode = #tpu.pipeline_mode<synchronous>, transform_indices = @transform_3, window_bounds = array<i64: 128, 128>}, {pipeline_mode = #tpu.pipeline_mode<synchronous>, transform_indices = @transform_4, window_bounds = array<i64: 3, 128>}, {transform_indices = @transform_5, window_bounds = array<i64: 256, 128>}]} {
    %c0 = arith.constant 0 : index
    %c0_0 = arith.constant 0 : index
    %0 = vector.load %arg1[%c0, %c0_0] : memref<256x128xbf16, #tpu.memory_space<vmem>>, vector<256x128xbf16>
    %c0_1 = arith.constant 0 : index
    %c0_2 = arith.constant 0 : index
    %1 = vector.load %arg2[%c0_1, %c0_2] : memref<128x128xbf16, #tpu.memory_space<vmem>>, vector<128x128xbf16>
    %cst = arith.constant dense<0.000000e+00> : vector<256x128xf32>
    %2 = tpu.matmul %0, %1, %cst {dimension_numbers = #tpu.dot_dimension_numbers<[1], [0], [0], [1], [0, 0, 1, 1], [], []>} : vector<256x128xbf16>, vector<128x128xbf16>, vector<256x128xf32> -> vector<256x128xf32>
    %c0_3 = arith.constant 0 : index
    %c0_4 = arith.constant 0 : index
    %3 = vector.load %arg3[%c0_3, %c0_4] : memref<3x128xf32, #tpu.memory_space<vmem>>, vector<1x128xf32>
    %4 = vector.broadcast %3 : vector<1x128xf32> to vector<256x128xf32>
    %5 = arith.addf %2, %4 : vector<256x128xf32>
    %cst_5 = arith.constant 0.000000e+00 : f32
    %6 = vector.broadcast %cst_5 : f32 to vector<256x128xf32>
    %7 = arith.maximumf %5, %6 : vector<256x128xf32>
    %cst_6 = arith.constant dense<0.000000e+00> : vector<256xf32>
    %8 = vector.multi_reduction <add>, %7, %cst_6 [1] : vector<256x128xf32> to vector<256xf32>
    %9 = vector.shape_cast %8 : vector<256xf32> to vector<256x1xf32>
    %cst_7 = arith.constant 1.280000e+02 : f32
    %10 = vector.broadcast %cst_7 : f32 to vector<256x1xf32>
    %11 = arith.divf %9, %10 : vector<256x1xf32>
    %12 = vector.broadcast %11 : vector<256x1xf32> to vector<256x128xf32>
    %13 = arith.subf %7, %12 : vector<256x128xf32>
    %14 = arith.mulf %13, %13 : vector<256x128xf32>
    %cst_8 = arith.constant dense<0.000000e+00> : vector<256xf32>
    %15 = vector.multi_reduction <add>, %14, %cst_8 [1] : vector<256x128xf32> to vector<256xf32>
    %16 = vector.shape_cast %15 : vector<256xf32> to vector<256x1xf32>
    %cst_9 = arith.constant 1.280000e+02 : f32
    %17 = vector.broadcast %cst_9 : f32 to vector<256x1xf32>
    %18 = arith.divf %16, %17 : vector<256x1xf32>
    %cst_10 = arith.constant 9.99999974E-6 : f32
    %19 = vector.broadcast %cst_10 : f32 to vector<256x1xf32>
    %20 = arith.addf %18, %19 : vector<256x1xf32>
    %21 = math.rsqrt %20 : vector<256x1xf32>
    %22 = vector.broadcast %21 : vector<256x1xf32> to vector<256x128xf32>
    %23 = arith.mulf %13, %22 : vector<256x128xf32>
    %c1 = arith.constant 1 : index
    %c0_11 = arith.constant 0 : index
    %24 = vector.load %arg3[%c1, %c0_11] : memref<3x128xf32, #tpu.memory_space<vmem>>, vector<1x128xf32>
    %25 = vector.broadcast %24 : vector<1x128xf32> to vector<256x128xf32>
    %26 = arith.mulf %23, %25 : vector<256x128xf32>
    %c2 = arith.constant 2 : index
    %c0_12 = arith.constant 0 : index
    %27 = vector.load %arg3[%c2, %c0_12] : memref<3x128xf32, #tpu.memory_space<vmem>>, vector<1x128xf32>
    %28 = vector.broadcast %27 : vector<1x128xf32> to vector<256x128xf32>
    %29 = arith.addf %26, %28 : vector<256x128xf32>
    %30 = arith.truncf %29 : vector<256x128xf32> to vector<256x128xbf16>
    %c0_13 = arith.constant 0 : index
    %c0_14 = arith.constant 0 : index
    %31 = vector.load %arg4[%c0_13, %c0_14] : memref<128x128xbf16, #tpu.memory_space<vmem>>, vector<128x128xbf16>
    %cst_15 = arith.constant dense<0.000000e+00> : vector<256x128xf32>
    %32 = tpu.matmul %30, %31, %cst_15 {dimension_numbers = #tpu.dot_dimension_numbers<[1], [0], [0], [1], [0, 0, 1, 1], [], []>} : vector<256x128xbf16>, vector<128x128xbf16>, vector<256x128xf32> -> vector<256x128xf32>
    %c0_16 = arith.constant 0 : index
    %c0_17 = arith.constant 0 : index
    %33 = vector.load %arg5[%c0_16, %c0_17] : memref<3x128xf32, #tpu.memory_space<vmem>>, vector<1x128xf32>
    %34 = vector.broadcast %33 : vector<1x128xf32> to vector<256x128xf32>
    %35 = arith.addf %32, %34 : vector<256x128xf32>
    %cst_18 = arith.constant 0.000000e+00 : f32
    %36 = vector.broadcast %cst_18 : f32 to vector<256x128xf32>
    %37 = arith.maximumf %35, %36 : vector<256x128xf32>
    %cst_19 = arith.constant dense<0.000000e+00> : vector<256xf32>
    %38 = vector.multi_reduction <add>, %37, %cst_19 [1] : vector<256x128xf32> to vector<256xf32>
    %39 = vector.shape_cast %38 : vector<256xf32> to vector<256x1xf32>
    %cst_20 = arith.constant 1.280000e+02 : f32
    %40 = vector.broadcast %cst_20 : f32 to vector<256x1xf32>
    %41 = arith.divf %39, %40 : vector<256x1xf32>
    %42 = vector.broadcast %41 : vector<256x1xf32> to vector<256x128xf32>
    %43 = arith.subf %37, %42 : vector<256x128xf32>
    %44 = arith.mulf %43, %43 : vector<256x128xf32>
    %cst_21 = arith.constant dense<0.000000e+00> : vector<256xf32>
    %45 = vector.multi_reduction <add>, %44, %cst_21 [1] : vector<256x128xf32> to vector<256xf32>
    %46 = vector.shape_cast %45 : vector<256xf32> to vector<256x1xf32>
    %cst_22 = arith.constant 1.280000e+02 : f32
    %47 = vector.broadcast %cst_22 : f32 to vector<256x1xf32>
    %48 = arith.divf %46, %47 : vector<256x1xf32>
    %cst_23 = arith.constant 9.99999974E-6 : f32
    %49 = vector.broadcast %cst_23 : f32 to vector<256x1xf32>
    %50 = arith.addf %48, %49 : vector<256x1xf32>
    %51 = math.rsqrt %50 : vector<256x1xf32>
    %52 = vector.broadcast %51 : vector<256x1xf32> to vector<256x128xf32>
    %53 = arith.mulf %43, %52 : vector<256x128xf32>
    %c1_24 = arith.constant 1 : index
    %c0_25 = arith.constant 0 : index
    %54 = vector.load %arg5[%c1_24, %c0_25] : memref<3x128xf32, #tpu.memory_space<vmem>>, vector<1x128xf32>
    %55 = vector.broadcast %54 : vector<1x128xf32> to vector<256x128xf32>
    %56 = arith.mulf %53, %55 : vector<256x128xf32>
    %c2_26 = arith.constant 2 : index
    %c0_27 = arith.constant 0 : index
    %57 = vector.load %arg5[%c2_26, %c0_27] : memref<3x128xf32, #tpu.memory_space<vmem>>, vector<1x128xf32>
    %58 = vector.broadcast %57 : vector<1x128xf32> to vector<256x128xf32>
    %59 = arith.addf %56, %58 : vector<256x128xf32>
    %c0_28 = arith.constant 0 : index
    %c0_29 = arith.constant 0 : index
    %60 = vector.load %arg6[%c0_28, %c0_29] : memref<256x128xf32, #tpu.memory_space<vmem>>, vector<256x128xf32>
    tpu.vector_store %arg6[%c0_28, %c0_29], %59 {strides = array<i32>} : memref<256x128xf32, #tpu.memory_space<vmem>>, vector<256x128xf32>,
    return
  }
  func.func @transform_0(%arg0: i32) -> (i32, i32) {
    %c0_i32 = arith.constant 0 : i32
    %c0_i32_0 = arith.constant 0 : i32
    return %arg0, %c0_i32 : i32, i32
  }
  func.func @transform_1(%arg0: i32) -> (i32, i32) {
    %c0_i32 = arith.constant 0 : i32
    %c0_i32_0 = arith.constant 0 : i32
    %c0_i32_1 = arith.constant 0 : i32
    return %c0_i32, %c0_i32_0 : i32, i32
  }
  func.func @transform_2(%arg0: i32) -> (i32, i32) {
    %c0_i32 = arith.constant 0 : i32
    %c0_i32_0 = arith.constant 0 : i32
    %c0_i32_1 = arith.constant 0 : i32
    return %c0_i32, %c0_i32_0 : i32, i32
  }
  func.func @transform_3(%arg0: i32) -> (i32, i32) {
    %c0_i32 = arith.constant 0 : i32
    %c0_i32_0 = arith.constant 0 : i32
    %c0_i32_1 = arith.constant 0 : i32
    return %c0_i32, %c0_i32_0 : i32, i32
  }
  func.func @transform_4(%arg0: i32) -> (i32, i32) {
    %c0_i32 = arith.constant 0 : i32
    %c0_i32_0 = arith.constant 0 : i32
    %c0_i32_1 = arith.constant 0 : i32
    return %c0_i32, %c0_i32_0 : i32, i32
  }
  func.func @transform_5(%arg0: i32) -> (i32, i32) {
    %c0_i32 = arith.constant 0 : i32
    %c0_i32_0 = arith.constant 0 : i32
    return %arg0, %c0_i32 : i32, i32
  }
}

</mosaic_0001>

<llo_original>
// kernel: tpu_custom_call.1
$region0: #{tpu_custom_call.1}
  #allocation0 [shape = 'u32[]', space=smem, size = 0x4, offset = 0x4, fixed_abs, tag = 'smem constant byte address 0x4 - core index']
  #allocation1 [shape = 'u32[144,128]{1,0:T(1,128)}', space=vmem, size = 0x12000, scoped, tag = 'internal scratch']
  %s0 = inlined_call_operand.hbm [shape: bf16[256,128], index: 0, kind: input, shape index: {}]
  %s1 = inlined_call_operand.hbm [shape: bf16[128,128], index: 1, kind: input, shape index: {}]
  %s2 = inlined_call_operand.hbm [shape: f32[3,128], index: 2, kind: input, shape index: {}]
  %s3 = inlined_call_operand.hbm [shape: bf16[128,128], index: 3, kind: input, shape index: {}]
  %s4 = inlined_call_operand.hbm [shape: f32[3,128], index: 4, kind: input, shape index: {}]
  %s5 = inlined_call_operand.hbm [shape: f32[256,128], index: 5, kind: output, shape index: {}]
  %s6 = sld [smem:[#allocation0]]
  $region50: #{tpu_custom_call.1} parent=0
    _
  %s8 = ssub.s32 1, %s6
  %s9 = scalar_select 0, %s8, %s6
  $region1: #{tpu_custom_call.1} parent=0
    #allocation2 [shape = 'u8[65536]{0}', space=vmem, size = 0x10000, scoped, tag = 'input window, operand 0, single buffered']
    #allocation3 [shape = 's32[1]{0}', space=sflag, size = 0x4, scoped, tag = 'scoped memory for tpu_custom_call.1']
    #allocation4 [shape = 's32[1]{0}', space=sflag, size = 0x4, scoped, tag = 'scoped memory for tpu_custom_call.1']
    #allocation5 [shape = 'u8[32768]{0}', space=vmem, size = 0x8000, scoped, tag = 'input window, operand 1, single buffered']
    #allocation6 [shape = 's32[1]{0}', space=sflag, size = 0x4, scoped, tag = 'scoped memory for tpu_custom_call.1']
    #allocation7 [shape = 'u8[2048]{0}', space=vmem, size = 0x800, scoped, tag = 'input window, operand 2, single buffered']
    #allocation8 [shape = 'u8[32768]{0}', space=vmem, size = 0x8000, scoped, tag = 'input window, operand 3, single buffered']
    #allocation9 [shape = 's32[1]{0}', space=sflag, size = 0x4, scoped, tag = 'scoped memory for tpu_custom_call.1']
    #allocation10 [shape = 'u8[2048]{0}', space=vmem, size = 0x800, scoped, tag = 'input window, operand 4, single buffered']
    #allocation11 [shape = 'u8[131072]{0}', space=vmem, size = 0x20000, scoped, tag = 'output window, operand 0, single buffered']
    %10 = vsyncpa [#allocation3], 0
    %11 = vsyncpa [#allocation6], 0
    %12 = vsyncpa [#allocation9], 0
    %13 = vsyncpa [#allocation4], 0
    // Predicated region
    $region2: #{tpu_custom_call.1} parent=1 // pred_check
      _
    $region3: #{tpu_custom_call.1} parent=1 // pred_check_branch
      %15 = sbr.rel (0) target = $region5
    $region4: #{tpu_custom_call.1} parent=1 // pred_region
      %s17 = ssub.s32 2048, 2048
      %18 = vsyncadd [#allocation3], %s17
      %s19 = sshll.u32 [#allocation2], 4
      %s20 = int_to_ptr.vmem [resolvable:$true] %s19
      %25 = dma.hbm_to_vmem [thread:$0]  %s0, 2048, %s20, [#allocation3], 64, 64, 4
    $region5: #{tpu_custom_call.1} parent=1 // pred_fallthru
      _
    // Predicated region
    $region6: #{tpu_custom_call.1} parent=1 // pred_check
      _
    $region7: #{tpu_custom_call.1} parent=1 // pred_check_branch
      %27 = sbr.rel (0) target = $region9
    $region8: #{tpu_custom_call.1} parent=1 // pred_region
      %s29 = ssub.s32 1024, 1024
      %30 = vsyncadd [#allocation6], %s29
      %s31 = sshll.u32 [#allocation5], 4
      %s32 = int_to_ptr.vmem [resolvable:$true] %s31
      %37 = dma.hbm_to_vmem [thread:$0]  %s1, 1024, %s32, [#allocation6], 64, 64, 4
    $region9: #{tpu_custom_call.1} parent=1 // pred_fallthru
      _
    // Predicated region
    $region10: #{tpu_custom_call.1} parent=1 // pred_check
      _
    $region11: #{tpu_custom_call.1} parent=1 // pred_check_branch
      %39 = sbr.rel (0) target = $region13
    $region12: #{tpu_custom_call.1} parent=1 // pred_region
      %s41 = ssub.s32 64, 64
      %42 = vsyncadd [#allocation6], %s41
      %s44 = sshll.u32 [#allocation7], 4
      %s45 = int_to_ptr.vmem [resolvable:$true] %s44
      %47 = dma.hbm_to_vmem [thread:$0]  %s2, 64, %s45, [#allocation6]
    $region13: #{tpu_custom_call.1} parent=1 // pred_fallthru
      _
    // Predicated region
    $region14: #{tpu_custom_call.1} parent=1 // pred_check
      _
    $region15: #{tpu_custom_call.1} parent=1 // pred_check_branch
      %49 = sbr.rel (0) target = $region17
    $region16: #{tpu_custom_call.1} parent=1 // pred_region
      %s51 = ssub.s32 1024, 1024
      %52 = vsyncadd [#allocation9], %s51
      %s53 = sshll.u32 [#allocation8], 4
      %s54 = int_to_ptr.vmem [resolvable:$true] %s53
      %59 = dma.hbm_to_vmem [thread:$0]  %s3, 1024, %s54, [#allocation9], 64, 64, 4
    $region17: #{tpu_custom_call.1} parent=1 // pred_fallthru
      _
    // Predicated region
    $region18: #{tpu_custom_call.1} parent=1 // pred_check
      _
    $region19: #{tpu_custom_call.1} parent=1 // pred_check_branch
      %61 = sbr.rel (0) target = $region21
    $region20: #{tpu_custom_call.1} parent=1 // pred_region
      %s63 = ssub.s32 64, 64
      %64 = vsyncadd [#allocation9], %s63
      %s66 = sshll.u32 [#allocation10], 4
      %s67 = int_to_ptr.vmem [resolvable:$true] %s66
      %69 = dma.hbm_to_vmem [thread:$0]  %s4, 64, %s67, [#allocation9]
    $region21: #{tpu_custom_call.1} parent=1 // pred_fallthru
      _
    // Predicated region
    $region22: #{tpu_custom_call.1} parent=1 // pred_check
      _
    $region23: #{tpu_custom_call.1} parent=1 // pred_check_branch
      %71 = sbr.rel (0) target = $region25
    $region24: #{tpu_custom_call.1} parent=1 // pred_region
      %72 = dma.done [#allocation3], 2048
    $region25: #{tpu_custom_call.1} parent=1 // pred_fallthru
      _
    // Predicated region
    $region26: #{tpu_custom_call.1} parent=1 // pred_check
      _
    $region27: #{tpu_custom_call.1} parent=1 // pred_check_branch
      %74 = sbr.rel (0) target = $region29
    $region28: #{tpu_custom_call.1} parent=1 // pred_region
      %75 = dma.done [#allocation6], 1024
    $region29: #{tpu_custom_call.1} parent=1 // pred_fallthru
      _
    // Predicated region
    $region30: #{tpu_custom_call.1} parent=1 // pred_check
      _
    $region31: #{tpu_custom_call.1} parent=1 // pred_check_branch
      %77 = sbr.rel (0) target = $region33
    $region32: #{tpu_custom_call.1} parent=1 // pred_region
      %78 = dma.done [#allocation6], 64
    $region33: #{tpu_custom_call.1} parent=1 // pred_fallthru
      _
    // Predicated region
    $region34: #{tpu_custom_call.1} parent=1 // pred_check
      _
    $region35: #{tpu_custom_call.1} parent=1 // pred_check_branch
      %80 = sbr.rel (0) target = $region37
    $region36: #{tpu_custom_call.1} parent=1 // pred_region
      %81 = dma.done [#allocation9], 1024
    $region37: #{tpu_custom_call.1} parent=1 // pred_fallthru
      _
    // Predicated region
    $region38: #{tpu_custom_call.1} parent=1 // pred_check
      _
    $region39: #{tpu_custom_call.1} parent=1 // pred_check_branch
      %83 = sbr.rel (0) target = $region41
    $region40: #{tpu_custom_call.1} parent=1 // pred_region
      %84 = dma.done [#allocation9], 64
    $region41: #{tpu_custom_call.1} parent=1 // pred_fallthru
      _
    %v86 = vld [vmem:[#allocation2] sm:$0xf]
    %v87 = vld [vmem:[#allocation2 + $0x4] sm:$0xf]
    %v88 = vld [vmem:[#allocation2 + $0x8] sm:$0xf]
    %v89 = vld [vmem:[#allocation2 + $0xc] sm:$0xf]
    %v90 = vld [vmem:[#allocation2 + $0x10] sm:$0xf]
    %v91 = vld [vmem:[#allocation2 + $0x14] sm:$0xf]
    %v92 = vld [vmem:[#allocation2 + $0x18] sm:$0xf]
    %v93 = vld [vmem:[#allocation2 + $0x1c] sm:$0xf]
    %v94 = vld [vmem:[#allocation2 + $0x20] sm:$0xf]
    %v95 = vld [vmem:[#allocation2 + $0x24] sm:$0xf]
    %v96 = vld [vmem:[#allocation2 + $0x28] sm:$0xf]
    %v97 = vld [vmem:[#allocation2 + $0x2c] sm:$0xf]
    %v98 = vld [vmem:[#allocation2 + $0x30] sm:$0xf]
    %v99 = vld [vmem:[#allocation2 + $0x34] sm:$0xf]
    %v100 = vld [vmem:[#allocation2 + $0x38] sm:$0xf]
    %v101 = vld [vmem:[#allocation2 + $0x3c] sm:$0xf]
    %v102 = vld [vmem:[#allocation2 + $0x40] sm:$0xf]
    %v103 = vld [vmem:[#allocation2 + $0x44] sm:$0xf]
    %v104 = vld [vmem:[#allocation2 + $0x48] sm:$0xf]
    %v105 = vld [vmem:[#allocation2 + $0x4c] sm:$0xf]
    %v106 = vld [vmem:[#allocation2 + $0x50] sm:$0xf]
    %v107 = vld [vmem:[#allocation2 + $0x54] sm:$0xf]
    %v108 = vld [vmem:[#allocation2 + $0x58] sm:$0xf]
    %v109 = vld [vmem:[#allocation2 + $0x5c] sm:$0xf]
    %v110 = vld [vmem:[#allocation2 + $0x60] sm:$0xf]
    %v111 = vld [vmem:[#allocation2 + $0x64] sm:$0xf]
    %v112 = vld [vmem:[#allocation2 + $0x68] sm:$0xf]
    %v113 = vld [vmem:[#allocation2 + $0x6c] sm:$0xf]
    %v114 = vld [vmem:[#allocation2 + $0x70] sm:$0xf]
    %v115 = vld [vmem:[#allocation2 + $0x74] sm:$0xf]
    %v116 = vld [vmem:[#allocation2 + $0x78] sm:$0xf]
    %v117 = vld [vmem:[#allocation2 + $0x7c] sm:$0xf]
    %v118 = vld [vmem:[#allocation5] sm:$0xf]
    %v119 = vld [vmem:[#allocation5 + $0x4] sm:$0xf]
    %v120 = vld [vmem:[#allocation5 + $0x8] sm:$0xf]
    %v121 = vld [vmem:[#allocation5 + $0xc] sm:$0xf]
    %v122 = vld [vmem:[#allocation5 + $0x10] sm:$0xf]
    %v123 = vld [vmem:[#allocation5 + $0x14] sm:$0xf]
    %v124 = vld [vmem:[#allocation5 + $0x18] sm:$0xf]
    %v125 = vld [vmem:[#allocation5 + $0x1c] sm:$0xf]
    %v126 = vld [vmem:[#allocation5 + $0x20] sm:$0xf]
    %v127 = vld [vmem:[#allocation5 + $0x24] sm:$0xf]
    %v128 = vld [vmem:[#allocation5 + $0x28] sm:$0xf]
    %v129 = vld [vmem:[#allocation5 + $0x2c] sm:$0xf]
    %v130 = vld [vmem:[#allocation5 + $0x30] sm:$0xf]
    %v131 = vld [vmem:[#allocation5 + $0x34] sm:$0xf]
    %v132 = vld [vmem:[#allocation5 + $0x38] sm:$0xf]
    %v133 = vld [vmem:[#allocation5 + $0x3c] sm:$0xf]
    %v134 = vld [vmem:[#allocation7] sm:$0x1]
    %v135 = vlaneseq
    %v136 = vshrl.u32 %v135, 7
    %v137 = vsub.s32 0, %v136
    %v138 = vrot.slane %v134, %v137
    %v171 = vunpack.c.l.b16 %v86
    %v172 = vunpack.c.l.b16 %v87
    %v173 = vunpack.c.l.b16 %v88
    %v174 = vunpack.c.l.b16 %v89
    %v175 = vunpack.c.l.b16 %v90
    %v176 = vunpack.c.l.b16 %v91
    %v177 = vunpack.c.l.b16 %v92
    %v178 = vunpack.c.l.b16 %v93
    %v179 = vunpack.c.l.b16 %v94
    %v180 = vunpack.c.l.b16 %v95
    %v181 = vunpack.c.l.b16 %v96
    %v182 = vunpack.c.l.b16 %v97
    %v183 = vunpack.c.l.b16 %v98
    %v184 = vunpack.c.l.b16 %v99
    %v185 = vunpack.c.l.b16 %v100
    %v186 = vunpack.c.l.b16 %v101
    %v187 = vunpack.c.l.b16 %v102
    %v188 = vunpack.c.l.b16 %v103
    %v189 = vunpack.c.l.b16 %v104
    %v190 = vunpack.c.l.b16 %v105
    %v191 = vunpack.c.l.b16 %v106
    %v192 = vunpack.c.l.b16 %v107
    %v193 = vunpack.c.l.b16 %v108
    %v194 = vunpack.c.l.b16 %v109
    %v195 = vunpack.c.l.b16 %v110
    %v196 = vunpack.c.l.b16 %v111
    %v197 = vunpack.c.l.b16 %v112
    %v198 = vunpack.c.l.b16 %v113
    %v199 = vunpack.c.l.b16 %v114
    %v200 = vunpack.c.l.b16 %v115
    %v201 = vunpack.c.l.b16 %v116
    %v202 = vunpack.c.l.b16 %v117
    %v203 = vpack.c.b16 %v172, %v171
    %v204 = vpack.c.b16 %v174, %v173
    %v205 = vpack.c.b16 %v176, %v175
    %v206 = vpack.c.b16 %v178, %v177
    %v207 = vpack.c.b16 %v180, %v179
    %v208 = vpack.c.b16 %v182, %v181
    %v209 = vpack.c.b16 %v184, %v183
    %v210 = vpack.c.b16 %v186, %v185
    %v211 = vpack.c.b16 %v188, %v187
    %v212 = vpack.c.b16 %v190, %v189
    %v213 = vpack.c.b16 %v192, %v191
    %v214 = vpack.c.b16 %v194, %v193
    %v215 = vpack.c.b16 %v196, %v195
    %v216 = vpack.c.b16 %v198, %v197
    %v217 = vpack.c.b16 %v200, %v199
    %v218 = vpack.c.b16 %v202, %v201
    %v251 = vunpack.c.l.b16 %v118
    %v252 = vunpack.c.l.b16 %v119
    %v253 = vunpack.c.l.b16 %v120
    %v254 = vunpack.c.l.b16 %v121
    %v255 = vunpack.c.l.b16 %v122
    %v256 = vunpack.c.l.b16 %v123
    %v257 = vunpack.c.l.b16 %v124
    %v258 = vunpack.c.l.b16 %v125
    %v259 = vunpack.c.l.b16 %v126
    %v260 = vunpack.c.l.b16 %v127
    %v261 = vunpack.c.l.b16 %v128
    %v262 = vunpack.c.l.b16 %v129
    %v263 = vunpack.c.l.b16 %v130
    %v264 = vunpack.c.l.b16 %v131
    %v265 = vunpack.c.l.b16 %v132
    %v266 = vunpack.c.l.b16 %v133
    %v267 = vpack.c.b16 %v252, %v251
    %v268 = vpack.c.b16 %v254, %v253
    %v269 = vpack.c.b16 %v256, %v255
    %v270 = vpack.c.b16 %v258, %v257
    %v271 = vpack.c.b16 %v260, %v259
    %v272 = vpack.c.b16 %v262, %v261
    %v273 = vpack.c.b16 %v264, %v263
    %v274 = vpack.c.b16 %v266, %v265
    %283 = vmatprep.subr.bf16.mxu0 0
    %284 = vmatpush1.bf16.msra.mxu0 %v267
    %285 = vmatprep.subr.bf16.mxu0 0
    %286 = vmatpush1.bf16.msra.mxu0 %v268
    %287 = vmatprep.subr.bf16.mxu0 0
    %288 = vmatpush1.bf16.msra.mxu0 %v269
    %289 = vmatprep.subr.bf16.mxu0 0
    %290 = vmatpush1.bf16.msra.mxu0 %v270
    %291 = vmatprep.subr.bf16.mxu0 0
    %292 = vmatpush1.bf16.msra.mxu0 %v271
    %293 = vmatprep.subr.bf16.mxu0 0
    %294 = vmatpush1.bf16.msra.mxu0 %v272
    %295 = vmatprep.subr.bf16.mxu0 0
    %296 = vmatpush1.bf16.msra.mxu0 %v273
    %297 = vmatprep.subr.bf16.mxu0 0
    %298 = vmatpush1.bf16.msra.mxu0 %v274
    %299 = vmatprep.subr.bf16.mxu0 0
    %300 = vmatpush1.bf16.msra.mxu0 0
    %301 = vmatprep.subr.bf16.mxu0 0
    %302 = vmatpush1.bf16.msra.mxu0 0
    %303 = vmatprep.subr.bf16.mxu0 0
    %304 = vmatpush1.bf16.msra.mxu0 0
    %305 = vmatprep.subr.bf16.mxu0 0
    %306 = vmatpush1.bf16.msra.mxu0 0
    %307 = vmatprep.subr.bf16.mxu0 0
    %308 = vmatpush1.bf16.msra.mxu0 0
    %309 = vmatprep.subr.bf16.mxu0 0
    %310 = vmatpush1.bf16.msra.mxu0 0
    %311 = vmatprep.subr.bf16.mxu0 0
    %312 = vmatpush1.bf16.msra.mxu0 0
    %313 = vmatprep.subr.bf16.mxu0 0
    %314 = vmatpush1.bf16.msra.mxu0 0
    %315 = vmatprep.mubr.bf16.mxu0 0
    %316 = vmatmul.mubr.bf16.gmra.mrb[0].mxu0 %v203
    %v317 = vpop.f32.mrb[0].mxu0
    %v318 = vadd.f32 %v138, %v317
    %v319 = vpop.f32.mrb[0].mxu0
    %v320 = vpop.f32.mrb[0].mxu0
    %v321 = vadd.f32 %v138, %v320
    %v322 = vpop.f32.mrb[0].mxu0
    %323 = vmatprep.mubr.bf16.mxu0 0
    %324 = vmatmul.mubr.bf16.gmra.mrb[0].mxu0 %v204
    %v325 = vpop.f32.mrb[0].mxu0
    %v326 = vadd.f32 %v138, %v325
    %v327 = vpop.f32.mrb[0].mxu0
    %v328 = vpop.f32.mrb[0].mxu0
    %v329 = vadd.f32 %v138, %v328
    %v330 = vpop.f32.mrb[0].mxu0
    %331 = vmatprep.mubr.bf16.mxu0 0
    %332 = vmatmul.mubr.bf16.gmra.mrb[0].mxu0 %v205
    %v333 = vpop.f32.mrb[0].mxu0
    %v334 = vadd.f32 %v138, %v333
    %v335 = vpop.f32.mrb[0].mxu0
    %v336 = vpop.f32.mrb[0].mxu0
    %v337 = vadd.f32 %v138, %v336
    %v338 = vpop.f32.mrb[0].mxu0
    %339 = vmatprep.mubr.bf16.mxu0 0
    %340 = vmatmul.mubr.bf16.gmra.mrb[0].mxu0 %v206
    %v341 = vpop.f32.mrb[0].mxu0
    %v342 = vadd.f32 %v138, %v341
    %v343 = vpop.f32.mrb[0].mxu0
    %v344 = vpop.f32.mrb[0].mxu0
    %v345 = vadd.f32 %v138, %v344
    %v346 = vpop.f32.mrb[0].mxu0
    %347 = vmatprep.mubr.bf16.mxu0 0
    %348 = vmatmul.mubr.bf16.gmra.mrb[0].mxu0 %v207
    %v349 = vpop.f32.mrb[0].mxu0
    %v350 = vadd.f32 %v138, %v349
    %v351 = vpop.f32.mrb[0].mxu0
    %v352 = vpop.f32.mrb[0].mxu0
    %v353 = vadd.f32 %v138, %v352
    %v354 = vpop.f32.mrb[0].mxu0
    %355 = vmatprep.mubr.bf16.mxu0 0
    %356 = vmatmul.mubr.bf16.gmra.mrb[0].mxu0 %v208
    %v357 = vpop.f32.mrb[0].mxu0
    %v358 = vadd.f32 %v138, %v357
    %v359 = vpop.f32.mrb[0].mxu0
    %v360 = vpop.f32.mrb[0].mxu0
    %v361 = vadd.f32 %v138, %v360
    %v362 = vpop.f32.mrb[0].mxu0
    %363 = vmatprep.mubr.bf16.mxu0 0
    %364 = vmatmul.mubr.bf16.gmra.mrb[0].mxu0 %v209
    %v365 = vpop.f32.mrb[0].mxu0
    %v366 = vadd.f32 %v138, %v365
    %v367 = vpop.f32.mrb[0].mxu0
    %v368 = vpop.f32.mrb[0].mxu0
    %v369 = vadd.f32 %v138, %v368
    %v370 = vpop.f32.mrb[0].mxu0
    %371 = vmatprep.mubr.bf16.mxu0 0
    %372 = vmatmul.mubr.bf16.gmra.mrb[0].mxu0 %v210
    %v373 = vpop.f32.mrb[0].mxu0
    %v374 = vadd.f32 %v138, %v373
    %v375 = vpop.f32.mrb[0].mxu0
    %v376 = vpop.f32.mrb[0].mxu0
    %v377 = vadd.f32 %v138, %v376
    %v378 = vpop.f32.mrb[0].mxu0
    %379 = vmatprep.mubr.bf16.mxu0 0
    %380 = vmatmul.mubr.bf16.gmra.mrb[0].mxu0 %v211
    %v381 = vpop.f32.mrb[0].mxu0
    %v382 = vadd.f32 %v138, %v381
    %v383 = vpop.f32.mrb[0].mxu0
    %v384 = vpop.f32.mrb[0].mxu0
    %v385 = vadd.f32 %v138, %v384
    %v386 = vpop.f32.mrb[0].mxu0
    %387 = vmatprep.mubr.bf16.mxu0 0
    %388 = vmatmul.mubr.bf16.gmra.mrb[0].mxu0 %v212
    %v389 = vpop.f32.mrb[0].mxu0
    %v390 = vadd.f32 %v138, %v389
    %v391 = vpop.f32.mrb[0].mxu0
    %v392 = vpop.f32.mrb[0].mxu0
    %v393 = vadd.f32 %v138, %v392
    %v394 = vpop.f32.mrb[0].mxu0
    %395 = vmatprep.mubr.bf16.mxu0 0
    %396 = vmatmul.mubr.bf16.gmra.mrb[0].mxu0 %v213
    %v397 = vpop.f32.mrb[0].mxu0
    %v398 = vadd.f32 %v138, %v397
    %v399 = vpop.f32.mrb[0].mxu0
    %v400 = vpop.f32.mrb[0].mxu0
    %v401 = vadd.f32 %v138, %v400
    %v402 = vpop.f32.mrb[0].mxu0
    %403 = vmatprep.mubr.bf16.mxu0 0
    %404 = vmatmul.mubr.bf16.gmra.mrb[0].mxu0 %v214
    %v405 = vpop.f32.mrb[0].mxu0
    %v406 = vadd.f32 %v138, %v405
    %v407 = vpop.f32.mrb[0].mxu0
    %v408 = vpop.f32.mrb[0].mxu0
    %v409 = vadd.f32 %v138, %v408
    %v410 = vpop.f32.mrb[0].mxu0
    %411 = vmatprep.mubr.bf16.mxu0 0
    %412 = vmatmul.mubr.bf16.gmra.mrb[0].mxu0 %v215
    %v413 = vpop.f32.mrb[0].mxu0
    %v414 = vadd.f32 %v138, %v413
    %v415 = vpop.f32.mrb[0].mxu0
    %v416 = vpop.f32.mrb[0].mxu0
    %v417 = vadd.f32 %v138, %v416
    %v418 = vpop.f32.mrb[0].mxu0
    %419 = vmatprep.mubr.bf16.mxu0 0
    %420 = vmatmul.mubr.bf16.gmra.mrb[0].mxu0 %v216
    %v421 = vpop.f32.mrb[0].mxu0
    %v422 = vadd.f32 %v138, %v421
    %v423 = vpop.f32.mrb[0].mxu0
    %v424 = vpop.f32.mrb[0].mxu0
    %v425 = vadd.f32 %v138, %v424
    %v426 = vpop.f32.mrb[0].mxu0
    %427 = vmatprep.mubr.bf16.mxu0 0
    %428 = vmatmul.mubr.bf16.gmra.mrb[0].mxu0 %v217
    %v429 = vpop.f32.mrb[0].mxu0
    %v430 = vadd.f32 %v138, %v429
    %v431 = vpop.f32.mrb[0].mxu0
    %v432 = vpop.f32.mrb[0].mxu0
    %v433 = vadd.f32 %v138, %v432
    %v434 = vpop.f32.mrb[0].mxu0
    %435 = vmatprep.mubr.bf16.mxu0 0
    %436 = vmatmul.mubr.bf16.gmra.mrb[0].mxu0 %v218
    %v437 = vpop.f32.mrb[0].mxu0
    %v438 = vadd.f32 %v138, %v437
    %v439 = vpop.f32.mrb[0].mxu0
    %v440 = vpop.f32.mrb[0].mxu0
    %v441 = vadd.f32 %v138, %v440
    %v442 = vpop.f32.mrb[0].mxu0
    %443 = vdwg.mxu0
    %v444 = vmax.f32 %v318, 0.0
    %v445 = vmax.f32 %v321, 0.0
    %v446 = vmax.f32 %v326, 0.0
    %v447 = vmax.f32 %v329, 0.0
    %v448 = vmax.f32 %v334, 0.0
    %v449 = vmax.f32 %v337, 0.0
    %v450 = vmax.f32 %v342, 0.0
    %v451 = vmax.f32 %v345, 0.0
    %v452 = vmax.f32 %v350, 0.0
    %v453 = vmax.f32 %v353, 0.0
    %v454 = vmax.f32 %v358, 0.0
    %v455 = vmax.f32 %v361, 0.0
    %v456 = vmax.f32 %v366, 0.0
    %v457 = vmax.f32 %v369, 0.0
    %v458 = vmax.f32 %v374, 0.0
    %v459 = vmax.f32 %v377, 0.0
    %v460 = vmax.f32 %v382, 0.0
    %v461 = vmax.f32 %v385, 0.0
    %v462 = vmax.f32 %v390, 0.0
    %v463 = vmax.f32 %v393, 0.0
    %v464 = vmax.f32 %v398, 0.0
    %v465 = vmax.f32 %v401, 0.0
    %v466 = vmax.f32 %v406, 0.0
    %v467 = vmax.f32 %v409, 0.0
    %v468 = vmax.f32 %v414, 0.0
    %v469 = vmax.f32 %v417, 0.0
    %v470 = vmax.f32 %v422, 0.0
    %v471 = vmax.f32 %v425, 0.0
    %v472 = vmax.f32 %v430, 0.0
    %v473 = vmax.f32 %v433, 0.0
    %v474 = vmax.f32 %v438, 0.0
    %v475 = vmax.f32 %v441, 0.0
    %476 = vadd.xlane.f32.xlu0 %v444
    %v477 = vpop.xlane.xlu0 %476
    %478 = vadd.xlane.f32.xlu0 %v445
    %v479 = vpop.xlane.xlu0 %478
    %480 = vadd.xlane.f32.xlu0 %v446
    %v481 = vpop.xlane.xlu0 %480
    %482 = vadd.xlane.f32.xlu0 %v447
    %v483 = vpop.xlane.xlu0 %482
    %484 = vadd.xlane.f32.xlu0 %v448
    %v485 = vpop.xlane.xlu0 %484
    %486 = vadd.xlane.f32.xlu0 %v449
    %v487 = vpop.xlane.xlu0 %486
    %488 = vadd.xlane.f32.xlu0 %v450
    %v489 = vpop.xlane.xlu0 %488
    %490 = vadd.xlane.f32.xlu0 %v451
    %v491 = vpop.xlane.xlu0 %490
    %492 = vadd.xlane.f32.xlu0 %v452
    %v493 = vpop.xlane.xlu0 %492
    %494 = vadd.xlane.f32.xlu0 %v453
    %v495 = vpop.xlane.xlu0 %494
    %496 = vadd.xlane.f32.xlu0 %v454
    %v497 = vpop.xlane.xlu0 %496
    %498 = vadd.xlane.f32.xlu0 %v455
    %v499 = vpop.xlane.xlu0 %498
    %500 = vadd.xlane.f32.xlu0 %v456
    %v501 = vpop.xlane.xlu0 %500
    %502 = vadd.xlane.f32.xlu0 %v457
    %v503 = vpop.xlane.xlu0 %502
    %504 = vadd.xlane.f32.xlu0 %v458
    %v505 = vpop.xlane.xlu0 %504
    %506 = vadd.xlane.f32.xlu0 %v459
    %v507 = vpop.xlane.xlu0 %506
    %508 = vadd.xlane.f32.xlu0 %v460
    %v509 = vpop.xlane.xlu0 %508
    %510 = vadd.xlane.f32.xlu0 %v461
    %v511 = vpop.xlane.xlu0 %510
    %512 = vadd.xlane.f32.xlu0 %v462
    %v513 = vpop.xlane.xlu0 %512
    %514 = vadd.xlane.f32.xlu0 %v463
    %v515 = vpop.xlane.xlu0 %514
    %516 = vadd.xlane.f32.xlu0 %v464
    %v517 = vpop.xlane.xlu0 %516
    %518 = vadd.xlane.f32.xlu0 %v465
    %v519 = vpop.xlane.xlu0 %518
    %520 = vadd.xlane.f32.xlu0 %v466
    %v521 = vpop.xlane.xlu0 %520
    %522 = vadd.xlane.f32.xlu0 %v467
    %v523 = vpop.xlane.xlu0 %522
    %524 = vadd.xlane.f32.xlu0 %v468
    %v525 = vpop.xlane.xlu0 %524
    %526 = vadd.xlane.f32.xlu0 %v469
    %v527 = vpop.xlane.xlu0 %526
    %528 = vadd.xlane.f32.xlu0 %v470
    %v529 = vpop.xlane.xlu0 %528
    %530 = vadd.xlane.f32.xlu0 %v471
    %v531 = vpop.xlane.xlu0 %530
    %532 = vadd.xlane.f32.xlu0 %v472
    %v533 = vpop.xlane.xlu0 %532
    %534 = vadd.xlane.f32.xlu0 %v473
    %v535 = vpop.xlane.xlu0 %534
    %536 = vadd.xlane.f32.xlu0 %v474
    %v537 = vpop.xlane.xlu0 %536
    %538 = vadd.xlane.f32.xlu0 %v475
    %v539 = vpop.xlane.xlu0 %538
    %v540 = vrcp.pop 128.0
    %v541 = vmul.f32 %v477, %v540
    %v542 = vmul.f32 %v479, %v540
    %v543 = vmul.f32 %v481, %v540
    %v544 = vmul.f32 %v483, %v540
    %v545 = vmul.f32 %v485, %v540
    %v546 = vmul.f32 %v487, %v540
    %v547 = vmul.f32 %v489, %v540
    %v548 = vmul.f32 %v491, %v540
    %v549 = vmul.f32 %v493, %v540
    %v550 = vmul.f32 %v495, %v540
    %v551 = vmul.f32 %v497, %v540
    %v552 = vmul.f32 %v499, %v540
    %v553 = vmul.f32 %v501, %v540
    %v554 = vmul.f32 %v503, %v540
    %v555 = vmul.f32 %v505, %v540
    %v556 = vmul.f32 %v507, %v540
    %v557 = vmul.f32 %v509, %v540
    %v558 = vmul.f32 %v511, %v540
    %v559 = vmul.f32 %v513, %v540
    %v560 = vmul.f32 %v515, %v540
    %v561 = vmul.f32 %v517, %v540
    %v562 = vmul.f32 %v519, %v540
    %v563 = vmul.f32 %v521, %v540
    %v564 = vmul.f32 %v523, %v540
    %v565 = vmul.f32 %v525, %v540
    %v566 = vmul.f32 %v527, %v540
    %v567 = vmul.f32 %v529, %v540
    %v568 = vmul.f32 %v531, %v540
    %v569 = vmul.f32 %v533, %v540
    %v570 = vmul.f32 %v535, %v540
    %v571 = vmul.f32 %v537, %v540
    %v572 = vmul.f32 %v539, %v540
    %v573 = vsub.f32 %v444, %v541
    %v574 = vsub.f32 %v445, %v542
    %v575 = vsub.f32 %v446, %v543
    %v576 = vsub.f32 %v447, %v544
    %v577 = vsub.f32 %v448, %v545
    %v578 = vsub.f32 %v449, %v546
    %v579 = vsub.f32 %v450, %v547
    %v580 = vsub.f32 %v451, %v548
    %v581 = vsub.f32 %v452, %v549
    %v582 = vsub.f32 %v453, %v550
    %v583 = vsub.f32 %v454, %v551
    %v584 = vsub.f32 %v455, %v552
    %v585 = vsub.f32 %v456, %v553
    %v586 = vsub.f32 %v457, %v554
    %v587 = vsub.f32 %v458, %v555
    %v588 = vsub.f32 %v459, %v556
    %v589 = vsub.f32 %v460, %v557
    %v590 = vsub.f32 %v461, %v558
    %v591 = vsub.f32 %v462, %v559
    %v592 = vsub.f32 %v463, %v560
    %v593 = vsub.f32 %v464, %v561
    %v594 = vsub.f32 %v465, %v562
    %v595 = vsub.f32 %v466, %v563
    %v596 = vsub.f32 %v467, %v564
    %v597 = vsub.f32 %v468, %v565
    %v598 = vsub.f32 %v469, %v566
    %v599 = vsub.f32 %v470, %v567
    %v600 = vsub.f32 %v471, %v568
    %v601 = vsub.f32 %v472, %v569
    %v602 = vsub.f32 %v473, %v570
    %v603 = vsub.f32 %v474, %v571
    %v604 = vsub.f32 %v475, %v572
    %v605 = vmul.f32 %v573, %v573
    %v606 = vmul.f32 %v574, %v574
    %v607 = vmul.f32 %v575, %v575
    %v608 = vmul.f32 %v576, %v576
    %v609 = vmul.f32 %v577, %v577
    %v610 = vmul.f32 %v578, %v578
    %v611 = vmul.f32 %v579, %v579
    %v612 = vmul.f32 %v580, %v580
    %v613 = vmul.f32 %v581, %v581
    %v614 = vmul.f32 %v582, %v582
    %v615 = vmul.f32 %v583, %v583
    %v616 = vmul.f32 %v584, %v584
    %v617 = vmul.f32 %v585, %v585
    %v618 = vmul.f32 %v586, %v586
    %v619 = vmul.f32 %v587, %v587
    %v620 = vmul.f32 %v588, %v588
    %v621 = vmul.f32 %v589, %v589
    %v622 = vmul.f32 %v590, %v590
    %v623 = vmul.f32 %v591, %v591
    %v624 = vmul.f32 %v592, %v592
    %v625 = vmul.f32 %v593, %v593
    %v626 = vmul.f32 %v594, %v594
    %v627 = vmul.f32 %v595, %v595
    %v628 = vmul.f32 %v596, %v596
    %v629 = vmul.f32 %v597, %v597
    %v630 = vmul.f32 %v598, %v598
    %v631 = vmul.f32 %v599, %v599
    %v632 = vmul.f32 %v600, %v600
    %v633 = vmul.f32 %v601, %v601
    %v634 = vmul.f32 %v602, %v602
    %v635 = vmul.f32 %v603, %v603
    %v636 = vmul.f32 %v604, %v604
    %637 = vadd.xlane.f32.xlu0 %v605
    %v638 = vpop.xlane.xlu0 %637
    %639 = vadd.xlane.f32.xlu0 %v606
    %v640 = vpop.xlane.xlu0 %639
    %641 = vadd.xlane.f32.xlu0 %v607
    %v642 = vpop.xlane.xlu0 %641
    %643 = vadd.xlane.f32.xlu0 %v608
    %v644 = vpop.xlane.xlu0 %643
    %645 = vadd.xlane.f32.xlu0 %v609
    %v646 = vpop.xlane.xlu0 %645
    %647 = vadd.xlane.f32.xlu0 %v610
    %v648 = vpop.xlane.xlu0 %647
    %649 = vadd.xlane.f32.xlu0 %v611
    %v650 = vpop.xlane.xlu0 %649
    %651 = vadd.xlane.f32.xlu0 %v612
    %v652 = vpop.xlane.xlu0 %651
    %653 = vadd.xlane.f32.xlu0 %v613
    %v654 = vpop.xlane.xlu0 %653
    %655 = vadd.xlane.f32.xlu0 %v614
    %v656 = vpop.xlane.xlu0 %655
    %657 = vadd.xlane.f32.xlu0 %v615
    %v658 = vpop.xlane.xlu0 %657
    %659 = vadd.xlane.f32.xlu0 %v616
    %v660 = vpop.xlane.xlu0 %659
    %661 = vadd.xlane.f32.xlu0 %v617
    %v662 = vpop.xlane.xlu0 %661
    %663 = vadd.xlane.f32.xlu0 %v618
    %v664 = vpop.xlane.xlu0 %663
    %665 = vadd.xlane.f32.xlu0 %v619
    %v666 = vpop.xlane.xlu0 %665
    %667 = vadd.xlane.f32.xlu0 %v620
    %v668 = vpop.xlane.xlu0 %667
    %669 = vadd.xlane.f32.xlu0 %v621
    %v670 = vpop.xlane.xlu0 %669
    %671 = vadd.xlane.f32.xlu0 %v622
    %v672 = vpop.xlane.xlu0 %671
    %673 = vadd.xlane.f32.xlu0 %v623
    %v674 = vpop.xlane.xlu0 %673
    %675 = vadd.xlane.f32.xlu0 %v624
    %v676 = vpop.xlane.xlu0 %675
    %677 = vadd.xlane.f32.xlu0 %v625
    %v678 = vpop.xlane.xlu0 %677
    %679 = vadd.xlane.f32.xlu0 %v626
    %v680 = vpop.xlane.xlu0 %679
    %681 = vadd.xlane.f32.xlu0 %v627
    %v682 = vpop.xlane.xlu0 %681
    %683 = vadd.xlane.f32.xlu0 %v628
    %v684 = vpop.xlane.xlu0 %683
    %685 = vadd.xlane.f32.xlu0 %v629
    %v686 = vpop.xlane.xlu0 %685
    %687 = vadd.xlane.f32.xlu0 %v630
    %v688 = vpop.xlane.xlu0 %687
    %689 = vadd.xlane.f32.xlu0 %v631
    %v690 = vpop.xlane.xlu0 %689
    %691 = vadd.xlane.f32.xlu0 %v632
    %v692 = vpop.xlane.xlu0 %691
    %693 = vadd.xlane.f32.xlu0 %v633
    %v694 = vpop.xlane.xlu0 %693
    %695 = vadd.xlane.f32.xlu0 %v634
    %v696 = vpop.xlane.xlu0 %695
    %697 = vadd.xlane.f32.xlu0 %v635
    %v698 = vpop.xlane.xlu0 %697
    %699 = vadd.xlane.f32.xlu0 %v636
    %v700 = vpop.xlane.xlu0 %699
    %v701 = vmul.f32 %v638, %v540
    %v702 = vmul.f32 %v640, %v540
    %v703 = vmul.f32 %v642, %v540
    %v704 = vmul.f32 %v644, %v540
    %v705 = vmul.f32 %v646, %v540
    %v706 = vmul.f32 %v648, %v540
    %v707 = vmul.f32 %v650, %v540
    %v708 = vmul.f32 %v652, %v540
    %v709 = vmul.f32 %v654, %v540
    %v710 = vmul.f32 %v656, %v540
    %v711 = vmul.f32 %v658, %v540
    %v712 = vmul.f32 %v660, %v540
    %v713 = vmul.f32 %v662, %v540
    %v714 = vmul.f32 %v664, %v540
    %v715 = vmul.f32 %v666, %v540
    %v716 = vmul.f32 %v668, %v540
    %v717 = vmul.f32 %v670, %v540
    %v718 = vmul.f32 %v672, %v540
    %v719 = vmul.f32 %v674, %v540
    %v720 = vmul.f32 %v676, %v540
    %v721 = vmul.f32 %v678, %v540
    %v722 = vmul.f32 %v680, %v540
    %v723 = vmul.f32 %v682, %v540
    %v724 = vmul.f32 %v684, %v540
    %v725 = vmul.f32 %v686, %v540
    %v726 = vmul.f32 %v688, %v540
    %v727 = vmul.f32 %v690, %v540
    %v728 = vmul.f32 %v692, %v540
    %v729 = vmul.f32 %v694, %v540
    %v730 = vmul.f32 %v696, %v540
    %v731 = vmul.f32 %v698, %v540
    %v732 = vmul.f32 %v700, %v540
    %v733 = vadd.f32 %v701, 1e-05
    %v734 = vadd.f32 %v702, 1e-05
    %v735 = vadd.f32 %v703, 1e-05
    %v736 = vadd.f32 %v704, 1e-05
    %v737 = vadd.f32 %v705, 1e-05
    %v738 = vadd.f32 %v706, 1e-05
    %v739 = vadd.f32 %v707, 1e-05
    %v740 = vadd.f32 %v708, 1e-05
    %v741 = vadd.f32 %v709, 1e-05
    %v742 = vadd.f32 %v710, 1e-05
    %v743 = vadd.f32 %v711, 1e-05
    %v744 = vadd.f32 %v712, 1e-05
    %v745 = vadd.f32 %v713, 1e-05
    %v746 = vadd.f32 %v714, 1e-05
    %v747 = vadd.f32 %v715, 1e-05
    %v748 = vadd.f32 %v716, 1e-05
    %v749 = vadd.f32 %v717, 1e-05
    %v750 = vadd.f32 %v718, 1e-05
    %v751 = vadd.f32 %v719, 1e-05
    %v752 = vadd.f32 %v720, 1e-05
    %v753 = vadd.f32 %v721, 1e-05
    %v754 = vadd.f32 %v722, 1e-05
    %v755 = vadd.f32 %v723, 1e-05
    %v756 = vadd.f32 %v724, 1e-05
    %v757 = vadd.f32 %v725, 1e-05
    %v758 = vadd.f32 %v726, 1e-05
    %v759 = vadd.f32 %v727, 1e-05
    %v760 = vadd.f32 %v728, 1e-05
    %v761 = vadd.f32 %v729, 1e-05
    %v762 = vadd.f32 %v730, 1e-05
    %v763 = vadd.f32 %v731, 1e-05
    %v764 = vadd.f32 %v732, 1e-05
    %v765 = vrsqrt.pop %v733
    %v766 = vrsqrt.pop %v734
    %v767 = vrsqrt.pop %v735
    %v768 = vrsqrt.pop %v736
    %v769 = vrsqrt.pop %v737
    %v770 = vrsqrt.pop %v738
    %v771 = vrsqrt.pop %v739
    %v772 = vrsqrt.pop %v740
    %v773 = vrsqrt.pop %v741
    %v774 = vrsqrt.pop %v742
    %v775 = vrsqrt.pop %v743
    %v776 = vrsqrt.pop %v744
    %v777 = vrsqrt.pop %v745
    %v778 = vrsqrt.pop %v746
    %v779 = vrsqrt.pop %v747
    %v780 = vrsqrt.pop %v748
    %v781 = vrsqrt.pop %v749
    %v782 = vrsqrt.pop %v750
    %v783 = vrsqrt.pop %v751
    %v784 = vrsqrt.pop %v752
    %v785 = vrsqrt.pop %v753
    %v786 = vrsqrt.pop %v754
    %v787 = vrsqrt.pop %v755
    %v788 = vrsqrt.pop %v756
    %v789 = vrsqrt.pop %v757
    %v790 = vrsqrt.pop %v758
    %v791 = vrsqrt.pop %v759
    %v792 = vrsqrt.pop %v760
    %v793 = vrsqrt.pop %v761
    %v794 = vrsqrt.pop %v762
    %v795 = vrsqrt.pop %v763
    %v796 = vrsqrt.pop %v764
    %v797 = vmul.f32 %v573, %v765
    %v798 = vmul.f32 %v574, %v766
    %v799 = vmul.f32 %v575, %v767
    %v800 = vmul.f32 %v576, %v768
    %v801 = vmul.f32 %v577, %v769
    %v802 = vmul.f32 %v578, %v770
    %v803 = vmul.f32 %v579, %v771
    %v804 = vmul.f32 %v580, %v772
    %v805 = vmul.f32 %v581, %v773
    %v806 = vmul.f32 %v582, %v774
    %v807 = vmul.f32 %v583, %v775
    %v808 = vmul.f32 %v584, %v776
    %v809 = vmul.f32 %v585, %v777
    %v810 = vmul.f32 %v586, %v778
    %v811 = vmul.f32 %v587, %v779
    %v812 = vmul.f32 %v588, %v780
    %v813 = vmul.f32 %v589, %v781
    %v814 = vmul.f32 %v590, %v782
    %v815 = vmul.f32 %v591, %v783
    %v816 = vmul.f32 %v592, %v784
    %v817 = vmul.f32 %v593, %v785
    %v818 = vmul.f32 %v594, %v786
    %v819 = vmul.f32 %v595, %v787
    %v820 = vmul.f32 %v596, %v788
    %v821 = vmul.f32 %v597, %v789
    %v822 = vmul.f32 %v598, %v790
    %v823 = vmul.f32 %v599, %v791
    %v824 = vmul.f32 %v600, %v792
    %v825 = vmul.f32 %v601, %v793
    %v826 = vmul.f32 %v602, %v794
    %v827 = vmul.f32 %v603, %v795
    %v828 = vmul.f32 %v604, %v796
    %v829 = vld [vmem:[#allocation7 + $0x1] sm:$0x1]
    %v830 = vlaneseq
    %v831 = vshrl.u32 %v830, 7
    %v832 = vsub.s32 0, %v831
    %v833 = vrot.slane %v829, %v832
    %v834 = vmul.f32 %v797, %v833
    %v835 = vmul.f32 %v798, %v833
    %v836 = vmul.f32 %v799, %v833
    %v837 = vmul.f32 %v800, %v833
    %v838 = vmul.f32 %v801, %v833
    %v839 = vmul.f32 %v802, %v833
    %v840 = vmul.f32 %v803, %v833
    %v841 = vmul.f32 %v804, %v833
    %v842 = vmul.f32 %v805, %v833
    %v843 = vmul.f32 %v806, %v833
    %v844 = vmul.f32 %v807, %v833
    %v845 = vmul.f32 %v808, %v833
    %v846 = vmul.f32 %v809, %v833
    %v847 = vmul.f32 %v810, %v833
    %v848 = vmul.f32 %v811, %v833
    %v849 = vmul.f32 %v812, %v833
    %v850 = vmul.f32 %v813, %v833
    %v851 = vmul.f32 %v814, %v833
    %v852 = vmul.f32 %v815, %v833
    %v853 = vmul.f32 %v816, %v833
    %v854 = vmul.f32 %v817, %v833
    %v855 = vmul.f32 %v818, %v833
    %v856 = vmul.f32 %v819, %v833
    %v857 = vmul.f32 %v820, %v833
    %v858 = vmul.f32 %v821, %v833
    %v859 = vmul.f32 %v822, %v833
    %v860 = vmul.f32 %v823, %v833
    %v861 = vmul.f32 %v824, %v833
    %v862 = vmul.f32 %v825, %v833
    %v863 = vmul.f32 %v826, %v833
    %v864 = vmul.f32 %v827, %v833
    %v865 = vmul.f32 %v828, %v833
    %v866 = vld [vmem:[#allocation7 + $0x2] sm:$0x1]
    %v867 = vlaneseq
    %v868 = vshrl.u32 %v867, 7
    %v869 = vsub.s32 0, %v868
    %v870 = vrot.slane %v866, %v869
    %v871 = vadd.f32 %v834, %v870
    %v872 = vadd.f32 %v835, %v870
    %v873 = vadd.f32 %v836, %v870
    %v874 = vadd.f32 %v837, %v870
    %v875 = vadd.f32 %v838, %v870
    %v876 = vadd.f32 %v839, %v870
    %v877 = vadd.f32 %v840, %v870
    %v878 = vadd.f32 %v841, %v870
    %v879 = vadd.f32 %v842, %v870
    %v880 = vadd.f32 %v843, %v870
    %v881 = vadd.f32 %v844, %v870
    %v882 = vadd.f32 %v845, %v870
    %v883 = vadd.f32 %v846, %v870
    %v884 = vadd.f32 %v847, %v870
    %v885 = vadd.f32 %v848, %v870
    %v886 = vadd.f32 %v849, %v870
    %v887 = vadd.f32 %v850, %v870
    %v888 = vadd.f32 %v851, %v870
    %v889 = vadd.f32 %v852, %v870
    %v890 = vadd.f32 %v853, %v870
    %v891 = vadd.f32 %v854, %v870
    %v892 = vadd.f32 %v855, %v870
    %v893 = vadd.f32 %v856, %v870
    %v894 = vadd.f32 %v857, %v870
    %v895 = vadd.f32 %v858, %v870
    %v896 = vadd.f32 %v859, %v870
    %v897 = vadd.f32 %v860, %v870
    %v898 = vadd.f32 %v861, %v870
    %v899 = vadd.f32 %v862, %v870
    %v900 = vadd.f32 %v863, %v870
    %v901 = vadd.f32 %v864, %v870
    %v902 = vadd.f32 %v865, %v870
    %v903 = vpack.c.bf16 %v872, %v871
    %v904 = vpack.c.bf16 %v874, %v873
    %v905 = vpack.c.bf16 %v876, %v875
    %v906 = vpack.c.bf16 %v878, %v877
    %v907 = vpack.c.bf16 %v880, %v879
    %v908 = vpack.c.bf16 %v882, %v881
    %v909 = vpack.c.bf16 %v884, %v883
    %v910 = vpack.c.bf16 %v886, %v885
    %v911 = vpack.c.bf16 %v888, %v887
    %v912 = vpack.c.bf16 %v890, %v889
    %v913 = vpack.c.bf16 %v892, %v891
    %v914 = vpack.c.bf16 %v894, %v893
    %v915 = vpack.c.bf16 %v896, %v895
    %v916 = vpack.c.bf16 %v898, %v897
    %v917 = vpack.c.bf16 %v900, %v899
    %v918 = vpack.c.bf16 %v902, %v901
    %v919 = vld [vmem:[#allocation8] sm:$0xf]
    %v920 = vld [vmem:[#allocation8 + $0x4] sm:$0xf]
    %v921 = vld [vmem:[#allocation8 + $0x8] sm:$0xf]
    %v922 = vld [vmem:[#allocation8 + $0xc] sm:$0xf]
    %v923 = vld [vmem:[#allocation8 + $0x10] sm:$0xf]
    %v924 = vld [vmem:[#allocation8 + $0x14] sm:$0xf]
    %v925 = vld [vmem:[#allocation8 + $0x18] sm:$0xf]
    %v926 = vld [vmem:[#allocation8 + $0x1c] sm:$0xf]
    %v927 = vld [vmem:[#allocation8 + $0x20] sm:$0xf]
    %v928 = vld [vmem:[#allocation8 + $0x24] sm:$0xf]
    %v929 = vld [vmem:[#allocation8 + $0x28] sm:$0xf]
    %v930 = vld [vmem:[#allocation8 + $0x2c] sm:$0xf]
    %v931 = vld [vmem:[#allocation8 + $0x30] sm:$0xf]
    %v932 = vld [vmem:[#allocation8 + $0x34] sm:$0xf]
    %v933 = vld [vmem:[#allocation8 + $0x38] sm:$0xf]
    %v934 = vld [vmem:[#allocation8 + $0x3c] sm:$0xf]
    %v935 = vld [vmem:[#allocation10] sm:$0x1]
    %v936 = vlaneseq
    %v937 = vshrl.u32 %v936, 7
    %v938 = vsub.s32 0, %v937
    %v939 = vrot.slane %v935, %v938
    %v956 = vunpack.c.l.b16 %v919
    %v957 = vunpack.c.l.b16 %v920
    %v958 = vunpack.c.l.b16 %v921
    %v959 = vunpack.c.l.b16 %v922
    %v960 = vunpack.c.l.b16 %v923
    %v961 = vunpack.c.l.b16 %v924
    %v962 = vunpack.c.l.b16 %v925
    %v963 = vunpack.c.l.b16 %v926
    %v964 = vunpack.c.l.b16 %v927
    %v965 = vunpack.c.l.b16 %v928
    %v966 = vunpack.c.l.b16 %v929
    %v967 = vunpack.c.l.b16 %v930
    %v968 = vunpack.c.l.b16 %v931
    %v969 = vunpack.c.l.b16 %v932
    %v970 = vunpack.c.l.b16 %v933
    %v971 = vunpack.c.l.b16 %v934
    %v972 = vpack.c.b16 %v957, %v956
    %v973 = vpack.c.b16 %v959, %v958
    %v974 = vpack.c.b16 %v961, %v960
    %v975 = vpack.c.b16 %v963, %v962
    %v976 = vpack.c.b16 %v965, %v964
    %v977 = vpack.c.b16 %v967, %v966
    %v978 = vpack.c.b16 %v969, %v968
    %v979 = vpack.c.b16 %v971, %v970
    %988 = vmatprep.subr.bf16.mxu0 0
    %989 = vmatpush1.bf16.msra.mxu0 %v972
    %990 = vmatprep.subr.bf16.mxu0 0
    %991 = vmatpush1.bf16.msra.mxu0 %v973
    %992 = vmatprep.subr.bf16.mxu0 0
    %993 = vmatpush1.bf16.msra.mxu0 %v974
    %994 = vmatprep.subr.bf16.mxu0 0
    %995 = vmatpush1.bf16.msra.mxu0 %v975
    %996 = vmatprep.subr.bf16.mxu0 0
    %997 = vmatpush1.bf16.msra.mxu0 %v976
    %998 = vmatprep.subr.bf16.mxu0 0
    %999 = vmatpush1.bf16.msra.mxu0 %v977
    %1000 = vmatprep.subr.bf16.mxu0 0
    %1001 = vmatpush1.bf16.msra.mxu0 %v978
    %1002 = vmatprep.subr.bf16.mxu0 0
    %1003 = vmatpush1.bf16.msra.mxu0 %v979
    %1004 = vmatprep.subr.bf16.mxu0 0
    %1005 = vmatpush1.bf16.msra.mxu0 0
    %1006 = vmatprep.subr.bf16.mxu0 0
    %1007 = vmatpush1.bf16.msra.mxu0 0
    %1008 = vmatprep.subr.bf16.mxu0 0
    %1009 = vmatpush1.bf16.msra.mxu0 0
    %1010 = vmatprep.subr.bf16.mxu0 0
    %1011 = vmatpush1.bf16.msra.mxu0 0
    %1012 = vmatprep.subr.bf16.mxu0 0
    %1013 = vmatpush1.bf16.msra.mxu0 0
    %1014 = vmatprep.subr.bf16.mxu0 0
    %1015 = vmatpush1.bf16.msra.mxu0 0
    %1016 = vmatprep.subr.bf16.mxu0 0
    %1017 = vmatpush1.bf16.msra.mxu0 0
    %1018 = vmatprep.subr.bf16.mxu0 0
    %1019 = vmatpush1.bf16.msra.mxu0 0
    %1020 = vmatprep.mubr.bf16.mxu0 0
    %1021 = vmatmul.mubr.bf16.gmra.mrb[0].mxu0 %v903
    %v1022 = vpop.f32.mrb[0].mxu0
    %v1023 = vadd.f32 %v939, %v1022
    %v1024 = vpop.f32.mrb[0].mxu0
    %v1025 = vpop.f32.mrb[0].mxu0
    %v1026 = vadd.f32 %v939, %v1025
    %v1027 = vpop.f32.mrb[0].mxu0
    %1028 = vmatprep.mubr.bf16.mxu0 0
    %1029 = vmatmul.mubr.bf16.gmra.mrb[0].mxu0 %v904
    %v1030 = vpop.f32.mrb[0].mxu0
    %v1031 = vadd.f32 %v939, %v1030
    %v1032 = vpop.f32.mrb[0].mxu0
    %v1033 = vpop.f32.mrb[0].mxu0
    %v1034 = vadd.f32 %v939, %v1033
    %v1035 = vpop.f32.mrb[0].mxu0
    %1036 = vmatprep.mubr.bf16.mxu0 0
    %1037 = vmatmul.mubr.bf16.gmra.mrb[0].mxu0 %v905
    %v1038 = vpop.f32.mrb[0].mxu0
    %v1039 = vadd.f32 %v939, %v1038
    %v1040 = vpop.f32.mrb[0].mxu0
    %v1041 = vpop.f32.mrb[0].mxu0
    %v1042 = vadd.f32 %v939, %v1041
    %v1043 = vpop.f32.mrb[0].mxu0
    %1044 = vmatprep.mubr.bf16.mxu0 0
    %1045 = vmatmul.mubr.bf16.gmra.mrb[0].mxu0 %v906
    %v1046 = vpop.f32.mrb[0].mxu0
    %v1047 = vadd.f32 %v939, %v1046
    %v1048 = vpop.f32.mrb[0].mxu0
    %v1049 = vpop.f32.mrb[0].mxu0
    %v1050 = vadd.f32 %v939, %v1049
    %v1051 = vpop.f32.mrb[0].mxu0
    %1052 = vmatprep.mubr.bf16.mxu0 0
    %1053 = vmatmul.mubr.bf16.gmra.mrb[0].mxu0 %v907
    %v1054 = vpop.f32.mrb[0].mxu0
    %v1055 = vadd.f32 %v939, %v1054
    %v1056 = vpop.f32.mrb[0].mxu0
    %v1057 = vpop.f32.mrb[0].mxu0
    %v1058 = vadd.f32 %v939, %v1057
    %v1059 = vpop.f32.mrb[0].mxu0
    %1060 = vmatprep.mubr.bf16.mxu0 0
    %1061 = vmatmul.mubr.bf16.gmra.mrb[0].mxu0 %v908
    %v1062 = vpop.f32.mrb[0].mxu0
    %v1063 = vadd.f32 %v939, %v1062
    %v1064 = vpop.f32.mrb[0].mxu0
    %v1065 = vpop.f32.mrb[0].mxu0
    %v1066 = vadd.f32 %v939, %v1065
    %v1067 = vpop.f32.mrb[0].mxu0
    %1068 = vmatprep.mubr.bf16.mxu0 0
    %1069 = vmatmul.mubr.bf16.gmra.mrb[0].mxu0 %v909
    %v1070 = vpop.f32.mrb[0].mxu0
    %v1071 = vadd.f32 %v939, %v1070
    %v1072 = vpop.f32.mrb[0].mxu0
    %v1073 = vpop.f32.mrb[0].mxu0
    %v1074 = vadd.f32 %v939, %v1073
    %v1075 = vpop.f32.mrb[0].mxu0
    %1076 = vmatprep.mubr.bf16.mxu0 0
    %1077 = vmatmul.mubr.bf16.gmra.mrb[0].mxu0 %v910
    %v1078 = vpop.f32.mrb[0].mxu0
    %v1079 = vadd.f32 %v939, %v1078
    %v1080 = vpop.f32.mrb[0].mxu0
    %v1081 = vpop.f32.mrb[0].mxu0
    %v1082 = vadd.f32 %v939, %v1081
    %v1083 = vpop.f32.mrb[0].mxu0
    %1084 = vmatprep.mubr.bf16.mxu0 0
    %1085 = vmatmul.mubr.bf16.gmra.mrb[0].mxu0 %v911
    %v1086 = vpop.f32.mrb[0].mxu0
    %v1087 = vadd.f32 %v939, %v1086
    %v1088 = vpop.f32.mrb[0].mxu0
    %v1089 = vpop.f32.mrb[0].mxu0
    %v1090 = vadd.f32 %v939, %v1089
    %v1091 = vpop.f32.mrb[0].mxu0
    %1092 = vmatprep.mubr.bf16.mxu0 0
    %1093 = vmatmul.mubr.bf16.gmra.mrb[0].mxu0 %v912
    %v1094 = vpop.f32.mrb[0].mxu0
    %v1095 = vadd.f32 %v939, %v1094
    %v1096 = vpop.f32.mrb[0].mxu0
    %v1097 = vpop.f32.mrb[0].mxu0
    %v1098 = vadd.f32 %v939, %v1097
    %v1099 = vpop.f32.mrb[0].mxu0
    %1100 = vmatprep.mubr.bf16.mxu0 0
    %1101 = vmatmul.mubr.bf16.gmra.mrb[0].mxu0 %v913
    %v1102 = vpop.f32.mrb[0].mxu0
    %v1103 = vadd.f32 %v939, %v1102
    %v1104 = vpop.f32.mrb[0].mxu0
    %v1105 = vpop.f32.mrb[0].mxu0
    %v1106 = vadd.f32 %v939, %v1105
    %v1107 = vpop.f32.mrb[0].mxu0
    %1108 = vmatprep.mubr.bf16.mxu0 0
    %1109 = vmatmul.mubr.bf16.gmra.mrb[0].mxu0 %v914
    %v1110 = vpop.f32.mrb[0].mxu0
    %v1111 = vadd.f32 %v939, %v1110
    %v1112 = vpop.f32.mrb[0].mxu0
    %v1113 = vpop.f32.mrb[0].mxu0
    %v1114 = vadd.f32 %v939, %v1113
    %v1115 = vpop.f32.mrb[0].mxu0
    %1116 = vmatprep.mubr.bf16.mxu0 0
    %1117 = vmatmul.mubr.bf16.gmra.mrb[0].mxu0 %v915
    %v1118 = vpop.f32.mrb[0].mxu0
    %v1119 = vadd.f32 %v939, %v1118
    %v1120 = vpop.f32.mrb[0].mxu0
    %v1121 = vpop.f32.mrb[0].mxu0
    %v1122 = vadd.f32 %v939, %v1121
    %v1123 = vpop.f32.mrb[0].mxu0
    %1124 = vmatprep.mubr.bf16.mxu0 0
    %1125 = vmatmul.mubr.bf16.gmra.mrb[0].mxu0 %v916
    %v1126 = vpop.f32.mrb[0].mxu0
    %v1127 = vadd.f32 %v939, %v1126
    %v1128 = vpop.f32.mrb[0].mxu0
    %v1129 = vpop.f32.mrb[0].mxu0
    %v1130 = vadd.f32 %v939, %v1129
    %v1131 = vpop.f32.mrb[0].mxu0
    %1132 = vmatprep.mubr.bf16.mxu0 0
    %1133 = vmatmul.mubr.bf16.gmra.mrb[0].mxu0 %v917
    %v1134 = vpop.f32.mrb[0].mxu0
    %v1135 = vadd.f32 %v939, %v1134
    %v1136 = vpop.f32.mrb[0].mxu0
    %v1137 = vpop.f32.mrb[0].mxu0
    %v1138 = vadd.f32 %v939, %v1137
    %v1139 = vpop.f32.mrb[0].mxu0
    %1140 = vmatprep.mubr.bf16.mxu0 0
    %1141 = vmatmul.mubr.bf16.gmra.mrb[0].mxu0 %v918
    %v1142 = vpop.f32.mrb[0].mxu0
    %v1143 = vadd.f32 %v939, %v1142
    %v1144 = vpop.f32.mrb[0].mxu0
    %v1145 = vpop.f32.mrb[0].mxu0
    %v1146 = vadd.f32 %v939, %v1145
    %v1147 = vpop.f32.mrb[0].mxu0
    %1148 = vdwg.mxu0
    %v1149 = vmax.f32 %v1023, 0.0
    %v1150 = vmax.f32 %v1026, 0.0
    %v1151 = vmax.f32 %v1031, 0.0
    %v1152 = vmax.f32 %v1034, 0.0
    %v1153 = vmax.f32 %v1039, 0.0
    %v1154 = vmax.f32 %v1042, 0.0
    %v1155 = vmax.f32 %v1047, 0.0
    %v1156 = vmax.f32 %v1050, 0.0
    %v1157 = vmax.f32 %v1055, 0.0
    %v1158 = vmax.f32 %v1058, 0.0
    %v1159 = vmax.f32 %v1063, 0.0
    %v1160 = vmax.f32 %v1066, 0.0
    %v1161 = vmax.f32 %v1071, 0.0
    %v1162 = vmax.f32 %v1074, 0.0
    %v1163 = vmax.f32 %v1079, 0.0
    %v1164 = vmax.f32 %v1082, 0.0
    %v1165 = vmax.f32 %v1087, 0.0
    %v1166 = vmax.f32 %v1090, 0.0
    %v1167 = vmax.f32 %v1095, 0.0
    %v1168 = vmax.f32 %v1098, 0.0
    %v1169 = vmax.f32 %v1103, 0.0
    %v1170 = vmax.f32 %v1106, 0.0
    %v1171 = vmax.f32 %v1111, 0.0
    %v1172 = vmax.f32 %v1114, 0.0
    %v1173 = vmax.f32 %v1119, 0.0
    %v1174 = vmax.f32 %v1122, 0.0
    %v1175 = vmax.f32 %v1127, 0.0
    %v1176 = vmax.f32 %v1130, 0.0
    %v1177 = vmax.f32 %v1135, 0.0
    %v1178 = vmax.f32 %v1138, 0.0
    %v1179 = vmax.f32 %v1143, 0.0
    %v1180 = vmax.f32 %v1146, 0.0
    %1181 = vadd.xlane.f32.xlu0 %v1149
    %v1182 = vpop.xlane.xlu0 %1181
    %1183 = vadd.xlane.f32.xlu0 %v1150
    %v1184 = vpop.xlane.xlu0 %1183
    %1185 = vadd.xlane.f32.xlu0 %v1151
    %v1186 = vpop.xlane.xlu0 %1185
    %1187 = vadd.xlane.f32.xlu0 %v1152
    %v1188 = vpop.xlane.xlu0 %1187
    %1189 = vadd.xlane.f32.xlu0 %v1153
    %v1190 = vpop.xlane.xlu0 %1189
    %1191 = vadd.xlane.f32.xlu0 %v1154
    %v1192 = vpop.xlane.xlu0 %1191
    %1193 = vadd.xlane.f32.xlu0 %v1155
    %v1194 = vpop.xlane.xlu0 %1193
    %1195 = vadd.xlane.f32.xlu0 %v1156
    %v1196 = vpop.xlane.xlu0 %1195
    %1197 = vadd.xlane.f32.xlu0 %v1157
    %v1198 = vpop.xlane.xlu0 %1197
    %1199 = vadd.xlane.f32.xlu0 %v1158
    %v1200 = vpop.xlane.xlu0 %1199
    %1201 = vadd.xlane.f32.xlu0 %v1159
    %v1202 = vpop.xlane.xlu0 %1201
    %1203 = vadd.xlane.f32.xlu0 %v1160
    %v1204 = vpop.xlane.xlu0 %1203
    %1205 = vadd.xlane.f32.xlu0 %v1161
    %v1206 = vpop.xlane.xlu0 %1205
    %1207 = vadd.xlane.f32.xlu0 %v1162
    %v1208 = vpop.xlane.xlu0 %1207
    %1209 = vadd.xlane.f32.xlu0 %v1163
    %v1210 = vpop.xlane.xlu0 %1209
    %1211 = vadd.xlane.f32.xlu0 %v1164
    %v1212 = vpop.xlane.xlu0 %1211
    %1213 = vadd.xlane.f32.xlu0 %v1165
    %v1214 = vpop.xlane.xlu0 %1213
    %1215 = vadd.xlane.f32.xlu0 %v1166
    %v1216 = vpop.xlane.xlu0 %1215
    %1217 = vadd.xlane.f32.xlu0 %v1167
    %v1218 = vpop.xlane.xlu0 %1217
    %1219 = vadd.xlane.f32.xlu0 %v1168
    %v1220 = vpop.xlane.xlu0 %1219
    %1221 = vadd.xlane.f32.xlu0 %v1169
    %v1222 = vpop.xlane.xlu0 %1221
    %1223 = vadd.xlane.f32.xlu0 %v1170
    %v1224 = vpop.xlane.xlu0 %1223
    %1225 = vadd.xlane.f32.xlu0 %v1171
    %v1226 = vpop.xlane.xlu0 %1225
    %1227 = vadd.xlane.f32.xlu0 %v1172
    %v1228 = vpop.xlane.xlu0 %1227
    %1229 = vadd.xlane.f32.xlu0 %v1173
    %v1230 = vpop.xlane.xlu0 %1229
    %1231 = vadd.xlane.f32.xlu0 %v1174
    %v1232 = vpop.xlane.xlu0 %1231
    %1233 = vadd.xlane.f32.xlu0 %v1175
    %v1234 = vpop.xlane.xlu0 %1233
    %1235 = vadd.xlane.f32.xlu0 %v1176
    %v1236 = vpop.xlane.xlu0 %1235
    %1237 = vadd.xlane.f32.xlu0 %v1177
    %v1238 = vpop.xlane.xlu0 %1237
    %1239 = vadd.xlane.f32.xlu0 %v1178
    %v1240 = vpop.xlane.xlu0 %1239
    %1241 = vadd.xlane.f32.xlu0 %v1179
    %v1242 = vpop.xlane.xlu0 %1241
    %1243 = vadd.xlane.f32.xlu0 %v1180
    %v1244 = vpop.xlane.xlu0 %1243
    %v1245 = vmul.f32 %v1182, %v540
    %v1246 = vmul.f32 %v1184, %v540
    %v1247 = vmul.f32 %v1186, %v540
    %v1248 = vmul.f32 %v1188, %v540
    %v1249 = vmul.f32 %v1190, %v540
    %v1250 = vmul.f32 %v1192, %v540
    %v1251 = vmul.f32 %v1194, %v540
    %v1252 = vmul.f32 %v1196, %v540
    %v1253 = vmul.f32 %v1198, %v540
    %v1254 = vmul.f32 %v1200, %v540
    %v1255 = vmul.f32 %v1202, %v540
    %v1256 = vmul.f32 %v1204, %v540
    %v1257 = vmul.f32 %v1206, %v540
    %v1258 = vmul.f32 %v1208, %v540
    %v1259 = vmul.f32 %v1210, %v540
    %v1260 = vmul.f32 %v1212, %v540
    %v1261 = vmul.f32 %v1214, %v540
    %v1262 = vmul.f32 %v1216, %v540
    %v1263 = vmul.f32 %v1218, %v540
    %v1264 = vmul.f32 %v1220, %v540
    %v1265 = vmul.f32 %v1222, %v540
    %v1266 = vmul.f32 %v1224, %v540
    %v1267 = vmul.f32 %v1226, %v540
    %v1268 = vmul.f32 %v1228, %v540
    %v1269 = vmul.f32 %v1230, %v540
    %v1270 = vmul.f32 %v1232, %v540
    %v1271 = vmul.f32 %v1234, %v540
    %v1272 = vmul.f32 %v1236, %v540
    %v1273 = vmul.f32 %v1238, %v540
    %v1274 = vmul.f32 %v1240, %v540
    %v1275 = vmul.f32 %v1242, %v540
    %v1276 = vmul.f32 %v1244, %v540
    %v1277 = vsub.f32 %v1149, %v1245
    %v1278 = vsub.f32 %v1150, %v1246
    %v1279 = vsub.f32 %v1151, %v1247
    %v1280 = vsub.f32 %v1152, %v1248
    %v1281 = vsub.f32 %v1153, %v1249
    %v1282 = vsub.f32 %v1154, %v1250
    %v1283 = vsub.f32 %v1155, %v1251
    %v1284 = vsub.f32 %v1156, %v1252
    %v1285 = vsub.f32 %v1157, %v1253
    %v1286 = vsub.f32 %v1158, %v1254
    %v1287 = vsub.f32 %v1159, %v1255
    %v1288 = vsub.f32 %v1160, %v1256
    %v1289 = vsub.f32 %v1161, %v1257
    %v1290 = vsub.f32 %v1162, %v1258
    %v1291 = vsub.f32 %v1163, %v1259
    %v1292 = vsub.f32 %v1164, %v1260
    %v1293 = vsub.f32 %v1165, %v1261
    %v1294 = vsub.f32 %v1166, %v1262
    %v1295 = vsub.f32 %v1167, %v1263
    %v1296 = vsub.f32 %v1168, %v1264
    %v1297 = vsub.f32 %v1169, %v1265
    %v1298 = vsub.f32 %v1170, %v1266
    %v1299 = vsub.f32 %v1171, %v1267
    %v1300 = vsub.f32 %v1172, %v1268
    %v1301 = vsub.f32 %v1173, %v1269
    %v1302 = vsub.f32 %v1174, %v1270
    %v1303 = vsub.f32 %v1175, %v1271
    %v1304 = vsub.f32 %v1176, %v1272
    %v1305 = vsub.f32 %v1177, %v1273
    %v1306 = vsub.f32 %v1178, %v1274
    %v1307 = vsub.f32 %v1179, %v1275
    %v1308 = vsub.f32 %v1180, %v1276
    %v1309 = vmul.f32 %v1277, %v1277
    %v1310 = vmul.f32 %v1278, %v1278
    %v1311 = vmul.f32 %v1279, %v1279
    %v1312 = vmul.f32 %v1280, %v1280
    %v1313 = vmul.f32 %v1281, %v1281
    %v1314 = vmul.f32 %v1282, %v1282
    %v1315 = vmul.f32 %v1283, %v1283
    %v1316 = vmul.f32 %v1284, %v1284
    %v1317 = vmul.f32 %v1285, %v1285
    %v1318 = vmul.f32 %v1286, %v1286
    %v1319 = vmul.f32 %v1287, %v1287
    %v1320 = vmul.f32 %v1288, %v1288
    %v1321 = vmul.f32 %v1289, %v1289
    %v1322 = vmul.f32 %v1290, %v1290
    %v1323 = vmul.f32 %v1291, %v1291
    %v1324 = vmul.f32 %v1292, %v1292
    %v1325 = vmul.f32 %v1293, %v1293
    %v1326 = vmul.f32 %v1294, %v1294
    %v1327 = vmul.f32 %v1295, %v1295
    %v1328 = vmul.f32 %v1296, %v1296
    %v1329 = vmul.f32 %v1297, %v1297
    %v1330 = vmul.f32 %v1298, %v1298
    %v1331 = vmul.f32 %v1299, %v1299
    %v1332 = vmul.f32 %v1300, %v1300
    %v1333 = vmul.f32 %v1301, %v1301
    %v1334 = vmul.f32 %v1302, %v1302
    %v1335 = vmul.f32 %v1303, %v1303
    %v1336 = vmul.f32 %v1304, %v1304
    %v1337 = vmul.f32 %v1305, %v1305
    %v1338 = vmul.f32 %v1306, %v1306
    %v1339 = vmul.f32 %v1307, %v1307
    %v1340 = vmul.f32 %v1308, %v1308
    %1341 = vadd.xlane.f32.xlu0 %v1309
    %v1342 = vpop.xlane.xlu0 %1341
    %1343 = vadd.xlane.f32.xlu0 %v1310
    %v1344 = vpop.xlane.xlu0 %1343
    %1345 = vadd.xlane.f32.xlu0 %v1311
    %v1346 = vpop.xlane.xlu0 %1345
    %1347 = vadd.xlane.f32.xlu0 %v1312
    %v1348 = vpop.xlane.xlu0 %1347
    %1349 = vadd.xlane.f32.xlu0 %v1313
    %v1350 = vpop.xlane.xlu0 %1349
    %1351 = vadd.xlane.f32.xlu0 %v1314
    %v1352 = vpop.xlane.xlu0 %1351
    %1353 = vadd.xlane.f32.xlu0 %v1315
    %v1354 = vpop.xlane.xlu0 %1353
    %1355 = vadd.xlane.f32.xlu0 %v1316
    %v1356 = vpop.xlane.xlu0 %1355
    %1357 = vadd.xlane.f32.xlu0 %v1317
    %v1358 = vpop.xlane.xlu0 %1357
    %1359 = vadd.xlane.f32.xlu0 %v1318
    %v1360 = vpop.xlane.xlu0 %1359
    %1361 = vadd.xlane.f32.xlu0 %v1319
    %v1362 = vpop.xlane.xlu0 %1361
    %1363 = vadd.xlane.f32.xlu0 %v1320
    %v1364 = vpop.xlane.xlu0 %1363
    %1365 = vadd.xlane.f32.xlu0 %v1321
    %v1366 = vpop.xlane.xlu0 %1365
    %1367 = vadd.xlane.f32.xlu0 %v1322
    %v1368 = vpop.xlane.xlu0 %1367
    %1369 = vadd.xlane.f32.xlu0 %v1323
    %v1370 = vpop.xlane.xlu0 %1369
    %1371 = vadd.xlane.f32.xlu0 %v1324
    %v1372 = vpop.xlane.xlu0 %1371
    %1373 = vadd.xlane.f32.xlu0 %v1325
    %v1374 = vpop.xlane.xlu0 %1373
    %1375 = vadd.xlane.f32.xlu0 %v1326
    %v1376 = vpop.xlane.xlu0 %1375
    %1377 = vadd.xlane.f32.xlu0 %v1327
    %v1378 = vpop.xlane.xlu0 %1377
    %1379 = vadd.xlane.f32.xlu0 %v1328
    %v1380 = vpop.xlane.xlu0 %1379
    %1381 = vadd.xlane.f32.xlu0 %v1329
    %v1382 = vpop.xlane.xlu0 %1381
    %1383 = vadd.xlane.f32.xlu0 %v1330
    %v1384 = vpop.xlane.xlu0 %1383
    %1385 = vadd.xlane.f32.xlu0 %v1331
    %v1386 = vpop.xlane.xlu0 %1385
    %1387 = vadd.xlane.f32.xlu0 %v1332
    %v1388 = vpop.xlane.xlu0 %1387
    %1389 = vadd.xlane.f32.xlu0 %v1333
    %v1390 = vpop.xlane.xlu0 %1389
    %1391 = vadd.xlane.f32.xlu0 %v1334
    %v1392 = vpop.xlane.xlu0 %1391
    %1393 = vadd.xlane.f32.xlu0 %v1335
    %v1394 = vpop.xlane.xlu0 %1393
    %1395 = vadd.xlane.f32.xlu0 %v1336
    %v1396 = vpop.xlane.xlu0 %1395
    %1397 = vadd.xlane.f32.xlu0 %v1337
    %v1398 = vpop.xlane.xlu0 %1397
    %1399 = vadd.xlane.f32.xlu0 %v1338
    %v1400 = vpop.xlane.xlu0 %1399
    %1401 = vadd.xlane.f32.xlu0 %v1339
    %v1402 = vpop.xlane.xlu0 %1401
    %1403 = vadd.xlane.f32.xlu0 %v1340
    %v1404 = vpop.xlane.xlu0 %1403
    %v1405 = vmul.f32 %v1342, %v540
    %v1406 = vmul.f32 %v1344, %v540
    %v1407 = vmul.f32 %v1346, %v540
    %v1408 = vmul.f32 %v1348, %v540
    %v1409 = vmul.f32 %v1350, %v540
    %v1410 = vmul.f32 %v1352, %v540
    %v1411 = vmul.f32 %v1354, %v540
    %v1412 = vmul.f32 %v1356, %v540
    %v1413 = vmul.f32 %v1358, %v540
    %v1414 = vmul.f32 %v1360, %v540
    %v1415 = vmul.f32 %v1362, %v540
    %v1416 = vmul.f32 %v1364, %v540
    %v1417 = vmul.f32 %v1366, %v540
    %v1418 = vmul.f32 %v1368, %v540
    %v1419 = vmul.f32 %v1370, %v540
    %v1420 = vmul.f32 %v1372, %v540
    %v1421 = vmul.f32 %v1374, %v540
    %v1422 = vmul.f32 %v1376, %v540
    %v1423 = vmul.f32 %v1378, %v540
    %v1424 = vmul.f32 %v1380, %v540
    %v1425 = vmul.f32 %v1382, %v540
    %v1426 = vmul.f32 %v1384, %v540
    %v1427 = vmul.f32 %v1386, %v540
    %v1428 = vmul.f32 %v1388, %v540
    %v1429 = vmul.f32 %v1390, %v540
    %v1430 = vmul.f32 %v1392, %v540
    %v1431 = vmul.f32 %v1394, %v540
    %v1432 = vmul.f32 %v1396, %v540
    %v1433 = vmul.f32 %v1398, %v540
    %v1434 = vmul.f32 %v1400, %v540
    %v1435 = vmul.f32 %v1402, %v540
    %v1436 = vmul.f32 %v1404, %v540
    %v1437 = vadd.f32 %v1405, 1e-05
    %v1438 = vadd.f32 %v1406, 1e-05
    %v1439 = vadd.f32 %v1407, 1e-05
    %v1440 = vadd.f32 %v1408, 1e-05
    %v1441 = vadd.f32 %v1409, 1e-05
    %v1442 = vadd.f32 %v1410, 1e-05
    %v1443 = vadd.f32 %v1411, 1e-05
    %v1444 = vadd.f32 %v1412, 1e-05
    %v1445 = vadd.f32 %v1413, 1e-05
    %v1446 = vadd.f32 %v1414, 1e-05
    %v1447 = vadd.f32 %v1415, 1e-05
    %v1448 = vadd.f32 %v1416, 1e-05
    %v1449 = vadd.f32 %v1417, 1e-05
    %v1450 = vadd.f32 %v1418, 1e-05
    %v1451 = vadd.f32 %v1419, 1e-05
    %v1452 = vadd.f32 %v1420, 1e-05
    %v1453 = vadd.f32 %v1421, 1e-05
    %v1454 = vadd.f32 %v1422, 1e-05
    %v1455 = vadd.f32 %v1423, 1e-05
    %v1456 = vadd.f32 %v1424, 1e-05
    %v1457 = vadd.f32 %v1425, 1e-05
    %v1458 = vadd.f32 %v1426, 1e-05
    %v1459 = vadd.f32 %v1427, 1e-05
    %v1460 = vadd.f32 %v1428, 1e-05
    %v1461 = vadd.f32 %v1429, 1e-05
    %v1462 = vadd.f32 %v1430, 1e-05
    %v1463 = vadd.f32 %v1431, 1e-05
    %v1464 = vadd.f32 %v1432, 1e-05
    %v1465 = vadd.f32 %v1433, 1e-05
    %v1466 = vadd.f32 %v1434, 1e-05
    %v1467 = vadd.f32 %v1435, 1e-05
    %v1468 = vadd.f32 %v1436, 1e-05
    %v1469 = vrsqrt.pop %v1437
    %v1470 = vrsqrt.pop %v1438
    %v1471 = vrsqrt.pop %v1439
    %v1472 = vrsqrt.pop %v1440
    %v1473 = vrsqrt.pop %v1441
    %v1474 = vrsqrt.pop %v1442
    %v1475 = vrsqrt.pop %v1443
    %v1476 = vrsqrt.pop %v1444
    %v1477 = vrsqrt.pop %v1445
    %v1478 = vrsqrt.pop %v1446
    %v1479 = vrsqrt.pop %v1447
    %v1480 = vrsqrt.pop %v1448
    %v1481 = vrsqrt.pop %v1449
    %v1482 = vrsqrt.pop %v1450
    %v1483 = vrsqrt.pop %v1451
    %v1484 = vrsqrt.pop %v1452
    %v1485 = vrsqrt.pop %v1453
    %v1486 = vrsqrt.pop %v1454
    %v1487 = vrsqrt.pop %v1455
    %v1488 = vrsqrt.pop %v1456
    %v1489 = vrsqrt.pop %v1457
    %v1490 = vrsqrt.pop %v1458
    %v1491 = vrsqrt.pop %v1459
    %v1492 = vrsqrt.pop %v1460
    %v1493 = vrsqrt.pop %v1461
    %v1494 = vrsqrt.pop %v1462
    %v1495 = vrsqrt.pop %v1463
    %v1496 = vrsqrt.pop %v1464
    %v1497 = vrsqrt.pop %v1465
    %v1498 = vrsqrt.pop %v1466
    %v1499 = vrsqrt.pop %v1467
    %v1500 = vrsqrt.pop %v1468
    %v1501 = vmul.f32 %v1277, %v1469
    %v1502 = vmul.f32 %v1278, %v1470
    %v1503 = vmul.f32 %v1279, %v1471
    %v1504 = vmul.f32 %v1280, %v1472
    %v1505 = vmul.f32 %v1281, %v1473
    %v1506 = vmul.f32 %v1282, %v1474
    %v1507 = vmul.f32 %v1283, %v1475
    %v1508 = vmul.f32 %v1284, %v1476
    %v1509 = vmul.f32 %v1285, %v1477
    %v1510 = vmul.f32 %v1286, %v1478
    %v1511 = vmul.f32 %v1287, %v1479
    %v1512 = vmul.f32 %v1288, %v1480
    %v1513 = vmul.f32 %v1289, %v1481
    %v1514 = vmul.f32 %v1290, %v1482
    %v1515 = vmul.f32 %v1291, %v1483
    %v1516 = vmul.f32 %v1292, %v1484
    %v1517 = vmul.f32 %v1293, %v1485
    %v1518 = vmul.f32 %v1294, %v1486
    %v1519 = vmul.f32 %v1295, %v1487
    %v1520 = vmul.f32 %v1296, %v1488
    %v1521 = vmul.f32 %v1297, %v1489
    %v1522 = vmul.f32 %v1298, %v1490
    %v1523 = vmul.f32 %v1299, %v1491
    %v1524 = vmul.f32 %v1300, %v1492
    %v1525 = vmul.f32 %v1301, %v1493
    %v1526 = vmul.f32 %v1302, %v1494
    %v1527 = vmul.f32 %v1303, %v1495
    %v1528 = vmul.f32 %v1304, %v1496
    %v1529 = vmul.f32 %v1305, %v1497
    %v1530 = vmul.f32 %v1306, %v1498
    %v1531 = vmul.f32 %v1307, %v1499
    %v1532 = vmul.f32 %v1308, %v1500
    %v1533 = vld [vmem:[#allocation10 + $0x1] sm:$0x1]
    %v1534 = vlaneseq
    %v1535 = vshrl.u32 %v1534, 7
    %v1536 = vsub.s32 0, %v1535
    %v1537 = vrot.slane %v1533, %v1536
    %v1538 = vmul.f32 %v1501, %v1537
    %v1539 = vmul.f32 %v1502, %v1537
    %v1540 = vmul.f32 %v1503, %v1537
    %v1541 = vmul.f32 %v1504, %v1537
    %v1542 = vmul.f32 %v1505, %v1537
    %v1543 = vmul.f32 %v1506, %v1537
    %v1544 = vmul.f32 %v1507, %v1537
    %v1545 = vmul.f32 %v1508, %v1537
    %v1546 = vmul.f32 %v1509, %v1537
    %v1547 = vmul.f32 %v1510, %v1537
    %v1548 = vmul.f32 %v1511, %v1537
    %v1549 = vmul.f32 %v1512, %v1537
    %v1550 = vmul.f32 %v1513, %v1537
    %v1551 = vmul.f32 %v1514, %v1537
    %v1552 = vmul.f32 %v1515, %v1537
    %v1553 = vmul.f32 %v1516, %v1537
    %v1554 = vmul.f32 %v1517, %v1537
    %v1555 = vmul.f32 %v1518, %v1537
    %v1556 = vmul.f32 %v1519, %v1537
    %v1557 = vmul.f32 %v1520, %v1537
    %v1558 = vmul.f32 %v1521, %v1537
    %v1559 = vmul.f32 %v1522, %v1537
    %v1560 = vmul.f32 %v1523, %v1537
    %v1561 = vmul.f32 %v1524, %v1537
    %v1562 = vmul.f32 %v1525, %v1537
    %v1563 = vmul.f32 %v1526, %v1537
    %v1564 = vmul.f32 %v1527, %v1537
    %v1565 = vmul.f32 %v1528, %v1537
    %v1566 = vmul.f32 %v1529, %v1537
    %v1567 = vmul.f32 %v1530, %v1537
    %v1568 = vmul.f32 %v1531, %v1537
    %v1569 = vmul.f32 %v1532, %v1537
    %v1570 = vld [vmem:[#allocation10 + $0x2] sm:$0x1]
    %v1571 = vlaneseq
    %v1572 = vshrl.u32 %v1571, 7
    %v1573 = vsub.s32 0, %v1572
    %v1574 = vrot.slane %v1570, %v1573
    %v1575 = vadd.f32 %v1538, %v1574
    %v1576 = vadd.f32 %v1539, %v1574
    %v1577 = vadd.f32 %v1540, %v1574
    %v1578 = vadd.f32 %v1541, %v1574
    %v1579 = vadd.f32 %v1542, %v1574
    %v1580 = vadd.f32 %v1543, %v1574
    %v1581 = vadd.f32 %v1544, %v1574
    %v1582 = vadd.f32 %v1545, %v1574
    %v1583 = vadd.f32 %v1546, %v1574
    %v1584 = vadd.f32 %v1547, %v1574
    %v1585 = vadd.f32 %v1548, %v1574
    %v1586 = vadd.f32 %v1549, %v1574
    %v1587 = vadd.f32 %v1550, %v1574
    %v1588 = vadd.f32 %v1551, %v1574
    %v1589 = vadd.f32 %v1552, %v1574
    %v1590 = vadd.f32 %v1553, %v1574
    %v1591 = vadd.f32 %v1554, %v1574
    %v1592 = vadd.f32 %v1555, %v1574
    %v1593 = vadd.f32 %v1556, %v1574
    %v1594 = vadd.f32 %v1557, %v1574
    %v1595 = vadd.f32 %v1558, %v1574
    %v1596 = vadd.f32 %v1559, %v1574
    %v1597 = vadd.f32 %v1560, %v1574
    %v1598 = vadd.f32 %v1561, %v1574
    %v1599 = vadd.f32 %v1562, %v1574
    %v1600 = vadd.f32 %v1563, %v1574
    %v1601 = vadd.f32 %v1564, %v1574
    %v1602 = vadd.f32 %v1565, %v1574
    %v1603 = vadd.f32 %v1566, %v1574
    %v1604 = vadd.f32 %v1567, %v1574
    %v1605 = vadd.f32 %v1568, %v1574
    %v1606 = vadd.f32 %v1569, %v1574
    %1607 = vst [vmem:[#allocation11] sm:$0xff] %v1575
    %1608 = vst [vmem:[#allocation11 + $0x8] sm:$0xff] %v1576
    %1609 = vst [vmem:[#allocation11 + $0x10] sm:$0xff] %v1577
    %1610 = vst [vmem:[#allocation11 + $0x18] sm:$0xff] %v1578
    %1611 = vst [vmem:[#allocation11 + $0x20] sm:$0xff] %v1579
    %1612 = vst [vmem:[#allocation11 + $0x28] sm:$0xff] %v1580
    %1613 = vst [vmem:[#allocation11 + $0x30] sm:$0xff] %v1581
    %1614 = vst [vmem:[#allocation11 + $0x38] sm:$0xff] %v1582
    %1615 = vst [vmem:[#allocation11 + $0x40] sm:$0xff] %v1583
    %1616 = vst [vmem:[#allocation11 + $0x48] sm:$0xff] %v1584
    %1617 = vst [vmem:[#allocation11 + $0x50] sm:$0xff] %v1585
    %1618 = vst [vmem:[#allocation11 + $0x58] sm:$0xff] %v1586
    %1619 = vst [vmem:[#allocation11 + $0x60] sm:$0xff] %v1587
    %1620 = vst [vmem:[#allocation11 + $0x68] sm:$0xff] %v1588
    %1621 = vst [vmem:[#allocation11 + $0x70] sm:$0xff] %v1589
    %1622 = vst [vmem:[#allocation11 + $0x78] sm:$0xff] %v1590
    %1623 = vst [vmem:[#allocation11 + $0x80] sm:$0xff] %v1591
    %1624 = vst [vmem:[#allocation11 + $0x88] sm:$0xff] %v1592
    %1625 = vst [vmem:[#allocation11 + $0x90] sm:$0xff] %v1593
    %1626 = vst [vmem:[#allocation11 + $0x98] sm:$0xff] %v1594
    %1627 = vst [vmem:[#allocation11 + $0xa0] sm:$0xff] %v1595
    %1628 = vst [vmem:[#allocation11 + $0xa8] sm:$0xff] %v1596
    %1629 = vst [vmem:[#allocation11 + $0xb0] sm:$0xff] %v1597
    %1630 = vst [vmem:[#allocation11 + $0xb8] sm:$0xff] %v1598
    %1631 = vst [vmem:[#allocation11 + $0xc0] sm:$0xff] %v1599
    %1632 = vst [vmem:[#allocation11 + $0xc8] sm:$0xff] %v1600
    %1633 = vst [vmem:[#allocation11 + $0xd0] sm:$0xff] %v1601
    %1634 = vst [vmem:[#allocation11 + $0xd8] sm:$0xff] %v1602
    %1635 = vst [vmem:[#allocation11 + $0xe0] sm:$0xff] %v1603
    %1636 = vst [vmem:[#allocation11 + $0xe8] sm:$0xff] %v1604
    %1637 = vst [vmem:[#allocation11 + $0xf0] sm:$0xff] %v1605
    %1638 = vst [vmem:[#allocation11 + $0xf8] sm:$0xff] %v1606
    // Predicated region
    $region42: #{tpu_custom_call.1} parent=1 // pred_check
      _
    $region43: #{tpu_custom_call.1} parent=1 // pred_check_branch
      %1640 = sbr.rel (0) target = $region45
    $region44: #{tpu_custom_call.1} parent=1 // pred_region
      %s1642 = ssub.s32 4096, 4096
      %1643 = vsyncadd [#allocation4], %s1642
      %s1644 = sshll.u32 [#allocation11], 4
      %s1645 = int_to_ptr.vmem [resolvable:$true] %s1644
      %1650 = dma.vmem_to_hbm [thread:$0]  %s1645, 4096, %s5, [#allocation4], 128, 128, 8
    $region45: #{tpu_custom_call.1} parent=1 // pred_fallthru
      _
    // Predicated region
    $region46: #{tpu_custom_call.1} parent=1 // pred_check
      _
    $region47: #{tpu_custom_call.1} parent=1 // pred_check_branch
      %1652 = sbr.rel (0) target = $region49
    $region48: #{tpu_custom_call.1} parent=1 // pred_region
      %1653 = dma.done [#allocation4], 4096
    $region49: #{tpu_custom_call.1} parent=1 // pred_fallthru
      _
    %1654 = vsyncpa [#allocation3], 1
    %1655 = vsyncpa [#allocation6], 1
    %1656 = vsyncpa [#allocation9], 1
    %1657 = vsyncpa [#allocation4], 1

// kernel: tpu_custom_call.1
$region0: #{tpu_custom_call.1}
  #allocation0 [shape = 'u32[]', space=smem, size = 0x4, offset = 0x4, fixed_abs, tag = 'smem constant byte address 0x4 - core index']
  #allocation1 [shape = 'u32[144,128]{1,0:T(1,128)}', space=vmem, size = 0x12000, scoped, tag = 'internal scratch']
  %s0 = inlined_call_operand.hbm [shape: bf16[256,128], index: 0, kind: input, shape index: {}]
  %s1 = inlined_call_operand.hbm [shape: bf16[128,128], index: 1, kind: input, shape index: {}]
  %s2 = inlined_call_operand.hbm [shape: f32[3,128], index: 2, kind: input, shape index: {}]
  %s3 = inlined_call_operand.hbm [shape: bf16[128,128], index: 3, kind: input, shape index: {}]
  %s4 = inlined_call_operand.hbm [shape: f32[3,128], index: 4, kind: input, shape index: {}]
  %s5 = inlined_call_operand.hbm [shape: f32[256,128], index: 5, kind: output, shape index: {}]
  %s6 = sld [smem:[#allocation0]]
  $region50: #{tpu_custom_call.1} parent=0
    _
  %s8 = ssub.s32 1, %s6
  %s9 = scalar_select 0, %s8, %s6
  $region1: #{tpu_custom_call.1} parent=0
    #allocation2 [shape = 'u8[65536]{0}', space=vmem, size = 0x10000, scoped, tag = 'input window, operand 0, single buffered']
    #allocation3 [shape = 's32[1]{0}', space=sflag, size = 0x4, scoped, tag = 'scoped memory for tpu_custom_call.1']
    #allocation4 [shape = 's32[1]{0}', space=sflag, size = 0x4, scoped, tag = 'scoped memory for tpu_custom_call.1']
    #allocation5 [shape = 'u8[32768]{0}', space=vmem, size = 0x8000, scoped, tag = 'input window, operand 1, single buffered']
    #allocation6 [shape = 's32[1]{0}', space=sflag, size = 0x4, scoped, tag = 'scoped memory for tpu_custom_call.1']
    #allocation7 [shape = 'u8[2048]{0}', space=vmem, size = 0x800, scoped, tag = 'input window, operand 2, single buffered']
    #allocation8 [shape = 'u8[32768]{0}', space=vmem, size = 0x8000, scoped, tag = 'input window, operand 3, single buffered']
    #allocation9 [shape = 's32[1]{0}', space=sflag, size = 0x4, scoped, tag = 'scoped memory for tpu_custom_call.1']
    #allocation10 [shape = 'u8[2048]{0}', space=vmem, size = 0x800, scoped, tag = 'input window, operand 4, single buffered']
    #allocation11 [shape = 'u8[131072]{0}', space=vmem, size = 0x20000, scoped, tag = 'output window, operand 0, single buffered']
    %10 = vsyncpa [#allocation3], 0
    %11 = vsyncpa [#allocation6], 0
    %12 = vsyncpa [#allocation9], 0
    %13 = vsyncpa [#allocation4], 0
    // Predicated region
    $region2: #{tpu_custom_call.1} parent=1 // pred_check
      _
    $region3: #{tpu_custom_call.1} parent=1 // pred_check_branch
      %15 = sbr.rel (0) target = $region5
    $region4: #{tpu_custom_call.1} parent=1 // pred_region
      %s17 = ssub.s32 2048, 2048
      %18 = vsyncadd [#allocation3], %s17
      %s19 = sshll.u32 [#allocation2], 4
      %s20 = int_to_ptr.vmem [resolvable:$true] %s19
      %25 = dma.hbm_to_vmem [thread:$0]  %s0, 2048, %s20, [#allocation3], 64, 64, 4
    $region5: #{tpu_custom_call.1} parent=1 // pred_fallthru
      _
    // Predicated region
    $region6: #{tpu_custom_call.1} parent=1 // pred_check
      _
    $region7: #{tpu_custom_call.1} parent=1 // pred_check_branch
      %27 = sbr.rel (0) target = $region9
    $region8: #{tpu_custom_call.1} parent=1 // pred_region
      %s29 = ssub.s32 1024, 1024
      %30 = vsyncadd [#allocation6], %s29
      %s31 = sshll.u32 [#allocation5], 4
      %s32 = int_to_ptr.vmem [resolvable:$true] %s31
      %37 = dma.hbm_to_vmem [thread:$0]  %s1, 1024, %s32, [#allocation6], 64, 64, 4
    $region9: #{tpu_custom_call.1} parent=1 // pred_fallthru
      _
    // Predicated region
    $region10: #{tpu_custom_call.1} parent=1 // pred_check
      _
    $region11: #{tpu_custom_call.1} parent=1 // pred_check_branch
      %39 = sbr.rel (0) target = $region13
    $region12: #{tpu_custom_call.1} parent=1 // pred_region
      %s41 = ssub.s32 64, 64
      %42 = vsyncadd [#allocation6], %s41
      %s44 = sshll.u32 [#allocation7], 4
      %s45 = int_to_ptr.vmem [resolvable:$true] %s44
      %47 = dma.hbm_to_vmem [thread:$0]  %s2, 64, %s45, [#allocation6]
    $region13: #{tpu_custom_call.1} parent=1 // pred_fallthru
      _
    // Predicated region
    $region14: #{tpu_custom_call.1} parent=1 // pred_check
      _
    $region15: #{tpu_custom_call.1} parent=1 // pred_check_branch
      %49 = sbr.rel (0) target = $region17
    $region16: #{tpu_custom_call.1} parent=1 // pred_region
      %s51 = ssub.s32 1024, 1024
      %52 = vsyncadd [#allocation9], %s51
      %s53 = sshll.u32 [#allocation8], 4
      %s54 = int_to_ptr.vmem [resolvable:$true] %s53
      %59 = dma.hbm_to_vmem [thread:$0]  %s3, 1024, %s54, [#allocation9], 64, 64, 4
    $region17: #{tpu_custom_call.1} parent=1 // pred_fallthru
      _
    // Predicated region
    $region18: #{tpu_custom_call.1} parent=1 // pred_check
      _
    $region19: #{tpu_custom_call.1} parent=1 // pred_check_branch
      %61 = sbr.rel (0) target = $region21
    $region20: #{tpu_custom_call.1} parent=1 // pred_region
      %s63 = ssub.s32 64, 64
      %64 = vsyncadd [#allocation9], %s63
      %s66 = sshll.u32 [#allocation10], 4
      %s67 = int_to_ptr.vmem [resolvable:$true] %s66
      %69 = dma.hbm_to_vmem [thread:$0]  %s4, 64, %s67, [#allocation9]
    $region21: #{tpu_custom_call.1} parent=1 // pred_fallthru
      _
    // Predicated region
    $region22: #{tpu_custom_call.1} parent=1 // pred_check
      _
    $region23: #{tpu_custom_call.1} parent=1 // pred_check_branch
      %71 = sbr.rel (0) target = $region25
    $region24: #{tpu_custom_call.1} parent=1 // pred_region
      %72 = dma.done [#allocation3], 2048
    $region25: #{tpu_custom_call.1} parent=1 // pred_fallthru
      _
    // Predicated region
    $region26: #{tpu_custom_call.1} parent=1 // pred_check
      _
    $region27: #{tpu_custom_call.1} parent=1 // pred_check_branch
      %74 = sbr.rel (0) target = $region29
    $region28: #{tpu_custom_call.1} parent=1 // pred_region
      %75 = dma.done [#allocation6], 1024
    $region29: #{tpu_custom_call.1} parent=1 // pred_fallthru
      _
    // Predicated region
    $region30: #{tpu_custom_call.1} parent=1 // pred_check
      _
    $region31: #{tpu_custom_call.1} parent=1 // pred_check_branch
      %77 = sbr.rel (0) target = $region33
    $region32: #{tpu_custom_call.1} parent=1 // pred_region
      %78 = dma.done [#allocation6], 64
    $region33: #{tpu_custom_call.1} parent=1 // pred_fallthru
      _
    // Predicated region
    $region34: #{tpu_custom_call.1} parent=1 // pred_check
      _
    $region35: #{tpu_custom_call.1} parent=1 // pred_check_branch
      %80 = sbr.rel (0) target = $region37
    $region36: #{tpu_custom_call.1} parent=1 // pred_region
      %81 = dma.done [#allocation9], 1024
    $region37: #{tpu_custom_call.1} parent=1 // pred_fallthru
      _
    // Predicated region
    $region38: #{tpu_custom_call.1} parent=1 // pred_check
      _
    $region39: #{tpu_custom_call.1} parent=1 // pred_check_branch
      %83 = sbr.rel (0) target = $region41
    $region40: #{tpu_custom_call.1} parent=1 // pred_region
      %84 = dma.done [#allocation9], 64
    $region41: #{tpu_custom_call.1} parent=1 // pred_fallthru
      _
    %v86 = vld [vmem:[#allocation2] sm:$0xf]
    %v87 = vld [vmem:[#allocation2 + $0x4] sm:$0xf]
    %v88 = vld [vmem:[#allocation2 + $0x8] sm:$0xf]
    %v89 = vld [vmem:[#allocation2 + $0xc] sm:$0xf]
    %v90 = vld [vmem:[#allocation2 + $0x10] sm:$0xf]
    %v91 = vld [vmem:[#allocation2 + $0x14] sm:$0xf]
    %v92 = vld [vmem:[#allocation2 + $0x18] sm:$0xf]
    %v93 = vld [vmem:[#allocation2 + $0x1c] sm:$0xf]
    %v94 = vld [vmem:[#allocation2 + $0x20] sm:$0xf]
    %v95 = vld [vmem:[#allocation2 + $0x24] sm:$0xf]
    %v96 = vld [vmem:[#allocation2 + $0x28] sm:$0xf]
    %v97 = vld [vmem:[#allocation2 + $0x2c] sm:$0xf]
    %v98 = vld [vmem:[#allocation2 + $0x30] sm:$0xf]
    %v99 = vld [vmem:[#allocation2 + $0x34] sm:$0xf]
    %v100 = vld [vmem:[#allocation2 + $0x38] sm:$0xf]
    %v101 = vld [vmem:[#allocation2 + $0x3c] sm:$0xf]
    %v102 = vld [vmem:[#allocation2 + $0x40] sm:$0xf]
    %v103 = vld [vmem:[#allocation2 + $0x44] sm:$0xf]
    %v104 = vld [vmem:[#allocation2 + $0x48] sm:$0xf]
    %v105 = vld [vmem:[#allocation2 + $0x4c] sm:$0xf]
    %v106 = vld [vmem:[#allocation2 + $0x50] sm:$0xf]
    %v107 = vld [vmem:[#allocation2 + $0x54] sm:$0xf]
    %v108 = vld [vmem:[#allocation2 + $0x58] sm:$0xf]
    %v109 = vld [vmem:[#allocation2 + $0x5c] sm:$0xf]
    %v110 = vld [vmem:[#allocation2 + $0x60] sm:$0xf]
    %v111 = vld [vmem:[#allocation2 + $0x64] sm:$0xf]
    %v112 = vld [vmem:[#allocation2 + $0x68] sm:$0xf]
    %v113 = vld [vmem:[#allocation2 + $0x6c] sm:$0xf]
    %v114 = vld [vmem:[#allocation2 + $0x70] sm:$0xf]
    %v115 = vld [vmem:[#allocation2 + $0x74] sm:$0xf]
    %v116 = vld [vmem:[#allocation2 + $0x78] sm:$0xf]
    %v117 = vld [vmem:[#allocation2 + $0x7c] sm:$0xf]
    %v118 = vld [vmem:[#allocation5] sm:$0xf]
    %v119 = vld [vmem:[#allocation5 + $0x4] sm:$0xf]
    %v120 = vld [vmem:[#allocation5 + $0x8] sm:$0xf]
    %v121 = vld [vmem:[#allocation5 + $0xc] sm:$0xf]
    %v122 = vld [vmem:[#allocation5 + $0x10] sm:$0xf]
    %v123 = vld [vmem:[#allocation5 + $0x14] sm:$0xf]
    %v124 = vld [vmem:[#allocation5 + $0x18] sm:$0xf]
    %v125 = vld [vmem:[#allocation5 + $0x1c] sm:$0xf]
    %v126 = vld [vmem:[#allocation5 + $0x20] sm:$0xf]
    %v127 = vld [vmem:[#allocation5 + $0x24] sm:$0xf]
    %v128 = vld [vmem:[#allocation5 + $0x28] sm:$0xf]
    %v129 = vld [vmem:[#allocation5 + $0x2c] sm:$0xf]
    %v130 = vld [vmem:[#allocation5 + $0x30] sm:$0xf]
    %v131 = vld [vmem:[#allocation5 + $0x34] sm:$0xf]
    %v132 = vld [vmem:[#allocation5 + $0x38] sm:$0xf]
    %v133 = vld [vmem:[#allocation5 + $0x3c] sm:$0xf]
    %v134 = vld [vmem:[#allocation7] sm:$0x1]
    %v135 = vlaneseq
    %v136 = vshrl.u32 %v135, 7
    %v137 = vsub.s32 0, %v136
    %v138 = vrot.slane %v134, %v137
    %v171 = vunpack.c.l.b16 %v86
    %v172 = vunpack.c.l.b16 %v87
    %v173 = vunpack.c.l.b16 %v88
    %v174 = vunpack.c.l.b16 %v89
    %v175 = vunpack.c.l.b16 %v90
    %v176 = vunpack.c.l.b16 %v91
    %v177 = vunpack.c.l.b16 %v92
    %v178 = vunpack.c.l.b16 %v93
    %v179 = vunpack.c.l.b16 %v94
    %v180 = vunpack.c.l.b16 %v95
    %v181 = vunpack.c.l.b16 %v96
    %v182 = vunpack.c.l.b16 %v97
    %v183 = vunpack.c.l.b16 %v98
    %v184 = vunpack.c.l.b16 %v99
    %v185 = vunpack.c.l.b16 %v100
    %v186 = vunpack.c.l.b16 %v101
    %v187 = vunpack.c.l.b16 %v102
    %v188 = vunpack.c.l.b16 %v103
    %v189 = vunpack.c.l.b16 %v104
    %v190 = vunpack.c.l.b16 %v105
    %v191 = vunpack.c.l.b16 %v106
    %v192 = vunpack.c.l.b16 %v107
    %v193 = vunpack.c.l.b16 %v108
    %v194 = vunpack.c.l.b16 %v109
    %v195 = vunpack.c.l.b16 %v110
    %v196 = vunpack.c.l.b16 %v111
    %v197 = vunpack.c.l.b16 %v112
    %v198 = vunpack.c.l.b16 %v113
    %v199 = vunpack.c.l.b16 %v114
    %v200 = vunpack.c.l.b16 %v115
    %v201 = vunpack.c.l.b16 %v116
    %v202 = vunpack.c.l.b16 %v117
    %v203 = vpack.c.b16 %v172, %v171
    %v204 = vpack.c.b16 %v174, %v173
    %v205 = vpack.c.b16 %v176, %v175
    %v206 = vpack.c.b16 %v178, %v177
    %v207 = vpack.c.b16 %v180, %v179
    %v208 = vpack.c.b16 %v182, %v181
    %v209 = vpack.c.b16 %v184, %v183
    %v210 = vpack.c.b16 %v186, %v185
    %v211 = vpack.c.b16 %v188, %v187
    %v212 = vpack.c.b16 %v190, %v189
    %v213 = vpack.c.b16 %v192, %v191
    %v214 = vpack.c.b16 %v194, %v193
    %v215 = vpack.c.b16 %v196, %v195
    %v216 = vpack.c.b16 %v198, %v197
    %v217 = vpack.c.b16 %v200, %v199
    %v218 = vpack.c.b16 %v202, %v201
    %v251 = vunpack.c.l.b16 %v118
    %v252 = vunpack.c.l.b16 %v119
    %v253 = vunpack.c.l.b16 %v120
    %v254 = vunpack.c.l.b16 %v121
    %v255 = vunpack.c.l.b16 %v122
    %v256 = vunpack.c.l.b16 %v123
    %v257 = vunpack.c.l.b16 %v124
    %v258 = vunpack.c.l.b16 %v125
    %v259 = vunpack.c.l.b16 %v126
    %v260 = vunpack.c.l.b16 %v127
    %v261 = vunpack.c.l.b16 %v128
    %v262 = vunpack.c.l.b16 %v129
    %v263 = vunpack.c.l.b16 %v130
    %v264 = vunpack.c.l.b16 %v131
    %v265 = vunpack.c.l.b16 %v132
    %v266 = vunpack.c.l.b16 %v133
    %v267 = vpack.c.b16 %v252, %v251
    %v268 = vpack.c.b16 %v254, %v253
    %v269 = vpack.c.b16 %v256, %v255
    %v270 = vpack.c.b16 %v258, %v257
    %v271 = vpack.c.b16 %v260, %v259
    %v272 = vpack.c.b16 %v262, %v261
    %v273 = vpack.c.b16 %v264, %v263
    %v274 = vpack.c.b16 %v266, %v265
    %283 = vmatprep.subr.bf16.mxu0 0
    %284 = vmatpush1.bf16.msra.mxu0 %v267
    %285 = vmatprep.subr.bf16.mxu0 0
    %286 = vmatpush1.bf16.msra.mxu0 %v268
    %287 = vmatprep.subr.bf16.mxu0 0
    %288 = vmatpush1.bf16.msra.mxu0 %v269
    %289 = vmatprep.subr.bf16.mxu0 0
    %290 = vmatpush1.bf16.msra.mxu0 %v270
    %291 = vmatprep.subr.bf16.mxu0 0
    %292 = vmatpush1.bf16.msra.mxu0 %v271
    %293 = vmatprep.subr.bf16.mxu0 0
    %294 = vmatpush1.bf16.msra.mxu0 %v272
    %295 = vmatprep.subr.bf16.mxu0 0
    %296 = vmatpush1.bf16.msra.mxu0 %v273
    %297 = vmatprep.subr.bf16.mxu0 0
    %298 = vmatpush1.bf16.msra.mxu0 %v274
    %299 = vmatprep.subr.bf16.mxu0 0
    %300 = vmatpush1.bf16.msra.mxu0 0
    %301 = vmatprep.subr.bf16.mxu0 0
    %302 = vmatpush1.bf16.msra.mxu0 0
    %303 = vmatprep.subr.bf16.mxu0 0
    %304 = vmatpush1.bf16.msra.mxu0 0
    %305 = vmatprep.subr.bf16.mxu0 0
    %306 = vmatpush1.bf16.msra.mxu0 0
    %307 = vmatprep.subr.bf16.mxu0 0
    %308 = vmatpush1.bf16.msra.mxu0 0
    %309 = vmatprep.subr.bf16.mxu0 0
    %310 = vmatpush1.bf16.msra.mxu0 0
    %311 = vmatprep.subr.bf16.mxu0 0
    %312 = vmatpush1.bf16.msra.mxu0 0
    %313 = vmatprep.subr.bf16.mxu0 0
    %314 = vmatpush1.bf16.msra.mxu0 0
    %315 = vmatprep.mubr.bf16.mxu0 0
    %316 = vmatmul.mubr.bf16.gmra.mrb[0].mxu0 %v203
    %v317 = vpop.f32.mrb[0].mxu0
    %v318 = vadd.f32 %v138, %v317
    %v319 = vpop.f32.mrb[0].mxu0
    %v320 = vpop.f32.mrb[0].mxu0
    %v321 = vadd.f32 %v138, %v320
    %v322 = vpop.f32.mrb[0].mxu0
    %323 = vmatprep.mubr.bf16.mxu0 0
    %324 = vmatmul.mubr.bf16.gmra.mrb[0].mxu0 %v204
    %v325 = vpop.f32.mrb[0].mxu0
    %v326 = vadd.f32 %v138, %v325
    %v327 = vpop.f32.mrb[0].mxu0
    %v328 = vpop.f32.mrb[0].mxu0
    %v329 = vadd.f32 %v138, %v328
    %v330 = vpop.f32.mrb[0].mxu0
    %331 = vmatprep.mubr.bf16.mxu0 0
    %332 = vmatmul.mubr.bf16.gmra.mrb[0].mxu0 %v205
    %v333 = vpop.f32.mrb[0].mxu0
    %v334 = vadd.f32 %v138, %v333
    %v335 = vpop.f32.mrb[0].mxu0
    %v336 = vpop.f32.mrb[0].mxu0
    %v337 = vadd.f32 %v138, %v336
    %v338 = vpop.f32.mrb[0].mxu0
    %339 = vmatprep.mubr.bf16.mxu0 0
    %340 = vmatmul.mubr.bf16.gmra.mrb[0].mxu0 %v206
    %v341 = vpop.f32.mrb[0].mxu0
    %v342 = vadd.f32 %v138, %v341
    %v343 = vpop.f32.mrb[0].mxu0
    %v344 = vpop.f32.mrb[0].mxu0
    %v345 = vadd.f32 %v138, %v344
    %v346 = vpop.f32.mrb[0].mxu0
    %347 = vmatprep.mubr.bf16.mxu0 0
    %348 = vmatmul.mubr.bf16.gmra.mrb[0].mxu0 %v207
    %v349 = vpop.f32.mrb[0].mxu0
    %v350 = vadd.f32 %v138, %v349
    %v351 = vpop.f32.mrb[0].mxu0
    %v352 = vpop.f32.mrb[0].mxu0
    %v353 = vadd.f32 %v138, %v352
    %v354 = vpop.f32.mrb[0].mxu0
    %355 = vmatprep.mubr.bf16.mxu0 0
    %356 = vmatmul.mubr.bf16.gmra.mrb[0].mxu0 %v208
    %v357 = vpop.f32.mrb[0].mxu0
    %v358 = vadd.f32 %v138, %v357
    %v359 = vpop.f32.mrb[0].mxu0
    %v360 = vpop.f32.mrb[0].mxu0
    %v361 = vadd.f32 %v138, %v360
    %v362 = vpop.f32.mrb[0].mxu0
    %363 = vmatprep.mubr.bf16.mxu0 0
    %364 = vmatmul.mubr.bf16.gmra.mrb[0].mxu0 %v209
    %v365 = vpop.f32.mrb[0].mxu0
    %v366 = vadd.f32 %v138, %v365
    %v367 = vpop.f32.mrb[0].mxu0
    %v368 = vpop.f32.mrb[0].mxu0
    %v369 = vadd.f32 %v138, %v368
    %v370 = vpop.f32.mrb[0].mxu0
    %371 = vmatprep.mubr.bf16.mxu0 0
    %372 = vmatmul.mubr.bf16.gmra.mrb[0].mxu0 %v210
    %v373 = vpop.f32.mrb[0].mxu0
    %v374 = vadd.f32 %v138, %v373
    %v375 = vpop.f32.mrb[0].mxu0
    %v376 = vpop.f32.mrb[0].mxu0
    %v377 = vadd.f32 %v138, %v376
    %v378 = vpop.f32.mrb[0].mxu0
    %379 = vmatprep.mubr.bf16.mxu0 0
    %380 = vmatmul.mubr.bf16.gmra.mrb[0].mxu0 %v211
    %v381 = vpop.f32.mrb[0].mxu0
    %v382 = vadd.f32 %v138, %v381
    %v383 = vpop.f32.mrb[0].mxu0
    %v384 = vpop.f32.mrb[0].mxu0
    %v385 = vadd.f32 %v138, %v384
    %v386 = vpop.f32.mrb[0].mxu0
    %387 = vmatprep.mubr.bf16.mxu0 0
    %388 = vmatmul.mubr.bf16.gmra.mrb[0].mxu0 %v212
    %v389 = vpop.f32.mrb[0].mxu0
    %v390 = vadd.f32 %v138, %v389
    %v391 = vpop.f32.mrb[0].mxu0
    %v392 = vpop.f32.mrb[0].mxu0
    %v393 = vadd.f32 %v138, %v392
    %v394 = vpop.f32.mrb[0].mxu0
    %395 = vmatprep.mubr.bf16.mxu0 0
    %396 = vmatmul.mubr.bf16.gmra.mrb[0].mxu0 %v213
    %v397 = vpop.f32.mrb[0].mxu0
    %v398 = vadd.f32 %v138, %v397
    %v399 = vpop.f32.mrb[0].mxu0
    %v400 = vpop.f32.mrb[0].mxu0
    %v401 = vadd.f32 %v138, %v400
    %v402 = vpop.f32.mrb[0].mxu0
    %403 = vmatprep.mubr.bf16.mxu0 0
    %404 = vmatmul.mubr.bf16.gmra.mrb[0].mxu0 %v214
    %v405 = vpop.f32.mrb[0].mxu0
    %v406 = vadd.f32 %v138, %v405
    %v407 = vpop.f32.mrb[0].mxu0
    %v408 = vpop.f32.mrb[0].mxu0
    %v409 = vadd.f32 %v138, %v408
    %v410 = vpop.f32.mrb[0].mxu0
    %411 = vmatprep.mubr.bf16.mxu0 0
    %412 = vmatmul.mubr.bf16.gmra.mrb[0].mxu0 %v215
    %v413 = vpop.f32.mrb[0].mxu0
    %v414 = vadd.f32 %v138, %v413
    %v415 = vpop.f32.mrb[0].mxu0
    %v416 = vpop.f32.mrb[0].mxu0
    %v417 = vadd.f32 %v138, %v416
    %v418 = vpop.f32.mrb[0].mxu0
    %419 = vmatprep.mubr.bf16.mxu0 0
    %420 = vmatmul.mubr.bf16.gmra.mrb[0].mxu0 %v216
    %v421 = vpop.f32.mrb[0].mxu0
    %v422 = vadd.f32 %v138, %v421
    %v423 = vpop.f32.mrb[0].mxu0
    %v424 = vpop.f32.mrb[0].mxu0
    %v425 = vadd.f32 %v138, %v424
    %v426 = vpop.f32.mrb[0].mxu0
    %427 = vmatprep.mubr.bf16.mxu0 0
    %428 = vmatmul.mubr.bf16.gmra.mrb[0].mxu0 %v217
    %v429 = vpop.f32.mrb[0].mxu0
    %v430 = vadd.f32 %v138, %v429
    %v431 = vpop.f32.mrb[0].mxu0
    %v432 = vpop.f32.mrb[0].mxu0
    %v433 = vadd.f32 %v138, %v432
    %v434 = vpop.f32.mrb[0].mxu0
    %435 = vmatprep.mubr.bf16.mxu0 0
    %436 = vmatmul.mubr.bf16.gmra.mrb[0].mxu0 %v218
    %v437 = vpop.f32.mrb[0].mxu0
    %v438 = vadd.f32 %v138, %v437
    %v439 = vpop.f32.mrb[0].mxu0
    %v440 = vpop.f32.mrb[0].mxu0
    %v441 = vadd.f32 %v138, %v440
    %v442 = vpop.f32.mrb[0].mxu0
    %443 = vdwg.mxu0
    %v444 = vmax.f32 %v318, 0.0
    %v445 = vmax.f32 %v321, 0.0
    %v446 = vmax.f32 %v326, 0.0
    %v447 = vmax.f32 %v329, 0.0
    %v448 = vmax.f32 %v334, 0.0
    %v449 = vmax.f32 %v337, 0.0
    %v450 = vmax.f32 %v342, 0.0
    %v451 = vmax.f32 %v345, 0.0
    %v452 = vmax.f32 %v350, 0.0
    %v453 = vmax.f32 %v353, 0.0
    %v454 = vmax.f32 %v358, 0.0
    %v455 = vmax.f32 %v361, 0.0
    %v456 = vmax.f32 %v366, 0.0
    %v457 = vmax.f32 %v369, 0.0
    %v458 = vmax.f32 %v374, 0.0
    %v459 = vmax.f32 %v377, 0.0
    %v460 = vmax.f32 %v382, 0.0
    %v461 = vmax.f32 %v385, 0.0
    %v462 = vmax.f32 %v390, 0.0
    %v463 = vmax.f32 %v393, 0.0
    %v464 = vmax.f32 %v398, 0.0
    %v465 = vmax.f32 %v401, 0.0
    %v466 = vmax.f32 %v406, 0.0
    %v467 = vmax.f32 %v409, 0.0
    %v468 = vmax.f32 %v414, 0.0
    %v469 = vmax.f32 %v417, 0.0
    %v470 = vmax.f32 %v422, 0.0
    %v471 = vmax.f32 %v425, 0.0
    %v472 = vmax.f32 %v430, 0.0
    %v473 = vmax.f32 %v433, 0.0
    %v474 = vmax.f32 %v438, 0.0
    %v475 = vmax.f32 %v441, 0.0
    %476 = vadd.xlane.f32.xlu0 %v444
    %v477 = vpop.xlane.xlu0 %476
    %478 = vadd.xlane.f32.xlu0 %v445
    %v479 = vpop.xlane.xlu0 %478
    %480 = vadd.xlane.f32.xlu0 %v446
    %v481 = vpop.xlane.xlu0 %480
    %482 = vadd.xlane.f32.xlu0 %v447
    %v483 = vpop.xlane.xlu0 %482
    %484 = vadd.xlane.f32.xlu0 %v448
    %v485 = vpop.xlane.xlu0 %484
    %486 = vadd.xlane.f32.xlu0 %v449
    %v487 = vpop.xlane.xlu0 %486
    %488 = vadd.xlane.f32.xlu0 %v450
    %v489 = vpop.xlane.xlu0 %488
    %490 = vadd.xlane.f32.xlu0 %v451
    %v491 = vpop.xlane.xlu0 %490
    %492 = vadd.xlane.f32.xlu0 %v452
    %v493 = vpop.xlane.xlu0 %492
    %494 = vadd.xlane.f32.xlu0 %v453
    %v495 = vpop.xlane.xlu0 %494
    %496 = vadd.xlane.f32.xlu0 %v454
    %v497 = vpop.xlane.xlu0 %496
    %498 = vadd.xlane.f32.xlu0 %v455
    %v499 = vpop.xlane.xlu0 %498
    %500 = vadd.xlane.f32.xlu0 %v456
    %v501 = vpop.xlane.xlu0 %500
    %502 = vadd.xlane.f32.xlu0 %v457
    %v503 = vpop.xlane.xlu0 %502
    %504 = vadd.xlane.f32.xlu0 %v458
    %v505 = vpop.xlane.xlu0 %504
    %506 = vadd.xlane.f32.xlu0 %v459
    %v507 = vpop.xlane.xlu0 %506
    %508 = vadd.xlane.f32.xlu0 %v460
    %v509 = vpop.xlane.xlu0 %508
    %510 = vadd.xlane.f32.xlu0 %v461
    %v511 = vpop.xlane.xlu0 %510
    %512 = vadd.xlane.f32.xlu0 %v462
    %v513 = vpop.xlane.xlu0 %512
    %514 = vadd.xlane.f32.xlu0 %v463
    %v515 = vpop.xlane.xlu0 %514
    %516 = vadd.xlane.f32.xlu0 %v464
    %v517 = vpop.xlane.xlu0 %516
    %518 = vadd.xlane.f32.xlu0 %v465
    %v519 = vpop.xlane.xlu0 %518
    %520 = vadd.xlane.f32.xlu0 %v466
    %v521 = vpop.xlane.xlu0 %520
    %522 = vadd.xlane.f32.xlu0 %v467
    %v523 = vpop.xlane.xlu0 %522
    %524 = vadd.xlane.f32.xlu0 %v468
    %v525 = vpop.xlane.xlu0 %524
    %526 = vadd.xlane.f32.xlu0 %v469
    %v527 = vpop.xlane.xlu0 %526
    %528 = vadd.xlane.f32.xlu0 %v470
    %v529 = vpop.xlane.xlu0 %528
    %530 = vadd.xlane.f32.xlu0 %v471
    %v531 = vpop.xlane.xlu0 %530
    %532 = vadd.xlane.f32.xlu0 %v472
    %v533 = vpop.xlane.xlu0 %532
    %534 = vadd.xlane.f32.xlu0 %v473
    %v535 = vpop.xlane.xlu0 %534
    %536 = vadd.xlane.f32.xlu0 %v474
    %v537 = vpop.xlane.xlu0 %536
    %538 = vadd.xlane.f32.xlu0 %v475
    %v539 = vpop.xlane.xlu0 %538
    %v540 = vrcp.pop 128.0
    %v541 = vmul.f32 %v477, %v540
    %v542 = vmul.f32 %v479, %v540
    %v543 = vmul.f32 %v481, %v540
    %v544 = vmul.f32 %v483, %v540
    %v545 = vmul.f32 %v485, %v540
    %v546 = vmul.f32 %v487, %v540
    %v547 = vmul.f32 %v489, %v540
    %v548 = vmul.f32 %v491, %v540
    %v549 = vmul.f32 %v493, %v540
    %v550 = vmul.f32 %v495, %v540
    %v551 = vmul.f32 %v497, %v540
    %v552 = vmul.f32 %v499, %v540
    %v553 = vmul.f32 %v501, %v540
    %v554 = vmul.f32 %v503, %v540
    %v555 = vmul.f32 %v505, %v540
    %v556 = vmul.f32 %v507, %v540
    %v557 = vmul.f32 %v509, %v540
    %v558 = vmul.f32 %v511, %v540
    %v559 = vmul.f32 %v513, %v540
    %v560 = vmul.f32 %v515, %v540
    %v561 = vmul.f32 %v517, %v540
    %v562 = vmul.f32 %v519, %v540
    %v563 = vmul.f32 %v521, %v540
    %v564 = vmul.f32 %v523, %v540
    %v565 = vmul.f32 %v525, %v540
    %v566 = vmul.f32 %v527, %v540
    %v567 = vmul.f32 %v529, %v540
    %v568 = vmul.f32 %v531, %v540
    %v569 = vmul.f32 %v533, %v540
    %v570 = vmul.f32 %v535, %v540
    %v571 = vmul.f32 %v537, %v540
    %v572 = vmul.f32 %v539, %v540
    %v573 = vsub.f32 %v444, %v541
    %v574 = vsub.f32 %v445, %v542
    %v575 = vsub.f32 %v446, %v543
    %v576 = vsub.f32 %v447, %v544
    %v577 = vsub.f32 %v448, %v545
    %v578 = vsub.f32 %v449, %v546
    %v579 = vsub.f32 %v450, %v547
    %v580 = vsub.f32 %v451, %v548
    %v581 = vsub.f32 %v452, %v549
    %v582 = vsub.f32 %v453, %v550
    %v583 = vsub.f32 %v454, %v551
    %v584 = vsub.f32 %v455, %v552
    %v585 = vsub.f32 %v456, %v553
    %v586 = vsub.f32 %v457, %v554
    %v587 = vsub.f32 %v458, %v555
    %v588 = vsub.f32 %v459, %v556
    %v589 = vsub.f32 %v460, %v557
    %v590 = vsub.f32 %v461, %v558
    %v591 = vsub.f32 %v462, %v559
    %v592 = vsub.f32 %v463, %v560
    %v593 = vsub.f32 %v464, %v561
    %v594 = vsub.f32 %v465, %v562
    %v595 = vsub.f32 %v466, %v563
    %v596 = vsub.f32 %v467, %v564
    %v597 = vsub.f32 %v468, %v565
    %v598 = vsub.f32 %v469, %v566
    %v599 = vsub.f32 %v470, %v567
    %v600 = vsub.f32 %v471, %v568
    %v601 = vsub.f32 %v472, %v569
    %v602 = vsub.f32 %v473, %v570
    %v603 = vsub.f32 %v474, %v571
    %v604 = vsub.f32 %v475, %v572
    %v605 = vmul.f32 %v573, %v573
    %v606 = vmul.f32 %v574, %v574
    %v607 = vmul.f32 %v575, %v575
    %v608 = vmul.f32 %v576, %v576
    %v609 = vmul.f32 %v577, %v577
    %v610 = vmul.f32 %v578, %v578
    %v611 = vmul.f32 %v579, %v579
    %v612 = vmul.f32 %v580, %v580
    %v613 = vmul.f32 %v581, %v581
    %v614 = vmul.f32 %v582, %v582
    %v615 = vmul.f32 %v583, %v583
    %v616 = vmul.f32 %v584, %v584
    %v617 = vmul.f32 %v585, %v585
    %v618 = vmul.f32 %v586, %v586
    %v619 = vmul.f32 %v587, %v587
    %v620 = vmul.f32 %v588, %v588
    %v621 = vmul.f32 %v589, %v589
    %v622 = vmul.f32 %v590, %v590
    %v623 = vmul.f32 %v591, %v591
    %v624 = vmul.f32 %v592, %v592
    %v625 = vmul.f32 %v593, %v593
    %v626 = vmul.f32 %v594, %v594
    %v627 = vmul.f32 %v595, %v595
    %v628 = vmul.f32 %v596, %v596
    %v629 = vmul.f32 %v597, %v597
    %v630 = vmul.f32 %v598, %v598
    %v631 = vmul.f32 %v599, %v599
    %v632 = vmul.f32 %v600, %v600
    %v633 = vmul.f32 %v601, %v601
    %v634 = vmul.f32 %v602, %v602
    %v635 = vmul.f32 %v603, %v603
    %v636 = vmul.f32 %v604, %v604
    %637 = vadd.xlane.f32.xlu0 %v605
    %v638 = vpop.xlane.xlu0 %637
    %639 = vadd.xlane.f32.xlu0 %v606
    %v640 = vpop.xlane.xlu0 %639
    %641 = vadd.xlane.f32.xlu0 %v607
    %v642 = vpop.xlane.xlu0 %641
    %643 = vadd.xlane.f32.xlu0 %v608
    %v644 = vpop.xlane.xlu0 %643
    %645 = vadd.xlane.f32.xlu0 %v609
    %v646 = vpop.xlane.xlu0 %645
    %647 = vadd.xlane.f32.xlu0 %v610
    %v648 = vpop.xlane.xlu0 %647
    %649 = vadd.xlane.f32.xlu0 %v611
    %v650 = vpop.xlane.xlu0 %649
    %651 = vadd.xlane.f32.xlu0 %v612
    %v652 = vpop.xlane.xlu0 %651
    %653 = vadd.xlane.f32.xlu0 %v613
    %v654 = vpop.xlane.xlu0 %653
    %655 = vadd.xlane.f32.xlu0 %v614
    %v656 = vpop.xlane.xlu0 %655
    %657 = vadd.xlane.f32.xlu0 %v615
    %v658 = vpop.xlane.xlu0 %657
    %659 = vadd.xlane.f32.xlu0 %v616
    %v660 = vpop.xlane.xlu0 %659
    %661 = vadd.xlane.f32.xlu0 %v617
    %v662 = vpop.xlane.xlu0 %661
    %663 = vadd.xlane.f32.xlu0 %v618
    %v664 = vpop.xlane.xlu0 %663
    %665 = vadd.xlane.f32.xlu0 %v619
    %v666 = vpop.xlane.xlu0 %665
    %667 = vadd.xlane.f32.xlu0 %v620
    %v668 = vpop.xlane.xlu0 %667
    %669 = vadd.xlane.f32.xlu0 %v621
    %v670 = vpop.xlane.xlu0 %669
    %671 = vadd.xlane.f32.xlu0 %v622
    %v672 = vpop.xlane.xlu0 %671
    %673 = vadd.xlane.f32.xlu0 %v623
    %v674 = vpop.xlane.xlu0 %673
    %675 = vadd.xlane.f32.xlu0 %v624
    %v676 = vpop.xlane.xlu0 %675
    %677 = vadd.xlane.f32.xlu0 %v625
    %v678 = vpop.xlane.xlu0 %677
    %679 = vadd.xlane.f32.xlu0 %v626
    %v680 = vpop.xlane.xlu0 %679
    %681 = vadd.xlane.f32.xlu0 %v627
    %v682 = vpop.xlane.xlu0 %681
    %683 = vadd.xlane.f32.xlu0 %v628
    %v684 = vpop.xlane.xlu0 %683
    %685 = vadd.xlane.f32.xlu0 %v629
    %v686 = vpop.xlane.xlu0 %685
    %687 = vadd.xlane.f32.xlu0 %v630
    %v688 = vpop.xlane.xlu0 %687
    %689 = vadd.xlane.f32.xlu0 %v631
    %v690 = vpop.xlane.xlu0 %689
    %691 = vadd.xlane.f32.xlu0 %v632
    %v692 = vpop.xlane.xlu0 %691
    %693 = vadd.xlane.f32.xlu0 %v633
    %v694 = vpop.xlane.xlu0 %693
    %695 = vadd.xlane.f32.xlu0 %v634
    %v696 = vpop.xlane.xlu0 %695
    %697 = vadd.xlane.f32.xlu0 %v635
    %v698 = vpop.xlane.xlu0 %697
    %699 = vadd.xlane.f32.xlu0 %v636
    %v700 = vpop.xlane.xlu0 %699
    %v701 = vmul.f32 %v638, %v540
    %v702 = vmul.f32 %v640, %v540
    %v703 = vmul.f32 %v642, %v540
    %v704 = vmul.f32 %v644, %v540
    %v705 = vmul.f32 %v646, %v540
    %v706 = vmul.f32 %v648, %v540
    %v707 = vmul.f32 %v650, %v540
    %v708 = vmul.f32 %v652, %v540
    %v709 = vmul.f32 %v654, %v540
    %v710 = vmul.f32 %v656, %v540
    %v711 = vmul.f32 %v658, %v540
    %v712 = vmul.f32 %v660, %v540
    %v713 = vmul.f32 %v662, %v540
    %v714 = vmul.f32 %v664, %v540
    %v715 = vmul.f32 %v666, %v540
    %v716 = vmul.f32 %v668, %v540
    %v717 = vmul.f32 %v670, %v540
    %v718 = vmul.f32 %v672, %v540
    %v719 = vmul.f32 %v674, %v540
    %v720 = vmul.f32 %v676, %v540
    %v721 = vmul.f32 %v678, %v540
    %v722 = vmul.f32 %v680, %v540
    %v723 = vmul.f32 %v682, %v540
    %v724 = vmul.f32 %v684, %v540
    %v725 = vmul.f32 %v686, %v540
    %v726 = vmul.f32 %v688, %v540
    %v727 = vmul.f32 %v690, %v540
    %v728 = vmul.f32 %v692, %v540
    %v729 = vmul.f32 %v694, %v540
    %v730 = vmul.f32 %v696, %v540
    %v731 = vmul.f32 %v698, %v540
    %v732 = vmul.f32 %v700, %v540
    %v733 = vadd.f32 %v701, 1e-05
    %v734 = vadd.f32 %v702, 1e-05
    %v735 = vadd.f32 %v703, 1e-05
    %v736 = vadd.f32 %v704, 1e-05
    %v737 = vadd.f32 %v705, 1e-05
    %v738 = vadd.f32 %v706, 1e-05
    %v739 = vadd.f32 %v707, 1e-05
    %v740 = vadd.f32 %v708, 1e-05
    %v741 = vadd.f32 %v709, 1e-05
    %v742 = vadd.f32 %v710, 1e-05
    %v743 = vadd.f32 %v711, 1e-05
    %v744 = vadd.f32 %v712, 1e-05
    %v745 = vadd.f32 %v713, 1e-05
    %v746 = vadd.f32 %v714, 1e-05
    %v747 = vadd.f32 %v715, 1e-05
    %v748 = vadd.f32 %v716, 1e-05
    %v749 = vadd.f32 %v717, 1e-05
    %v750 = vadd.f32 %v718, 1e-05
    %v751 = vadd.f32 %v719, 1e-05
    %v752 = vadd.f32 %v720, 1e-05
    %v753 = vadd.f32 %v721, 1e-05
    %v754 = vadd.f32 %v722, 1e-05
    %v755 = vadd.f32 %v723, 1e-05
    %v756 = vadd.f32 %v724, 1e-05
    %v757 = vadd.f32 %v725, 1e-05
    %v758 = vadd.f32 %v726, 1e-05
    %v759 = vadd.f32 %v727, 1e-05
    %v760 = vadd.f32 %v728, 1e-05
    %v761 = vadd.f32 %v729, 1e-05
    %v762 = vadd.f32 %v730, 1e-05
    %v763 = vadd.f32 %v731, 1e-05
    %v764 = vadd.f32 %v732, 1e-05
    %v765 = vrsqrt.pop %v733
    %v766 = vrsqrt.pop %v734
    %v767 = vrsqrt.pop %v735
    %v768 = vrsqrt.pop %v736
    %v769 = vrsqrt.pop %v737
    %v770 = vrsqrt.pop %v738
    %v771 = vrsqrt.pop %v739
    %v772 = vrsqrt.pop %v740
    %v773 = vrsqrt.pop %v741
    %v774 = vrsqrt.pop %v742
    %v775 = vrsqrt.pop %v743
    %v776 = vrsqrt.pop %v744
    %v777 = vrsqrt.pop %v745
    %v778 = vrsqrt.pop %v746
    %v779 = vrsqrt.pop %v747
    %v780 = vrsqrt.pop %v748
    %v781 = vrsqrt.pop %v749
    %v782 = vrsqrt.pop %v750
    %v783 = vrsqrt.pop %v751
    %v784 = vrsqrt.pop %v752
    %v785 = vrsqrt.pop %v753
    %v786 = vrsqrt.pop %v754
    %v787 = vrsqrt.pop %v755
    %v788 = vrsqrt.pop %v756
    %v789 = vrsqrt.pop %v757
    %v790 = vrsqrt.pop %v758
    %v791 = vrsqrt.pop %v759
    %v792 = vrsqrt.pop %v760
    %v793 = vrsqrt.pop %v761
    %v794 = vrsqrt.pop %v762
    %v795 = vrsqrt.pop %v763
    %v796 = vrsqrt.pop %v764
    %v797 = vmul.f32 %v573, %v765
    %v798 = vmul.f32 %v574, %v766
    %v799 = vmul.f32 %v575, %v767
    %v800 = vmul.f32 %v576, %v768
    %v801 = vmul.f32 %v577, %v769
    %v802 = vmul.f32 %v578, %v770
    %v803 = vmul.f32 %v579, %v771
    %v804 = vmul.f32 %v580, %v772
    %v805 = vmul.f32 %v581, %v773
    %v806 = vmul.f32 %v582, %v774
    %v807 = vmul.f32 %v583, %v775
    %v808 = vmul.f32 %v584, %v776
    %v809 = vmul.f32 %v585, %v777
    %v810 = vmul.f32 %v586, %v778
    %v811 = vmul.f32 %v587, %v779
    %v812 = vmul.f32 %v588, %v780
    %v813 = vmul.f32 %v589, %v781
    %v814 = vmul.f32 %v590, %v782
    %v815 = vmul.f32 %v591, %v783
    %v816 = vmul.f32 %v592, %v784
    %v817 = vmul.f32 %v593, %v785
    %v818 = vmul.f32 %v594, %v786
    %v819 = vmul.f32 %v595, %v787
    %v820 = vmul.f32 %v596, %v788
    %v821 = vmul.f32 %v597, %v789
    %v822 = vmul.f32 %v598, %v790
    %v823 = vmul.f32 %v599, %v791
    %v824 = vmul.f32 %v600, %v792
    %v825 = vmul.f32 %v601, %v793
    %v826 = vmul.f32 %v602, %v794
    %v827 = vmul.f32 %v603, %v795
    %v828 = vmul.f32 %v604, %v796
    %v829 = vld [vmem:[#allocation7 + $0x1] sm:$0x1]
    %v830 = vlaneseq
    %v831 = vshrl.u32 %v830, 7
    %v832 = vsub.s32 0, %v831
    %v833 = vrot.slane %v829, %v832
    %v834 = vmul.f32 %v797, %v833
    %v835 = vmul.f32 %v798, %v833
    %v836 = vmul.f32 %v799, %v833
    %v837 = vmul.f32 %v800, %v833
    %v838 = vmul.f32 %v801, %v833
    %v839 = vmul.f32 %v802, %v833
    %v840 = vmul.f32 %v803, %v833
    %v841 = vmul.f32 %v804, %v833
    %v842 = vmul.f32 %v805, %v833
    %v843 = vmul.f32 %v806, %v833
    %v844 = vmul.f32 %v807, %v833
    %v845 = vmul.f32 %v808, %v833
    %v846 = vmul.f32 %v809, %v833
    %v847 = vmul.f32 %v810, %v833
    %v848 = vmul.f32 %v811, %v833
    %v849 = vmul.f32 %v812, %v833
    %v850 = vmul.f32 %v813, %v833
    %v851 = vmul.f32 %v814, %v833
    %v852 = vmul.f32 %v815, %v833
    %v853 = vmul.f32 %v816, %v833
    %v854 = vmul.f32 %v817, %v833
    %v855 = vmul.f32 %v818, %v833
    %v856 = vmul.f32 %v819, %v833
    %v857 = vmul.f32 %v820, %v833
    %v858 = vmul.f32 %v821, %v833
    %v859 = vmul.f32 %v822, %v833
    %v860 = vmul.f32 %v823, %v833
    %v861 = vmul.f32 %v824, %v833
    %v862 = vmul.f32 %v825, %v833
    %v863 = vmul.f32 %v826, %v833
    %v864 = vmul.f32 %v827, %v833
    %v865 = vmul.f32 %v828, %v833
    %v866 = vld [vmem:[#allocation7 + $0x2] sm:$0x1]
    %v867 = vlaneseq
    %v868 = vshrl.u32 %v867, 7
    %v869 = vsub.s32 0, %v868
    %v870 = vrot.slane %v866, %v869
    %v871 = vadd.f32 %v834, %v870
    %v872 = vadd.f32 %v835, %v870
    %v873 = vadd.f32 %v836, %v870
    %v874 = vadd.f32 %v837, %v870
    %v875 = vadd.f32 %v838, %v870
    %v876 = vadd.f32 %v839, %v870
    %v877 = vadd.f32 %v840, %v870
    %v878 = vadd.f32 %v841, %v870
    %v879 = vadd.f32 %v842, %v870
    %v880 = vadd.f32 %v843, %v870
    %v881 = vadd.f32 %v844, %v870
    %v882 = vadd.f32 %v845, %v870
    %v883 = vadd.f32 %v846, %v870
    %v884 = vadd.f32 %v847, %v870
    %v885 = vadd.f32 %v848, %v870
    %v886 = vadd.f32 %v849, %v870
    %v887 = vadd.f32 %v850, %v870
    %v888 = vadd.f32 %v851, %v870
    %v889 = vadd.f32 %v852, %v870
    %v890 = vadd.f32 %v853, %v870
    %v891 = vadd.f32 %v854, %v870
    %v892 = vadd.f32 %v855, %v870
    %v893 = vadd.f32 %v856, %v870
    %v894 = vadd.f32 %v857, %v870
    %v895 = vadd.f32 %v858, %v870
    %v896 = vadd.f32 %v859, %v870
    %v897 = vadd.f32 %v860, %v870
    %v898 = vadd.f32 %v861, %v870
    %v899 = vadd.f32 %v862, %v870
    %v900 = vadd.f32 %v863, %v870
    %v901 = vadd.f32 %v864, %v870
    %v902 = vadd.f32 %v865, %v870
    %v903 = vpack.c.bf16 %v872, %v871
    %v904 = vpack.c.bf16 %v874, %v873
    %v905 = vpack.c.bf16 %v876, %v875
    %v906 = vpack.c.bf16 %v878, %v877
    %v907 = vpack.c.bf16 %v880, %v879
    %v908 = vpack.c.bf16 %v882, %v881
    %v909 = vpack.c.bf16 %v884, %v883
    %v910 = vpack.c.bf16 %v886, %v885
    %v911 = vpack.c.bf16 %v888, %v887
    %v912 = vpack.c.bf16 %v890, %v889
    %v913 = vpack.c.bf16 %v892, %v891
    %v914 = vpack.c.bf16 %v894, %v893
    %v915 = vpack.c.bf16 %v896, %v895
    %v916 = vpack.c.bf16 %v898, %v897
    %v917 = vpack.c.bf16 %v900, %v899
    %v918 = vpack.c.bf16 %v902, %v901
    %v919 = vld [vmem:[#allocation8] sm:$0xf]
    %v920 = vld [vmem:[#allocation8 + $0x4] sm:$0xf]
    %v921 = vld [vmem:[#allocation8 + $0x8] sm:$0xf]
    %v922 = vld [vmem:[#allocation8 + $0xc] sm:$0xf]
    %v923 = vld [vmem:[#allocation8 + $0x10] sm:$0xf]
    %v924 = vld [vmem:[#allocation8 + $0x14] sm:$0xf]
    %v925 = vld [vmem:[#allocation8 + $0x18] sm:$0xf]
    %v926 = vld [vmem:[#allocation8 + $0x1c] sm:$0xf]
    %v927 = vld [vmem:[#allocation8 + $0x20] sm:$0xf]
    %v928 = vld [vmem:[#allocation8 + $0x24] sm:$0xf]
    %v929 = vld [vmem:[#allocation8 + $0x28] sm:$0xf]
    %v930 = vld [vmem:[#allocation8 + $0x2c] sm:$0xf]
    %v931 = vld [vmem:[#allocation8 + $0x30] sm:$0xf]
    %v932 = vld [vmem:[#allocation8 + $0x34] sm:$0xf]
    %v933 = vld [vmem:[#allocation8 + $0x38] sm:$0xf]
    %v934 = vld [vmem:[#allocation8 + $0x3c] sm:$0xf]
    %v935 = vld [vmem:[#allocation10] sm:$0x1]
    %v936 = vlaneseq
    %v937 = vshrl.u32 %v936, 7
    %v938 = vsub.s32 0, %v937
    %v939 = vrot.slane %v935, %v938
    %v956 = vunpack.c.l.b16 %v919
    %v957 = vunpack.c.l.b16 %v920
    %v958 = vunpack.c.l.b16 %v921
    %v959 = vunpack.c.l.b16 %v922
    %v960 = vunpack.c.l.b16 %v923
    %v961 = vunpack.c.l.b16 %v924
    %v962 = vunpack.c.l.b16 %v925
    %v963 = vunpack.c.l.b16 %v926
    %v964 = vunpack.c.l.b16 %v927
    %v965 = vunpack.c.l.b16 %v928
    %v966 = vunpack.c.l.b16 %v929
    %v967 = vunpack.c.l.b16 %v930
    %v968 = vunpack.c.l.b16 %v931
    %v969 = vunpack.c.l.b16 %v932
    %v970 = vunpack.c.l.b16 %v933
    %v971 = vunpack.c.l.b16 %v934
    %v972 = vpack.c.b16 %v957, %v956
    %v973 = vpack.c.b16 %v959, %v958
    %v974 = vpack.c.b16 %v961, %v960
    %v975 = vpack.c.b16 %v963, %v962
    %v976 = vpack.c.b16 %v965, %v964
    %v977 = vpack.c.b16 %v967, %v966
    %v978 = vpack.c.b16 %v969, %v968
    %v979 = vpack.c.b16 %v971, %v970
    %988 = vmatprep.subr.bf16.mxu0 0
    %989 = vmatpush1.bf16.msra.mxu0 %v972
    %990 = vmatprep.subr.bf16.mxu0 0
    %991 = vmatpush1.bf16.msra.mxu0 %v973
    %992 = vmatprep.subr.bf16.mxu0 0
    %993 = vmatpush1.bf16.msra.mxu0 %v974
    %994 = vmatprep.subr.bf16.mxu0 0
    %995 = vmatpush1.bf16.msra.mxu0 %v975
    %996 = vmatprep.subr.bf16.mxu0 0
    %997 = vmatpush1.bf16.msra.mxu0 %v976
    %998 = vmatprep.subr.bf16.mxu0 0
    %999 = vmatpush1.bf16.msra.mxu0 %v977
    %1000 = vmatprep.subr.bf16.mxu0 0
    %1001 = vmatpush1.bf16.msra.mxu0 %v978
    %1002 = vmatprep.subr.bf16.mxu0 0
    %1003 = vmatpush1.bf16.msra.mxu0 %v979
    %1004 = vmatprep.subr.bf16.mxu0 0
    %1005 = vmatpush1.bf16.msra.mxu0 0
    %1006 = vmatprep.subr.bf16.mxu0 0
    %1007 = vmatpush1.bf16.msra.mxu0 0
    %1008 = vmatprep.subr.bf16.mxu0 0
    %1009 = vmatpush1.bf16.msra.mxu0 0
    %1010 = vmatprep.subr.bf16.mxu0 0
    %1011 = vmatpush1.bf16.msra.mxu0 0
    %1012 = vmatprep.subr.bf16.mxu0 0
    %1013 = vmatpush1.bf16.msra.mxu0 0
    %1014 = vmatprep.subr.bf16.mxu0 0
    %1015 = vmatpush1.bf16.msra.mxu0 0
    %1016 = vmatprep.subr.bf16.mxu0 0
    %1017 = vmatpush1.bf16.msra.mxu0 0
    %1018 = vmatprep.subr.bf16.mxu0 0
    %1019 = vmatpush1.bf16.msra.mxu0 0
    %1020 = vmatprep.mubr.bf16.mxu0 0
    %1021 = vmatmul.mubr.bf16.gmra.mrb[0].mxu0 %v903
    %v1022 = vpop.f32.mrb[0].mxu0
    %v1023 = vadd.f32 %v939, %v1022
    %v1024 = vpop.f32.mrb[0].mxu0
    %v1025 = vpop.f32.mrb[0].mxu0
    %v1026 = vadd.f32 %v939, %v1025
    %v1027 = vpop.f32.mrb[0].mxu0
    %1028 = vmatprep.mubr.bf16.mxu0 0
    %1029 = vmatmul.mubr.bf16.gmra.mrb[0].mxu0 %v904
    %v1030 = vpop.f32.mrb[0].mxu0
    %v1031 = vadd.f32 %v939, %v1030
    %v1032 = vpop.f32.mrb[0].mxu0
    %v1033 = vpop.f32.mrb[0].mxu0
    %v1034 = vadd.f32 %v939, %v1033
    %v1035 = vpop.f32.mrb[0].mxu0
    %1036 = vmatprep.mubr.bf16.mxu0 0
    %1037 = vmatmul.mubr.bf16.gmra.mrb[0].mxu0 %v905
    %v1038 = vpop.f32.mrb[0].mxu0
    %v1039 = vadd.f32 %v939, %v1038
    %v1040 = vpop.f32.mrb[0].mxu0
    %v1041 = vpop.f32.mrb[0].mxu0
    %v1042 = vadd.f32 %v939, %v1041
    %v1043 = vpop.f32.mrb[0].mxu0
    %1044 = vmatprep.mubr.bf16.mxu0 0
    %1045 = vmatmul.mubr.bf16.gmra.mrb[0].mxu0 %v906
    %v1046 = vpop.f32.mrb[0].mxu0
    %v1047 = vadd.f32 %v939, %v1046
    %v1048 = vpop.f32.mrb[0].mxu0
    %v1049 = vpop.f32.mrb[0].mxu0
    %v1050 = vadd.f32 %v939, %v1049
    %v1051 = vpop.f32.mrb[0].mxu0
    %1052 = vmatprep.mubr.bf16.mxu0 0
    %1053 = vmatmul.mubr.bf16.gmra.mrb[0].mxu0 %v907
    %v1054 = vpop.f32.mrb[0].mxu0
    %v1055 = vadd.f32 %v939, %v1054
    %v1056 = vpop.f32.mrb[0].mxu0
    %v1057 = vpop.f32.mrb[0].mxu0
    %v1058 = vadd.f32 %v939, %v1057
    %v1059 = vpop.f32.mrb[0].mxu0
    %1060 = vmatprep.mubr.bf16.mxu0 0
    %1061 = vmatmul.mubr.bf16.gmra.mrb[0].mxu0 %v908
    %v1062 = vpop.f32.mrb[0].mxu0
    %v1063 = vadd.f32 %v939, %v1062
    %v1064 = vpop.f32.mrb[0].mxu0
    %v1065 = vpop.f32.mrb[0].mxu0
    %v1066 = vadd.f32 %v939, %v1065
    %v1067 = vpop.f32.mrb[0].mxu0
    %1068 = vmatprep.mubr.bf16.mxu0 0
    %1069 = vmatmul.mubr.bf16.gmra.mrb[0].mxu0 %v909
    %v1070 = vpop.f32.mrb[0].mxu0
    %v1071 = vadd.f32 %v939, %v1070
    %v1072 = vpop.f32.mrb[0].mxu0
    %v1073 = vpop.f32.mrb[0].mxu0
    %v1074 = vadd.f32 %v939, %v1073
    %v1075 = vpop.f32.mrb[0].mxu0
    %1076 = vmatprep.mubr.bf16.mxu0 0
    %1077 = vmatmul.mubr.bf16.gmra.mrb[0].mxu0 %v910
    %v1078 = vpop.f32.mrb[0].mxu0
    %v1079 = vadd.f32 %v939, %v1078
    %v1080 = vpop.f32.mrb[0].mxu0
    %v1081 = vpop.f32.mrb[0].mxu0
    %v1082 = vadd.f32 %v939, %v1081
    %v1083 = vpop.f32.mrb[0].mxu0
    %1084 = vmatprep.mubr.bf16.mxu0 0
    %1085 = vmatmul.mubr.bf16.gmra.mrb[0].mxu0 %v911
    %v1086 = vpop.f32.mrb[0].mxu0
    %v1087 = vadd.f32 %v939, %v1086
    %v1088 = vpop.f32.mrb[0].mxu0
    %v1089 = vpop.f32.mrb[0].mxu0
    %v1090 = vadd.f32 %v939, %v1089
    %v1091 = vpop.f32.mrb[0].mxu0
    %1092 = vmatprep.mubr.bf16.mxu0 0
    %1093 = vmatmul.mubr.bf16.gmra.mrb[0].mxu0 %v912
    %v1094 = vpop.f32.mrb[0].mxu0
    %v1095 = vadd.f32 %v939, %v1094
    %v1096 = vpop.f32.mrb[0].mxu0
    %v1097 = vpop.f32.mrb[0].mxu0
    %v1098 = vadd.f32 %v939, %v1097
    %v1099 = vpop.f32.mrb[0].mxu0
    %1100 = vmatprep.mubr.bf16.mxu0 0
    %1101 = vmatmul.mubr.bf16.gmra.mrb[0].mxu0 %v913
    %v1102 = vpop.f32.mrb[0].mxu0
    %v1103 = vadd.f32 %v939, %v1102
    %v1104 = vpop.f32.mrb[0].mxu0
    %v1105 = vpop.f32.mrb[0].mxu0
    %v1106 = vadd.f32 %v939, %v1105
    %v1107 = vpop.f32.mrb[0].mxu0
    %1108 = vmatprep.mubr.bf16.mxu0 0
    %1109 = vmatmul.mubr.bf16.gmra.mrb[0].mxu0 %v914
    %v1110 = vpop.f32.mrb[0].mxu0
    %v1111 = vadd.f32 %v939, %v1110
    %v1112 = vpop.f32.mrb[0].mxu0
    %v1113 = vpop.f32.mrb[0].mxu0
    %v1114 = vadd.f32 %v939, %v1113
    %v1115 = vpop.f32.mrb[0].mxu0
    %1116 = vmatprep.mubr.bf16.mxu0 0
    %1117 = vmatmul.mubr.bf16.gmra.mrb[0].mxu0 %v915
    %v1118 = vpop.f32.mrb[0].mxu0
    %v1119 = vadd.f32 %v939, %v1118
    %v1120 = vpop.f32.mrb[0].mxu0
    %v1121 = vpop.f32.mrb[0].mxu0
    %v1122 = vadd.f32 %v939, %v1121
    %v1123 = vpop.f32.mrb[0].mxu0
    %1124 = vmatprep.mubr.bf16.mxu0 0
    %1125 = vmatmul.mubr.bf16.gmra.mrb[0].mxu0 %v916
    %v1126 = vpop.f32.mrb[0].mxu0
    %v1127 = vadd.f32 %v939, %v1126
    %v1128 = vpop.f32.mrb[0].mxu0
    %v1129 = vpop.f32.mrb[0].mxu0
    %v1130 = vadd.f32 %v939, %v1129
    %v1131 = vpop.f32.mrb[0].mxu0
    %1132 = vmatprep.mubr.bf16.mxu0 0
    %1133 = vmatmul.mubr.bf16.gmra.mrb[0].mxu0 %v917
    %v1134 = vpop.f32.mrb[0].mxu0
    %v1135 = vadd.f32 %v939, %v1134
    %v1136 = vpop.f32.mrb[0].mxu0
    %v1137 = vpop.f32.mrb[0].mxu0
    %v1138 = vadd.f32 %v939, %v1137
    %v1139 = vpop.f32.mrb[0].mxu0
    %1140 = vmatprep.mubr.bf16.mxu0 0
    %1141 = vmatmul.mubr.bf16.gmra.mrb[0].mxu0 %v918
    %v1142 = vpop.f32.mrb[0].mxu0
    %v1143 = vadd.f32 %v939, %v1142
    %v1144 = vpop.f32.mrb[0].mxu0
    %v1145 = vpop.f32.mrb[0].mxu0
    %v1146 = vadd.f32 %v939, %v1145
    %v1147 = vpop.f32.mrb[0].mxu0
    %1148 = vdwg.mxu0
    %v1149 = vmax.f32 %v1023, 0.0
    %v1150 = vmax.f32 %v1026, 0.0
    %v1151 = vmax.f32 %v1031, 0.0
    %v1152 = vmax.f32 %v1034, 0.0
    %v1153 = vmax.f32 %v1039, 0.0
    %v1154 = vmax.f32 %v1042, 0.0
    %v1155 = vmax.f32 %v1047, 0.0
    %v1156 = vmax.f32 %v1050, 0.0
    %v1157 = vmax.f32 %v1055, 0.0
    %v1158 = vmax.f32 %v1058, 0.0
    %v1159 = vmax.f32 %v1063, 0.0
    %v1160 = vmax.f32 %v1066, 0.0
    %v1161 = vmax.f32 %v1071, 0.0
    %v1162 = vmax.f32 %v1074, 0.0
    %v1163 = vmax.f32 %v1079, 0.0
    %v1164 = vmax.f32 %v1082, 0.0
    %v1165 = vmax.f32 %v1087, 0.0
    %v1166 = vmax.f32 %v1090, 0.0
    %v1167 = vmax.f32 %v1095, 0.0
    %v1168 = vmax.f32 %v1098, 0.0
    %v1169 = vmax.f32 %v1103, 0.0
    %v1170 = vmax.f32 %v1106, 0.0
    %v1171 = vmax.f32 %v1111, 0.0
    %v1172 = vmax.f32 %v1114, 0.0
    %v1173 = vmax.f32 %v1119, 0.0
    %v1174 = vmax.f32 %v1122, 0.0
    %v1175 = vmax.f32 %v1127, 0.0
    %v1176 = vmax.f32 %v1130, 0.0
    %v1177 = vmax.f32 %v1135, 0.0
    %v1178 = vmax.f32 %v1138, 0.0
    %v1179 = vmax.f32 %v1143, 0.0
    %v1180 = vmax.f32 %v1146, 0.0
    %1181 = vadd.xlane.f32.xlu0 %v1149
    %v1182 = vpop.xlane.xlu0 %1181
    %1183 = vadd.xlane.f32.xlu0 %v1150
    %v1184 = vpop.xlane.xlu0 %1183
    %1185 = vadd.xlane.f32.xlu0 %v1151
    %v1186 = vpop.xlane.xlu0 %1185
    %1187 = vadd.xlane.f32.xlu0 %v1152
    %v1188 = vpop.xlane.xlu0 %1187
    %1189 = vadd.xlane.f32.xlu0 %v1153
    %v1190 = vpop.xlane.xlu0 %1189
    %1191 = vadd.xlane.f32.xlu0 %v1154
    %v1192 = vpop.xlane.xlu0 %1191
    %1193 = vadd.xlane.f32.xlu0 %v1155
    %v1194 = vpop.xlane.xlu0 %1193
    %1195 = vadd.xlane.f32.xlu0 %v1156
    %v1196 = vpop.xlane.xlu0 %1195
    %1197 = vadd.xlane.f32.xlu0 %v1157
    %v1198 = vpop.xlane.xlu0 %1197
    %1199 = vadd.xlane.f32.xlu0 %v1158
    %v1200 = vpop.xlane.xlu0 %1199
    %1201 = vadd.xlane.f32.xlu0 %v1159
    %v1202 = vpop.xlane.xlu0 %1201
    %1203 = vadd.xlane.f32.xlu0 %v1160
    %v1204 = vpop.xlane.xlu0 %1203
    %1205 = vadd.xlane.f32.xlu0 %v1161
    %v1206 = vpop.xlane.xlu0 %1205
    %1207 = vadd.xlane.f32.xlu0 %v1162
    %v1208 = vpop.xlane.xlu0 %1207
    %1209 = vadd.xlane.f32.xlu0 %v1163
    %v1210 = vpop.xlane.xlu0 %1209
    %1211 = vadd.xlane.f32.xlu0 %v1164
    %v1212 = vpop.xlane.xlu0 %1211
    %1213 = vadd.xlane.f32.xlu0 %v1165
    %v1214 = vpop.xlane.xlu0 %1213
    %1215 = vadd.xlane.f32.xlu0 %v1166
    %v1216 = vpop.xlane.xlu0 %1215
    %1217 = vadd.xlane.f32.xlu0 %v1167
    %v1218 = vpop.xlane.xlu0 %1217
    %1219 = vadd.xlane.f32.xlu0 %v1168
    %v1220 = vpop.xlane.xlu0 %1219
    %1221 = vadd.xlane.f32.xlu0 %v1169
    %v1222 = vpop.xlane.xlu0 %1221
    %1223 = vadd.xlane.f32.xlu0 %v1170
    %v1224 = vpop.xlane.xlu0 %1223
    %1225 = vadd.xlane.f32.xlu0 %v1171
    %v1226 = vpop.xlane.xlu0 %1225
    %1227 = vadd.xlane.f32.xlu0 %v1172
    %v1228 = vpop.xlane.xlu0 %1227
    %1229 = vadd.xlane.f32.xlu0 %v1173
    %v1230 = vpop.xlane.xlu0 %1229
    %1231 = vadd.xlane.f32.xlu0 %v1174
    %v1232 = vpop.xlane.xlu0 %1231
    %1233 = vadd.xlane.f32.xlu0 %v1175
    %v1234 = vpop.xlane.xlu0 %1233
    %1235 = vadd.xlane.f32.xlu0 %v1176
    %v1236 = vpop.xlane.xlu0 %1235
    %1237 = vadd.xlane.f32.xlu0 %v1177
    %v1238 = vpop.xlane.xlu0 %1237
    %1239 = vadd.xlane.f32.xlu0 %v1178
    %v1240 = vpop.xlane.xlu0 %1239
    %1241 = vadd.xlane.f32.xlu0 %v1179
    %v1242 = vpop.xlane.xlu0 %1241
    %1243 = vadd.xlane.f32.xlu0 %v1180
    %v1244 = vpop.xlane.xlu0 %1243
    %v1245 = vmul.f32 %v1182, %v540
    %v1246 = vmul.f32 %v1184, %v540
    %v1247 = vmul.f32 %v1186, %v540
    %v1248 = vmul.f32 %v1188, %v540
    %v1249 = vmul.f32 %v1190, %v540
    %v1250 = vmul.f32 %v1192, %v540
    %v1251 = vmul.f32 %v1194, %v540
    %v1252 = vmul.f32 %v1196, %v540
    %v1253 = vmul.f32 %v1198, %v540
    %v1254 = vmul.f32 %v1200, %v540
    %v1255 = vmul.f32 %v1202, %v540
    %v1256 = vmul.f32 %v1204, %v540
    %v1257 = vmul.f32 %v1206, %v540
    %v1258 = vmul.f32 %v1208, %v540
    %v1259 = vmul.f32 %v1210, %v540
    %v1260 = vmul.f32 %v1212, %v540
    %v1261 = vmul.f32 %v1214, %v540
    %v1262 = vmul.f32 %v1216, %v540
    %v1263 = vmul.f32 %v1218, %v540
    %v1264 = vmul.f32 %v1220, %v540
    %v1265 = vmul.f32 %v1222, %v540
    %v1266 = vmul.f32 %v1224, %v540
    %v1267 = vmul.f32 %v1226, %v540
    %v1268 = vmul.f32 %v1228, %v540
    %v1269 = vmul.f32 %v1230, %v540
    %v1270 = vmul.f32 %v1232, %v540
    %v1271 = vmul.f32 %v1234, %v540
    %v1272 = vmul.f32 %v1236, %v540
    %v1273 = vmul.f32 %v1238, %v540
    %v1274 = vmul.f32 %v1240, %v540
    %v1275 = vmul.f32 %v1242, %v540
    %v1276 = vmul.f32 %v1244, %v540
    %v1277 = vsub.f32 %v1149, %v1245
    %v1278 = vsub.f32 %v1150, %v1246
    %v1279 = vsub.f32 %v1151, %v1247
    %v1280 = vsub.f32 %v1152, %v1248
    %v1281 = vsub.f32 %v1153, %v1249
    %v1282 = vsub.f32 %v1154, %v1250
    %v1283 = vsub.f32 %v1155, %v1251
    %v1284 = vsub.f32 %v1156, %v1252
    %v1285 = vsub.f32 %v1157, %v1253
    %v1286 = vsub.f32 %v1158, %v1254
    %v1287 = vsub.f32 %v1159, %v1255
    %v1288 = vsub.f32 %v1160, %v1256
    %v1289 = vsub.f32 %v1161, %v1257
    %v1290 = vsub.f32 %v1162, %v1258
    %v1291 = vsub.f32 %v1163, %v1259
    %v1292 = vsub.f32 %v1164, %v1260
    %v1293 = vsub.f32 %v1165, %v1261
    %v1294 = vsub.f32 %v1166, %v1262
    %v1295 = vsub.f32 %v1167, %v1263
    %v1296 = vsub.f32 %v1168, %v1264
    %v1297 = vsub.f32 %v1169, %v1265
    %v1298 = vsub.f32 %v1170, %v1266
    %v1299 = vsub.f32 %v1171, %v1267
    %v1300 = vsub.f32 %v1172, %v1268
    %v1301 = vsub.f32 %v1173, %v1269
    %v1302 = vsub.f32 %v1174, %v1270
    %v1303 = vsub.f32 %v1175, %v1271
    %v1304 = vsub.f32 %v1176, %v1272
    %v1305 = vsub.f32 %v1177, %v1273
    %v1306 = vsub.f32 %v1178, %v1274
    %v1307 = vsub.f32 %v1179, %v1275
    %v1308 = vsub.f32 %v1180, %v1276
    %v1309 = vmul.f32 %v1277, %v1277
    %v1310 = vmul.f32 %v1278, %v1278
    %v1311 = vmul.f32 %v1279, %v1279
    %v1312 = vmul.f32 %v1280, %v1280
    %v1313 = vmul.f32 %v1281, %v1281
    %v1314 = vmul.f32 %v1282, %v1282
    %v1315 = vmul.f32 %v1283, %v1283
    %v1316 = vmul.f32 %v1284, %v1284
    %v1317 = vmul.f32 %v1285, %v1285
    %v1318 = vmul.f32 %v1286, %v1286
    %v1319 = vmul.f32 %v1287, %v1287
    %v1320 = vmul.f32 %v1288, %v1288
    %v1321 = vmul.f32 %v1289, %v1289
    %v1322 = vmul.f32 %v1290, %v1290
    %v1323 = vmul.f32 %v1291, %v1291
    %v1324 = vmul.f32 %v1292, %v1292
    %v1325 = vmul.f32 %v1293, %v1293
    %v1326 = vmul.f32 %v1294, %v1294
    %v1327 = vmul.f32 %v1295, %v1295
    %v1328 = vmul.f32 %v1296, %v1296
    %v1329 = vmul.f32 %v1297, %v1297
    %v1330 = vmul.f32 %v1298, %v1298
    %v1331 = vmul.f32 %v1299, %v1299
    %v1332 = vmul.f32 %v1300, %v1300
    %v1333 = vmul.f32 %v1301, %v1301
    %v1334 = vmul.f32 %v1302, %v1302
    %v1335 = vmul.f32 %v1303, %v1303
    %v1336 = vmul.f32 %v1304, %v1304
    %v1337 = vmul.f32 %v1305, %v1305
    %v1338 = vmul.f32 %v1306, %v1306
    %v1339 = vmul.f32 %v1307, %v1307
    %v1340 = vmul.f32 %v1308, %v1308
    %1341 = vadd.xlane.f32.xlu0 %v1309
    %v1342 = vpop.xlane.xlu0 %1341
    %1343 = vadd.xlane.f32.xlu0 %v1310
    %v1344 = vpop.xlane.xlu0 %1343
    %1345 = vadd.xlane.f32.xlu0 %v1311
    %v1346 = vpop.xlane.xlu0 %1345
    %1347 = vadd.xlane.f32.xlu0 %v1312
    %v1348 = vpop.xlane.xlu0 %1347
    %1349 = vadd.xlane.f32.xlu0 %v1313
    %v1350 = vpop.xlane.xlu0 %1349
    %1351 = vadd.xlane.f32.xlu0 %v1314
    %v1352 = vpop.xlane.xlu0 %1351
    %1353 = vadd.xlane.f32.xlu0 %v1315
    %v1354 = vpop.xlane.xlu0 %1353
    %1355 = vadd.xlane.f32.xlu0 %v1316
    %v1356 = vpop.xlane.xlu0 %1355
    %1357 = vadd.xlane.f32.xlu0 %v1317
    %v1358 = vpop.xlane.xlu0 %1357
    %1359 = vadd.xlane.f32.xlu0 %v1318
    %v1360 = vpop.xlane.xlu0 %1359
    %1361 = vadd.xlane.f32.xlu0 %v1319
    %v1362 = vpop.xlane.xlu0 %1361
    %1363 = vadd.xlane.f32.xlu0 %v1320
    %v1364 = vpop.xlane.xlu0 %1363
    %1365 = vadd.xlane.f32.xlu0 %v1321
    %v1366 = vpop.xlane.xlu0 %1365
    %1367 = vadd.xlane.f32.xlu0 %v1322
    %v1368 = vpop.xlane.xlu0 %1367
    %1369 = vadd.xlane.f32.xlu0 %v1323
    %v1370 = vpop.xlane.xlu0 %1369
    %1371 = vadd.xlane.f32.xlu0 %v1324
    %v1372 = vpop.xlane.xlu0 %1371
    %1373 = vadd.xlane.f32.xlu0 %v1325
    %v1374 = vpop.xlane.xlu0 %1373
    %1375 = vadd.xlane.f32.xlu0 %v1326
    %v1376 = vpop.xlane.xlu0 %1375
    %1377 = vadd.xlane.f32.xlu0 %v1327
    %v1378 = vpop.xlane.xlu0 %1377
    %1379 = vadd.xlane.f32.xlu0 %v1328
    %v1380 = vpop.xlane.xlu0 %1379
    %1381 = vadd.xlane.f32.xlu0 %v1329
    %v1382 = vpop.xlane.xlu0 %1381
    %1383 = vadd.xlane.f32.xlu0 %v1330
    %v1384 = vpop.xlane.xlu0 %1383
    %1385 = vadd.xlane.f32.xlu0 %v1331
    %v1386 = vpop.xlane.xlu0 %1385
    %1387 = vadd.xlane.f32.xlu0 %v1332
    %v1388 = vpop.xlane.xlu0 %1387
    %1389 = vadd.xlane.f32.xlu0 %v1333
    %v1390 = vpop.xlane.xlu0 %1389
    %1391 = vadd.xlane.f32.xlu0 %v1334
    %v1392 = vpop.xlane.xlu0 %1391
    %1393 = vadd.xlane.f32.xlu0 %v1335
    %v1394 = vpop.xlane.xlu0 %1393
    %1395 = vadd.xlane.f32.xlu0 %v1336
    %v1396 = vpop.xlane.xlu0 %1395
    %1397 = vadd.xlane.f32.xlu0 %v1337
    %v1398 = vpop.xlane.xlu0 %1397
    %1399 = vadd.xlane.f32.xlu0 %v1338
    %v1400 = vpop.xlane.xlu0 %1399
    %1401 = vadd.xlane.f32.xlu0 %v1339
    %v1402 = vpop.xlane.xlu0 %1401
    %1403 = vadd.xlane.f32.xlu0 %v1340
    %v1404 = vpop.xlane.xlu0 %1403
    %v1405 = vmul.f32 %v1342, %v540
    %v1406 = vmul.f32 %v1344, %v540
    %v1407 = vmul.f32 %v1346, %v540
    %v1408 = vmul.f32 %v1348, %v540
    %v1409 = vmul.f32 %v1350, %v540
    %v1410 = vmul.f32 %v1352, %v540
    %v1411 = vmul.f32 %v1354, %v540
    %v1412 = vmul.f32 %v1356, %v540
    %v1413 = vmul.f32 %v1358, %v540
    %v1414 = vmul.f32 %v1360, %v540
    %v1415 = vmul.f32 %v1362, %v540
    %v1416 = vmul.f32 %v1364, %v540
    %v1417 = vmul.f32 %v1366, %v540
    %v1418 = vmul.f32 %v1368, %v540
    %v1419 = vmul.f32 %v1370, %v540
    %v1420 = vmul.f32 %v1372, %v540
    %v1421 = vmul.f32 %v1374, %v540
    %v1422 = vmul.f32 %v1376, %v540
    %v1423 = vmul.f32 %v1378, %v540
    %v1424 = vmul.f32 %v1380, %v540
    %v1425 = vmul.f32 %v1382, %v540
    %v1426 = vmul.f32 %v1384, %v540
    %v1427 = vmul.f32 %v1386, %v540
    %v1428 = vmul.f32 %v1388, %v540
    %v1429 = vmul.f32 %v1390, %v540
    %v1430 = vmul.f32 %v1392, %v540
    %v1431 = vmul.f32 %v1394, %v540
    %v1432 = vmul.f32 %v1396, %v540
    %v1433 = vmul.f32 %v1398, %v540
    %v1434 = vmul.f32 %v1400, %v540
    %v1435 = vmul.f32 %v1402, %v540
    %v1436 = vmul.f32 %v1404, %v540
    %v1437 = vadd.f32 %v1405, 1e-05
    %v1438 = vadd.f32 %v1406, 1e-05
    %v1439 = vadd.f32 %v1407, 1e-05
    %v1440 = vadd.f32 %v1408, 1e-05
    %v1441 = vadd.f32 %v1409, 1e-05
    %v1442 = vadd.f32 %v1410, 1e-05
    %v1443 = vadd.f32 %v1411, 1e-05
    %v1444 = vadd.f32 %v1412, 1e-05
    %v1445 = vadd.f32 %v1413, 1e-05
    %v1446 = vadd.f32 %v1414, 1e-05
    %v1447 = vadd.f32 %v1415, 1e-05
    %v1448 = vadd.f32 %v1416, 1e-05
    %v1449 = vadd.f32 %v1417, 1e-05
    %v1450 = vadd.f32 %v1418, 1e-05
    %v1451 = vadd.f32 %v1419, 1e-05
    %v1452 = vadd.f32 %v1420, 1e-05
    %v1453 = vadd.f32 %v1421, 1e-05
    %v1454 = vadd.f32 %v1422, 1e-05
    %v1455 = vadd.f32 %v1423, 1e-05
    %v1456 = vadd.f32 %v1424, 1e-05
    %v1457 = vadd.f32 %v1425, 1e-05
    %v1458 = vadd.f32 %v1426, 1e-05
    %v1459 = vadd.f32 %v1427, 1e-05
    %v1460 = vadd.f32 %v1428, 1e-05
    %v1461 = vadd.f32 %v1429, 1e-05
    %v1462 = vadd.f32 %v1430, 1e-05
    %v1463 = vadd.f32 %v1431, 1e-05
    %v1464 = vadd.f32 %v1432, 1e-05
    %v1465 = vadd.f32 %v1433, 1e-05
    %v1466 = vadd.f32 %v1434, 1e-05
    %v1467 = vadd.f32 %v1435, 1e-05
    %v1468 = vadd.f32 %v1436, 1e-05
    %v1469 = vrsqrt.pop %v1437
    %v1470 = vrsqrt.pop %v1438
    %v1471 = vrsqrt.pop %v1439
    %v1472 = vrsqrt.pop %v1440
    %v1473 = vrsqrt.pop %v1441
    %v1474 = vrsqrt.pop %v1442
    %v1475 = vrsqrt.pop %v1443
    %v1476 = vrsqrt.pop %v1444
    %v1477 = vrsqrt.pop %v1445
    %v1478 = vrsqrt.pop %v1446
    %v1479 = vrsqrt.pop %v1447
    %v1480 = vrsqrt.pop %v1448
    %v1481 = vrsqrt.pop %v1449
    %v1482 = vrsqrt.pop %v1450
    %v1483 = vrsqrt.pop %v1451
    %v1484 = vrsqrt.pop %v1452
    %v1485 = vrsqrt.pop %v1453
    %v1486 = vrsqrt.pop %v1454
    %v1487 = vrsqrt.pop %v1455
    %v1488 = vrsqrt.pop %v1456
    %v1489 = vrsqrt.pop %v1457
    %v1490 = vrsqrt.pop %v1458
    %v1491 = vrsqrt.pop %v1459
    %v1492 = vrsqrt.pop %v1460
    %v1493 = vrsqrt.pop %v1461
    %v1494 = vrsqrt.pop %v1462
    %v1495 = vrsqrt.pop %v1463
    %v1496 = vrsqrt.pop %v1464
    %v1497 = vrsqrt.pop %v1465
    %v1498 = vrsqrt.pop %v1466
    %v1499 = vrsqrt.pop %v1467
    %v1500 = vrsqrt.pop %v1468
    %v1501 = vmul.f32 %v1277, %v1469
    %v1502 = vmul.f32 %v1278, %v1470
    %v1503 = vmul.f32 %v1279, %v1471
    %v1504 = vmul.f32 %v1280, %v1472
    %v1505 = vmul.f32 %v1281, %v1473
    %v1506 = vmul.f32 %v1282, %v1474
    %v1507 = vmul.f32 %v1283, %v1475
    %v1508 = vmul.f32 %v1284, %v1476
    %v1509 = vmul.f32 %v1285, %v1477
    %v1510 = vmul.f32 %v1286, %v1478
    %v1511 = vmul.f32 %v1287, %v1479
    %v1512 = vmul.f32 %v1288, %v1480
    %v1513 = vmul.f32 %v1289, %v1481
    %v1514 = vmul.f32 %v1290, %v1482
    %v1515 = vmul.f32 %v1291, %v1483
    %v1516 = vmul.f32 %v1292, %v1484
    %v1517 = vmul.f32 %v1293, %v1485
    %v1518 = vmul.f32 %v1294, %v1486
    %v1519 = vmul.f32 %v1295, %v1487
    %v1520 = vmul.f32 %v1296, %v1488
    %v1521 = vmul.f32 %v1297, %v1489
    %v1522 = vmul.f32 %v1298, %v1490
    %v1523 = vmul.f32 %v1299, %v1491
    %v1524 = vmul.f32 %v1300, %v1492
    %v1525 = vmul.f32 %v1301, %v1493
    %v1526 = vmul.f32 %v1302, %v1494
    %v1527 = vmul.f32 %v1303, %v1495
    %v1528 = vmul.f32 %v1304, %v1496
    %v1529 = vmul.f32 %v1305, %v1497
    %v1530 = vmul.f32 %v1306, %v1498
    %v1531 = vmul.f32 %v1307, %v1499
    %v1532 = vmul.f32 %v1308, %v1500
    %v1533 = vld [vmem:[#allocation10 + $0x1] sm:$0x1]
    %v1534 = vlaneseq
    %v1535 = vshrl.u32 %v1534, 7
    %v1536 = vsub.s32 0, %v1535
    %v1537 = vrot.slane %v1533, %v1536
    %v1538 = vmul.f32 %v1501, %v1537
    %v1539 = vmul.f32 %v1502, %v1537
    %v1540 = vmul.f32 %v1503, %v1537
    %v1541 = vmul.f32 %v1504, %v1537
    %v1542 = vmul.f32 %v1505, %v1537
    %v1543 = vmul.f32 %v1506, %v1537
    %v1544 = vmul.f32 %v1507, %v1537
    %v1545 = vmul.f32 %v1508, %v1537
    %v1546 = vmul.f32 %v1509, %v1537
    %v1547 = vmul.f32 %v1510, %v1537
    %v1548 = vmul.f32 %v1511, %v1537
    %v1549 = vmul.f32 %v1512, %v1537
    %v1550 = vmul.f32 %v1513, %v1537
    %v1551 = vmul.f32 %v1514, %v1537
    %v1552 = vmul.f32 %v1515, %v1537
    %v1553 = vmul.f32 %v1516, %v1537
    %v1554 = vmul.f32 %v1517, %v1537
    %v1555 = vmul.f32 %v1518, %v1537
    %v1556 = vmul.f32 %v1519, %v1537
    %v1557 = vmul.f32 %v1520, %v1537
    %v1558 = vmul.f32 %v1521, %v1537
    %v1559 = vmul.f32 %v1522, %v1537
    %v1560 = vmul.f32 %v1523, %v1537
    %v1561 = vmul.f32 %v1524, %v1537
    %v1562 = vmul.f32 %v1525, %v1537
    %v1563 = vmul.f32 %v1526, %v1537
    %v1564 = vmul.f32 %v1527, %v1537
    %v1565 = vmul.f32 %v1528, %v1537
    %v1566 = vmul.f32 %v1529, %v1537
    %v1567 = vmul.f32 %v1530, %v1537
    %v1568 = vmul.f32 %v1531, %v1537
    %v1569 = vmul.f32 %v1532, %v1537
    %v1570 = vld [vmem:[#allocation10 + $0x2] sm:$0x1]
    %v1571 = vlaneseq
    %v1572 = vshrl.u32 %v1571, 7
    %v1573 = vsub.s32 0, %v1572
    %v1574 = vrot.slane %v1570, %v1573
    %v1575 = vadd.f32 %v1538, %v1574
    %v1576 = vadd.f32 %v1539, %v1574
    %v1577 = vadd.f32 %v1540, %v1574
    %v1578 = vadd.f32 %v1541, %v1574
    %v1579 = vadd.f32 %v1542, %v1574
    %v1580 = vadd.f32 %v1543, %v1574
    %v1581 = vadd.f32 %v1544, %v1574
    %v1582 = vadd.f32 %v1545, %v1574
    %v1583 = vadd.f32 %v1546, %v1574
    %v1584 = vadd.f32 %v1547, %v1574
    %v1585 = vadd.f32 %v1548, %v1574
    %v1586 = vadd.f32 %v1549, %v1574
    %v1587 = vadd.f32 %v1550, %v1574
    %v1588 = vadd.f32 %v1551, %v1574
    %v1589 = vadd.f32 %v1552, %v1574
    %v1590 = vadd.f32 %v1553, %v1574
    %v1591 = vadd.f32 %v1554, %v1574
    %v1592 = vadd.f32 %v1555, %v1574
    %v1593 = vadd.f32 %v1556, %v1574
    %v1594 = vadd.f32 %v1557, %v1574
    %v1595 = vadd.f32 %v1558, %v1574
    %v1596 = vadd.f32 %v1559, %v1574
    %v1597 = vadd.f32 %v1560, %v1574
    %v1598 = vadd.f32 %v1561, %v1574
    %v1599 = vadd.f32 %v1562, %v1574
    %v1600 = vadd.f32 %v1563, %v1574
    %v1601 = vadd.f32 %v1564, %v1574
    %v1602 = vadd.f32 %v1565, %v1574
    %v1603 = vadd.f32 %v1566, %v1574
    %v1604 = vadd.f32 %v1567, %v1574
    %v1605 = vadd.f32 %v1568, %v1574
    %v1606 = vadd.f32 %v1569, %v1574
    %1607 = vst [vmem:[#allocation11] sm:$0xff] %v1575
    %1608 = vst [vmem:[#allocation11 + $0x8] sm:$0xff] %v1576
    %1609 = vst [vmem:[#allocation11 + $0x10] sm:$0xff] %v1577
    %1610 = vst [vmem:[#allocation11 + $0x18] sm:$0xff] %v1578
    %1611 = vst [vmem:[#allocation11 + $0x20] sm:$0xff] %v1579
    %1612 = vst [vmem:[#allocation11 + $0x28] sm:$0xff] %v1580
    %1613 = vst [vmem:[#allocation11 + $0x30] sm:$0xff] %v1581
    %1614 = vst [vmem:[#allocation11 + $0x38] sm:$0xff] %v1582
    %1615 = vst [vmem:[#allocation11 + $0x40] sm:$0xff] %v1583
    %1616 = vst [vmem:[#allocation11 + $0x48] sm:$0xff] %v1584
    %1617 = vst [vmem:[#allocation11 + $0x50] sm:$0xff] %v1585
    %1618 = vst [vmem:[#allocation11 + $0x58] sm:$0xff] %v1586
    %1619 = vst [vmem:[#allocation11 + $0x60] sm:$0xff] %v1587
    %1620 = vst [vmem:[#allocation11 + $0x68] sm:$0xff] %v1588
    %1621 = vst [vmem:[#allocation11 + $0x70] sm:$0xff] %v1589
    %1622 = vst [vmem:[#allocation11 + $0x78] sm:$0xff] %v1590
    %1623 = vst [vmem:[#allocation11 + $0x80] sm:$0xff] %v1591
    %1624 = vst [vmem:[#allocation11 + $0x88] sm:$0xff] %v1592
    %1625 = vst [vmem:[#allocation11 + $0x90] sm:$0xff] %v1593
    %1626 = vst [vmem:[#allocation11 + $0x98] sm:$0xff] %v1594
    %1627 = vst [vmem:[#allocation11 + $0xa0] sm:$0xff] %v1595
    %1628 = vst [vmem:[#allocation11 + $0xa8] sm:$0xff] %v1596
    %1629 = vst [vmem:[#allocation11 + $0xb0] sm:$0xff] %v1597
    %1630 = vst [vmem:[#allocation11 + $0xb8] sm:$0xff] %v1598
    %1631 = vst [vmem:[#allocation11 + $0xc0] sm:$0xff] %v1599
    %1632 = vst [vmem:[#allocation11 + $0xc8] sm:$0xff] %v1600
    %1633 = vst [vmem:[#allocation11 + $0xd0] sm:$0xff] %v1601
    %1634 = vst [vmem:[#allocation11 + $0xd8] sm:$0xff] %v1602
    %1635 = vst [vmem:[#allocation11 + $0xe0] sm:$0xff] %v1603
    %1636 = vst [vmem:[#allocation11 + $0xe8] sm:$0xff] %v1604
    %1637 = vst [vmem:[#allocation11 + $0xf0] sm:$0xff] %v1605
    %1638 = vst [vmem:[#allocation11 + $0xf8] sm:$0xff] %v1606
    // Predicated region
    $region42: #{tpu_custom_call.1} parent=1 // pred_check
      _
    $region43: #{tpu_custom_call.1} parent=1 // pred_check_branch
      %1640 = sbr.rel (0) target = $region45
    $region44: #{tpu_custom_call.1} parent=1 // pred_region
      %s1642 = ssub.s32 4096, 4096
      %1643 = vsyncadd [#allocation4], %s1642
      %s1644 = sshll.u32 [#allocation11], 4
      %s1645 = int_to_ptr.vmem [resolvable:$true] %s1644
      %1650 = dma.vmem_to_hbm [thread:$0]  %s1645, 4096, %s5, [#allocation4], 128, 128, 8
    $region45: #{tpu_custom_call.1} parent=1 // pred_fallthru
      _
    // Predicated region
    $region46: #{tpu_custom_call.1} parent=1 // pred_check
      _
    $region47: #{tpu_custom_call.1} parent=1 // pred_check_branch
      %1652 = sbr.rel (0) target = $region49
    $region48: #{tpu_custom_call.1} parent=1 // pred_region
      %1653 = dma.done [#allocation4], 4096
    $region49: #{tpu_custom_call.1} parent=1 // pred_fallthru
      _
    %1654 = vsyncpa [#allocation3], 1
    %1655 = vsyncpa [#allocation6], 1
    %1656 = vsyncpa [#allocation9], 1
    %1657 = vsyncpa [#allocation4], 1

</llo_original>
